<compile_context>
chip_gen: v5e
topology: v5e:2x2
jax: 0.10.0
libtpu: 0.0.40
codegen_flags: <defaults>
</compile_context>

<pallas_src>
import functools

import jax
import jax.numpy as jnp
from jax import lax
from jax.experimental import pallas as pl
from jax.experimental.pallas import tpu as pltpu


# ----------------------------------------------------------------------------
# Kernels
# ----------------------------------------------------------------------------
def _attn_res_ln_kernel(x_ref, mask_ref, wqkv_ref, bqkv_ref, wproj_ref,
                        bproj_ref, g_ref, beta_ref, o_ref, attn_buf,
                        *, num_heads, scale, eps):
    """Fused: self-attention + residual + LayerNorm for one batch element."""
    x = x_ref[0]                                          # (S, D) f32
    S, D = x.shape
    Dh = D // num_heads

    # Single QKV matmul, bf16 inputs -> f32 accumulation.
    qkv = jnp.dot(x.astype(jnp.bfloat16), wqkv_ref[...],
                  preferred_element_type=jnp.float32) + bqkv_ref[0]   # (S, 3D)

    # Additive mask bias, computed once (hoisted out of the head loop).
    neg = jnp.where(mask_ref[...] == 1, jnp.float32(-1e30), jnp.float32(0.0))

    # Per-head attention; head outputs land in a (S, D) VMEM scratch so the
    # output projection is ONE well-shaped (S,D)@(D,D) MXU pass.
    for h in range(num_heads):
        qh = qkv[:, h * Dh:(h + 1) * Dh].astype(jnp.bfloat16)          # (S, Dh)
        kh = qkv[:, D + h * Dh:D + (h + 1) * Dh].astype(jnp.bfloat16)  # (S, Dh)
        vh = qkv[:, 2 * D + h * Dh:2 * D + (h + 1) * Dh].astype(jnp.bfloat16)

        # q @ k^T without materializing a transpose.
        s = lax.dot_general(qh, kh, (((1,), (1,)), ((), ())),
                            preferred_element_type=jnp.float32) * scale + neg
        s = s - jnp.max(s, axis=-1, keepdims=True)
        e = jnp.exp(s)
        p = e * pl.reciprocal(jnp.sum(e, axis=-1, keepdims=True), approx=True)
        attn_buf[:, h * Dh:(h + 1) * Dh] = jnp.dot(
            p.astype(jnp.bfloat16), vh, preferred_element_type=jnp.float32)

    proj = jnp.dot(attn_buf[...].astype(jnp.bfloat16), wproj_ref[...],
                   preferred_element_type=jnp.float32) + bproj_ref[0]

    y = x + proj                                          # residual (f32)

    # LayerNorm epilogue (fused).
    mu = jnp.mean(y, axis=-1, keepdims=True)
    var = jnp.mean((y - mu) ** 2, axis=-1, keepdims=True)
    o_ref[0] = ((y - mu) * lax.rsqrt(var + eps) * g_ref[0]
                + beta_ref[0]).astype(o_ref.dtype)


def _ff_res_ln_kernel(x_ref, w1_ref, b1_ref, w2_ref, b2_ref, g_ref, beta_ref,
                      o_ref, *, eps):
    """Fused: FeedForward + residual + LayerNorm for one (batch, seq-tile)."""
    x = x_ref[0]                                          # (TS, D) f32
    h = jnp.dot(x.astype(jnp.bfloat16), w1_ref[...],
                preferred_element_type=jnp.float32) + b1_ref[0]
    # exact GELU (nn.GELU default, approximate='none'); f32 on the VPU/EUP path
    h = 0.5 * h * (1.0 + lax.erf(h * 0.7071067811865476))
    y = jnp.dot(h.astype(jnp.bfloat16), w2_ref[...],
                preferred_element_type=jnp.float32) + b2_ref[0]
    y = x + y                                             # residual

    mu = jnp.mean(y, axis=-1, keepdims=True)
    var = jnp.mean((y - mu) ** 2, axis=-1, keepdims=True)
    o_ref[0] = ((y - mu) * lax.rsqrt(var + eps) * g_ref[0]
                + beta_ref[0]).astype(o_ref.dtype)


# ----------------------------------------------------------------------------
# pallas_call wrappers
# ----------------------------------------------------------------------------
def _const_spec(shape, n_grid):
    zeros = (0,) * len(shape)
    if n_grid == 1:
        return pl.BlockSpec(shape, lambda b: zeros)
    return pl.BlockSpec(shape, lambda b, s: zeros)


def _seq_tile(S, target=256):
    """Largest divisor of S that is a multiple of 8 and <= target (else S)."""
    if S <= target:
        return S
    for t in range(target, 0, -8):
        if t % 8 == 0 and S % t == 0:
            return t
    return S


def attn_res_ln(x, mask, wqkv, bqkv, wproj, bproj, gamma, beta,
                *, num_heads, scale, eps=1e-5):
    B, S, D = x.shape
    kernel = functools.partial(_attn_res_ln_kernel, num_heads=num_heads,
                               scale=scale, eps=eps)
    return pl.pallas_call(
        kernel,
        out_shape=jax.ShapeDtypeStruct((B, S, D), x.dtype),
        grid_spec=pltpu.PrefetchScalarGridSpec(
            num_scalar_prefetch=0,
            grid=(B,),
            in_specs=[
                pl.BlockSpec((1, S, D), lambda b: (b, 0, 0)),
                _const_spec((S, S), 1),
                _const_spec((D, 3 * D), 1),
                _const_spec((1, 3 * D), 1),
                _const_spec((D, D), 1),
                _const_spec((1, D), 1),
                _const_spec((1, D), 1),
                _const_spec((1, D), 1),
            ],
            out_specs=pl.BlockSpec((1, S, D), lambda b: (b, 0, 0)),
            scratch_shapes=[pltpu.VMEM((S, D), jnp.float32)],
        ),
        input_output_aliases={0: 0},
        compiler_params=pltpu.CompilerParams(dimension_semantics=("parallel",)),
    )(x, mask, wqkv, bqkv, wproj, bproj, gamma, beta)


def ff_res_ln(x, w1, b1, w2, b2, gamma, beta, *, eps=1e-5, seq_tile=256):
    B, S, D = x.shape
    H = w1.shape[1]
    ts = _seq_tile(S, seq_tile)
    kernel = functools.partial(_ff_res_ln_kernel, eps=eps)
    return pl.pallas_call(
        kernel,
        out_shape=jax.ShapeDtypeStruct((B, S, D), x.dtype),
        grid_spec=pltpu.PrefetchScalarGridSpec(
            num_scalar_prefetch=0,
            grid=(B, S // ts),
            in_specs=[
                pl.BlockSpec((1, ts, D), lambda b, s: (b, s, 0)),
                _const_spec((D, H), 2),
                _const_spec((1, H), 2),
                _const_spec((H, D), 2),
                _const_spec((1, D), 2),
                _const_spec((1, D), 2),
                _const_spec((1, D), 2),
            ],
            out_specs=pl.BlockSpec((1, ts, D), lambda b, s: (b, s, 0)),
        ),
        input_output_aliases={0: 0},
        compiler_params=pltpu.CompilerParams(
            dimension_semantics=("parallel", "parallel")),
    )(x, w1, b1, w2, b2, gamma, beta)


# ----------------------------------------------------------------------------
# TransLayer forward
# ----------------------------------------------------------------------------
@functools.partial(jax.jit, static_argnames=("num_heads",))
def trans_layer_forward(x, attn_mask, params, *, num_heads):
    D = x.shape[-1]
    scale = (D // num_heads) ** -0.5
    for p in params:
        x = attn_res_ln(x, attn_mask, p["wqkv"], p["bqkv"], p["wproj"],
                        p["bproj"], p["ln1_g"], p["ln1_b"],
                        num_heads=num_heads, scale=scale)
        x = ff_res_ln(x, p["w1"], p["b1"], p["w2"], p["b2"],
                      p["ln2_g"], p["ln2_b"])
    return x


def cast_matmul_weights(params):
    """Store matmul weights in bf16 (halves weight DMA / VMEM); biases, LN in f32."""
    mm = ("wqkv", "wproj", "w1", "w2")
    return [{k: (v.astype(jnp.bfloat16) if k in mm else v) for k, v in p.items()}
            for p in params]


# Pure-JAX f32 reference (same math as the PyTorch module) for correctness.
def _reference_forward(x, mask, params, *, num_heads):
    D = x.shape[-1]
    Dh = D // num_heads
    scale = Dh ** -0.5
    for p in params:
        B, S, _ = x.shape
        qkv = x @ p["wqkv"] + p["bqkv"][0]
        q, k, v = qkv[..., :D], qkv[..., D:2 * D], qkv[..., 2 * D:]
        q = q.reshape(B, S, num_heads, Dh).transpose(0, 2, 1, 3)
        k = k.reshape(B, S, num_heads, Dh).transpose(0, 2, 1, 3)
        v = v.reshape(B, S, num_heads, Dh).transpose(0, 2, 1, 3)
        attn = jnp.einsum("bhqd,bhkd->bhqk", q, k) * scale
        attn = jnp.where(mask[None, None] == 1, -jnp.inf, attn)
        attn = jax.nn.softmax(attn, axis=-1)
        o = jnp.einsum("bhqk,bhkd->bhqd", attn, v).transpose(0, 2, 1, 3).reshape(B, S, D)
        x = x + (o @ p["wproj"] + p["bproj"][0])
        mu = x.mean(-1, keepdims=True)
        var = ((x - mu) ** 2).mean(-1, keepdims=True)
        x = (x - mu) * lax.rsqrt(var + 1e-5) * p["ln1_g"][0] + p["ln1_b"][0]
        h = x @ p["w1"] + p["b1"][0]
        h = 0.5 * h * (1.0 + lax.erf(h * 0.7071067811865476))
        x = x + (h @ p["w2"] + p["b2"][0])
        mu = x.mean(-1, keepdims=True)
        var = ((x - mu) ** 2).mean(-1, keepdims=True)
        x = (x - mu) * lax.rsqrt(var + 1e-5) * p["ln2_g"][0] + p["ln2_b"][0]
    return x


def init_params(key, depth, dim, mlp_dim):
    params = []
    for _ in range(depth):
        key, *ks = jax.random.split(key, 9)
        p = {
            "wqkv": 0.05 * jax.random.normal(ks[0], (dim, 3 * dim), jnp.float32),
            "bqkv": 0.05 * jax.random.normal(ks[1], (1, 3 * dim), jnp.float32),
            "wproj": 0.05 * jax.random.normal(ks[2], (dim, dim), jnp.float32),
            "bproj": 0.05 * jax.random.normal(ks[3], (1, dim), jnp.float32),
            "ln1_g": jnp.ones((1, dim), jnp.float32),
            "ln1_b": jnp.zeros((1, dim), jnp.float32),
            "w1": 0.05 * jax.random.normal(ks[4], (dim, mlp_dim), jnp.float32),
            "b1": 0.05 * jax.random.normal(ks[5], (1, mlp_dim), jnp.float32),
            "w2": 0.05 * jax.random.normal(ks[6], (mlp_dim, dim), jnp.float32),
            "b2": 0.05 * jax.random.normal(ks[7], (1, dim), jnp.float32),
            "ln2_g": jnp.ones((1, dim), jnp.float32),
            "ln2_b": jnp.zeros((1, dim), jnp.float32),
        }
        params.append(p)
    return params


if __name__ == "__main__":
    B, S, D = 2, 8, 32
    HEADS = 4
    MLP_DIM = 64
    DEPTH = 2

    key = jax.random.PRNGKey(0)
    kx, kp = jax.random.split(key)
    x = jax.random.normal(kx, (B, S, D), jnp.float32)
    # causal mask: masked_fill where mask == 1 (upper triangle masked out)
    attn_mask = (jnp.arange(S)[None, :] > jnp.arange(S)[:, None]).astype(jnp.int32)

    params = init_params(kp, DEPTH, D, MLP_DIM)          # f32 (reference)
    params_dev = cast_matmul_weights(params)             # bf16 matmul weights (kernel)

    out = trans_layer_forward(x, attn_mask, params_dev, num_heads=HEADS)
    out = jax.block_until_ready(out)

    ref = _reference_forward(x, attn_mask, params, num_heads=HEADS)
    assert out.shape == (B, S, D)
    # Tolerance accounts for the bf16 MXU path + approx reciprocal (feedback-requested);
    # all softmax/LayerNorm/GELU math is f32.
    assert jnp.allclose(out, ref, atol=5e-2, rtol=5e-2), "mismatch vs JAX reference"

    print("KERNEL_OK")
</pallas_src>

<mosaic_0001>
module attributes {stable_mosaic.version = 11 : i64} {
  func.func @_attn_res_ln_kernel(%arg0: i32, %arg1: memref<1x8x32xf32, #tpu.memory_space<vmem>>, %arg2: memref<8x8xi32, #tpu.memory_space<vmem>>, %arg3: memref<32x96xbf16, #tpu.memory_space<vmem>>, %arg4: memref<1x96xf32, #tpu.memory_space<vmem>>, %arg5: memref<32x32xbf16, #tpu.memory_space<vmem>>, %arg6: memref<1x32xf32, #tpu.memory_space<vmem>>, %arg7: memref<1x32xf32, #tpu.memory_space<vmem>>, %arg8: memref<1x32xf32, #tpu.memory_space<vmem>>, %arg9: memref<1x8x32xf32, #tpu.memory_space<vmem>>, %arg10: memref<8x32xf32, #tpu.memory_space<vmem>>) attributes {dimension_semantics = [#tpu.dimension_semantics<parallel>], iteration_bounds = array<i64: 2>, scalar_prefetch = 0 : i64, scratch_operands = 1 : i64, tpu.core_type = #tpu.core_type<tc>, window_params = [{transform_indices = @transform_0, window_bounds = array<i64: 1, 8, 32>}, {pipeline_mode = #tpu.pipeline_mode<synchronous>, transform_indices = @transform_1, window_bounds = array<i64: 8, 8>}, {pipeline_mode = #tpu.pipeline_mode<synchronous>, transform_indices = @transform_2, window_bounds = array<i64: 32, 96>}, {pipeline_mode = #tpu.pipeline_mode<synchronous>, transform_indices = @transform_3, window_bounds = array<i64: 1, 96>}, {pipeline_mode = #tpu.pipeline_mode<synchronous>, transform_indices = @transform_4, window_bounds = array<i64: 32, 32>}, {pipeline_mode = #tpu.pipeline_mode<synchronous>, transform_indices = @transform_5, window_bounds = array<i64: 1, 32>}, {pipeline_mode = #tpu.pipeline_mode<synchronous>, transform_indices = @transform_6, window_bounds = array<i64: 1, 32>}, {pipeline_mode = #tpu.pipeline_mode<synchronous>, transform_indices = @transform_7, window_bounds = array<i64: 1, 32>}, {transform_indices = @transform_8, window_bounds = array<i64: 1, 8, 32>}]} {
    %c0 = arith.constant 0 : index
    %c0_0 = arith.constant 0 : index
    %c0_1 = arith.constant 0 : index
    %0 = vector.load %arg1[%c0, %c0_0, %c0_1] : memref<1x8x32xf32, #tpu.memory_space<vmem>>, vector<1x8x32xf32>
    %1 = vector.shape_cast %0 : vector<1x8x32xf32> to vector<8x32xf32>
    %2 = arith.truncf %1 : vector<8x32xf32> to vector<8x32xbf16>
    %c0_2 = arith.constant 0 : index
    %c0_3 = arith.constant 0 : index
    %3 = vector.load %arg3[%c0_2, %c0_3] : memref<32x96xbf16, #tpu.memory_space<vmem>>, vector<32x96xbf16>
    %cst = arith.constant dense<0.000000e+00> : vector<8x96xf32>
    %4 = tpu.matmul %2, %3, %cst {dimension_numbers = #tpu.dot_dimension_numbers<[1], [0], [0], [1], [0, 0, 1, 1], [], []>} : vector<8x32xbf16>, vector<32x96xbf16>, vector<8x96xf32> -> vector<8x96xf32>
    %c0_4 = arith.constant 0 : index
    %c0_5 = arith.constant 0 : index
    %5 = vector.load %arg4[%c0_4, %c0_5] : memref<1x96xf32, #tpu.memory_space<vmem>>, vector<1x96xf32>
    %6 = vector.shape_cast %5 : vector<1x96xf32> to vector<96xf32>
    %7 = vector.shape_cast %6 : vector<96xf32> to vector<1x96xf32>
    %8 = vector.broadcast %7 : vector<1x96xf32> to vector<8x96xf32>
    %9 = arith.addf %4, %8 : vector<8x96xf32>
    %c0_6 = arith.constant 0 : index
    %c0_7 = arith.constant 0 : index
    %10 = vector.load %arg2[%c0_6, %c0_7] : memref<8x8xi32, #tpu.memory_space<vmem>>, vector<8x8xi32>
    %c1_i32 = arith.constant 1 : i32
    %11 = vector.broadcast %c1_i32 : i32 to vector<8x8xi32>
    %12 = arith.cmpi eq, %10, %11 : vector<8x8xi32>
    %cst_8 = arith.constant -1.000000e+30 : f32
    %cst_9 = arith.constant 0.000000e+00 : f32
    %13 = vector.broadcast %cst_8 : f32 to vector<8x8xf32>
    %14 = vector.broadcast %cst_9 : f32 to vector<8x8xf32>
    %15 = arith.select %12, %13, %14 : vector<8x8xi1>, vector<8x8xf32>
    %16 = vector.extract_strided_slice %9 {offsets = [0, 0], sizes = [8, 8], strides = [1, 1]} : vector<8x96xf32> to vector<8x8xf32>
    %17 = arith.truncf %16 : vector<8x8xf32> to vector<8x8xbf16>
    %18 = vector.extract_strided_slice %9 {offsets = [0, 32], sizes = [8, 8], strides = [1, 1]} : vector<8x96xf32> to vector<8x8xf32>
    %19 = arith.truncf %18 : vector<8x8xf32> to vector<8x8xbf16>
    %20 = vector.extract_strided_slice %9 {offsets = [0, 64], sizes = [8, 8], strides = [1, 1]} : vector<8x96xf32> to vector<8x8xf32>
    %21 = arith.truncf %20 : vector<8x8xf32> to vector<8x8xbf16>
    %cst_10 = arith.constant dense<0.000000e+00> : vector<8x8xf32>
    %22 = tpu.matmul %17, %19, %cst_10 {dimension_numbers = #tpu.dot_dimension_numbers<[1], [1], [0], [0], [0, 0, 1, 0], [], []>} : vector<8x8xbf16>, vector<8x8xbf16>, vector<8x8xf32> -> vector<8x8xf32>
    %cst_11 = arith.constant 0.353553385 : f32
    %23 = vector.broadcast %cst_11 : f32 to vector<8x8xf32>
    %24 = arith.mulf %22, %23 : vector<8x8xf32>
    %25 = arith.addf %24, %15 : vector<8x8xf32>
    %cst_12 = arith.constant dense<0xFF800000> : vector<8xf32>
    %26 = vector.multi_reduction <maximumf>, %25, %cst_12 [1] : vector<8x8xf32> to vector<8xf32>
    %27 = vector.shape_cast %26 : vector<8xf32> to vector<8x1xf32>
    %28 = vector.broadcast %27 : vector<8x1xf32> to vector<8x8xf32>
    %29 = arith.subf %25, %28 : vector<8x8xf32>
    %30 = math.exp %29 : vector<8x8xf32>
    %cst_13 = arith.constant dense<0.000000e+00> : vector<8xf32>
    %31 = vector.multi_reduction <add>, %30, %cst_13 [1] : vector<8x8xf32> to vector<8xf32>
    %32 = vector.shape_cast %31 : vector<8xf32> to vector<8x1xf32>
    %33 = tpu.reciprocal %32 {approx = true} : vector<8x1xf32> -> vector<8x1xf32>
    %34 = vector.broadcast %33 : vector<8x1xf32> to vector<8x8xf32>
    %35 = arith.mulf %30, %34 : vector<8x8xf32>
    %36 = arith.truncf %35 : vector<8x8xf32> to vector<8x8xbf16>
    %cst_14 = arith.constant dense<0.000000e+00> : vector<8x8xf32>
    %37 = tpu.matmul %36, %21, %cst_14 {dimension_numbers = #tpu.dot_dimension_numbers<[1], [0], [0], [1], [0, 0, 1, 1], [], []>} : vector<8x8xbf16>, vector<8x8xbf16>, vector<8x8xf32> -> vector<8x8xf32>
    %c0_15 = arith.constant 0 : index
    %c0_16 = arith.constant 0 : index
    %38 = vector.load %arg10[%c0_15, %c0_16] : memref<8x32xf32, #tpu.memory_space<vmem>>, vector<8x8xf32>
    tpu.vector_store %arg10[%c0_15, %c0_16], %37 {strides = array<i32>} : memref<8x32xf32, #tpu.memory_space<vmem>>, vector<8x8xf32>,
    %39 = vector.extract_strided_slice %9 {offsets = [0, 8], sizes = [8, 8], strides = [1, 1]} : vector<8x96xf32> to vector<8x8xf32>
    %40 = arith.truncf %39 : vector<8x8xf32> to vector<8x8xbf16>
    %41 = vector.extract_strided_slice %9 {offsets = [0, 40], sizes = [8, 8], strides = [1, 1]} : vector<8x96xf32> to vector<8x8xf32>
    %42 = arith.truncf %41 : vector<8x8xf32> to vector<8x8xbf16>
    %43 = vector.extract_strided_slice %9 {offsets = [0, 72], sizes = [8, 8], strides = [1, 1]} : vector<8x96xf32> to vector<8x8xf32>
    %44 = arith.truncf %43 : vector<8x8xf32> to vector<8x8xbf16>
    %cst_17 = arith.constant dense<0.000000e+00> : vector<8x8xf32>
    %45 = tpu.matmul %40, %42, %cst_17 {dimension_numbers = #tpu.dot_dimension_numbers<[1], [1], [0], [0], [0, 0, 1, 0], [], []>} : vector<8x8xbf16>, vector<8x8xbf16>, vector<8x8xf32> -> vector<8x8xf32>
    %cst_18 = arith.constant 0.353553385 : f32
    %46 = vector.broadcast %cst_18 : f32 to vector<8x8xf32>
    %47 = arith.mulf %45, %46 : vector<8x8xf32>
    %48 = arith.addf %47, %15 : vector<8x8xf32>
    %cst_19 = arith.constant dense<0xFF800000> : vector<8xf32>
    %49 = vector.multi_reduction <maximumf>, %48, %cst_19 [1] : vector<8x8xf32> to vector<8xf32>
    %50 = vector.shape_cast %49 : vector<8xf32> to vector<8x1xf32>
    %51 = vector.broadcast %50 : vector<8x1xf32> to vector<8x8xf32>
    %52 = arith.subf %48, %51 : vector<8x8xf32>
    %53 = math.exp %52 : vector<8x8xf32>
    %cst_20 = arith.constant dense<0.000000e+00> : vector<8xf32>
    %54 = vector.multi_reduction <add>, %53, %cst_20 [1] : vector<8x8xf32> to vector<8xf32>
    %55 = vector.shape_cast %54 : vector<8xf32> to vector<8x1xf32>
    %56 = tpu.reciprocal %55 {approx = true} : vector<8x1xf32> -> vector<8x1xf32>
    %57 = vector.broadcast %56 : vector<8x1xf32> to vector<8x8xf32>
    %58 = arith.mulf %53, %57 : vector<8x8xf32>
    %59 = arith.truncf %58 : vector<8x8xf32> to vector<8x8xbf16>
    %cst_21 = arith.constant dense<0.000000e+00> : vector<8x8xf32>
    %60 = tpu.matmul %59, %44, %cst_21 {dimension_numbers = #tpu.dot_dimension_numbers<[1], [0], [0], [1], [0, 0, 1, 1], [], []>} : vector<8x8xbf16>, vector<8x8xbf16>, vector<8x8xf32> -> vector<8x8xf32>
    %c0_22 = arith.constant 0 : index
    %c8 = arith.constant 8 : index
    %61 = vector.load %arg10[%c0_22, %c8] : memref<8x32xf32, #tpu.memory_space<vmem>>, vector<8x8xf32>
    tpu.vector_store %arg10[%c0_22, %c8], %60 {strides = array<i32>} : memref<8x32xf32, #tpu.memory_space<vmem>>, vector<8x8xf32>,
    %62 = vector.extract_strided_slice %9 {offsets = [0, 16], sizes = [8, 8], strides = [1, 1]} : vector<8x96xf32> to vector<8x8xf32>
    %63 = arith.truncf %62 : vector<8x8xf32> to vector<8x8xbf16>
    %64 = vector.extract_strided_slice %9 {offsets = [0, 48], sizes = [8, 8], strides = [1, 1]} : vector<8x96xf32> to vector<8x8xf32>
    %65 = arith.truncf %64 : vector<8x8xf32> to vector<8x8xbf16>
    %66 = vector.extract_strided_slice %9 {offsets = [0, 80], sizes = [8, 8], strides = [1, 1]} : vector<8x96xf32> to vector<8x8xf32>
    %67 = arith.truncf %66 : vector<8x8xf32> to vector<8x8xbf16>
    %cst_23 = arith.constant dense<0.000000e+00> : vector<8x8xf32>
    %68 = tpu.matmul %63, %65, %cst_23 {dimension_numbers = #tpu.dot_dimension_numbers<[1], [1], [0], [0], [0, 0, 1, 0], [], []>} : vector<8x8xbf16>, vector<8x8xbf16>, vector<8x8xf32> -> vector<8x8xf32>
    %cst_24 = arith.constant 0.353553385 : f32
    %69 = vector.broadcast %cst_24 : f32 to vector<8x8xf32>
    %70 = arith.mulf %68, %69 : vector<8x8xf32>
    %71 = arith.addf %70, %15 : vector<8x8xf32>
    %cst_25 = arith.constant dense<0xFF800000> : vector<8xf32>
    %72 = vector.multi_reduction <maximumf>, %71, %cst_25 [1] : vector<8x8xf32> to vector<8xf32>
    %73 = vector.shape_cast %72 : vector<8xf32> to vector<8x1xf32>
    %74 = vector.broadcast %73 : vector<8x1xf32> to vector<8x8xf32>
    %75 = arith.subf %71, %74 : vector<8x8xf32>
    %76 = math.exp %75 : vector<8x8xf32>
    %cst_26 = arith.constant dense<0.000000e+00> : vector<8xf32>
    %77 = vector.multi_reduction <add>, %76, %cst_26 [1] : vector<8x8xf32> to vector<8xf32>
    %78 = vector.shape_cast %77 : vector<8xf32> to vector<8x1xf32>
    %79 = tpu.reciprocal %78 {approx = true} : vector<8x1xf32> -> vector<8x1xf32>
    %80 = vector.broadcast %79 : vector<8x1xf32> to vector<8x8xf32>
    %81 = arith.mulf %76, %80 : vector<8x8xf32>
    %82 = arith.truncf %81 : vector<8x8xf32> to vector<8x8xbf16>
    %cst_27 = arith.constant dense<0.000000e+00> : vector<8x8xf32>
    %83 = tpu.matmul %82, %67, %cst_27 {dimension_numbers = #tpu.dot_dimension_numbers<[1], [0], [0], [1], [0, 0, 1, 1], [], []>} : vector<8x8xbf16>, vector<8x8xbf16>, vector<8x8xf32> -> vector<8x8xf32>
    %c0_28 = arith.constant 0 : index
    %c16 = arith.constant 16 : index
    %84 = vector.load %arg10[%c0_28, %c16] : memref<8x32xf32, #tpu.memory_space<vmem>>, vector<8x8xf32>
    tpu.vector_store %arg10[%c0_28, %c16], %83 {strides = array<i32>} : memref<8x32xf32, #tpu.memory_space<vmem>>, vector<8x8xf32>,
    %85 = vector.extract_strided_slice %9 {offsets = [0, 24], sizes = [8, 8], strides = [1, 1]} : vector<8x96xf32> to vector<8x8xf32>
    %86 = arith.truncf %85 : vector<8x8xf32> to vector<8x8xbf16>
    %87 = vector.extract_strided_slice %9 {offsets = [0, 56], sizes = [8, 8], strides = [1, 1]} : vector<8x96xf32> to vector<8x8xf32>
    %88 = arith.truncf %87 : vector<8x8xf32> to vector<8x8xbf16>
    %89 = vector.extract_strided_slice %9 {offsets = [0, 88], sizes = [8, 8], strides = [1, 1]} : vector<8x96xf32> to vector<8x8xf32>
    %90 = arith.truncf %89 : vector<8x8xf32> to vector<8x8xbf16>
    %cst_29 = arith.constant dense<0.000000e+00> : vector<8x8xf32>
    %91 = tpu.matmul %86, %88, %cst_29 {dimension_numbers = #tpu.dot_dimension_numbers<[1], [1], [0], [0], [0, 0, 1, 0], [], []>} : vector<8x8xbf16>, vector<8x8xbf16>, vector<8x8xf32> -> vector<8x8xf32>
    %cst_30 = arith.constant 0.353553385 : f32
    %92 = vector.broadcast %cst_30 : f32 to vector<8x8xf32>
    %93 = arith.mulf %91, %92 : vector<8x8xf32>
    %94 = arith.addf %93, %15 : vector<8x8xf32>
    %cst_31 = arith.constant dense<0xFF800000> : vector<8xf32>
    %95 = vector.multi_reduction <maximumf>, %94, %cst_31 [1] : vector<8x8xf32> to vector<8xf32>
    %96 = vector.shape_cast %95 : vector<8xf32> to vector<8x1xf32>
    %97 = vector.broadcast %96 : vector<8x1xf32> to vector<8x8xf32>
    %98 = arith.subf %94, %97 : vector<8x8xf32>
    %99 = math.exp %98 : vector<8x8xf32>
    %cst_32 = arith.constant dense<0.000000e+00> : vector<8xf32>
    %100 = vector.multi_reduction <add>, %99, %cst_32 [1] : vector<8x8xf32> to vector<8xf32>
    %101 = vector.shape_cast %100 : vector<8xf32> to vector<8x1xf32>
    %102 = tpu.reciprocal %101 {approx = true} : vector<8x1xf32> -> vector<8x1xf32>
    %103 = vector.broadcast %102 : vector<8x1xf32> to vector<8x8xf32>
    %104 = arith.mulf %99, %103 : vector<8x8xf32>
    %105 = arith.truncf %104 : vector<8x8xf32> to vector<8x8xbf16>
    %cst_33 = arith.constant dense<0.000000e+00> : vector<8x8xf32>
    %106 = tpu.matmul %105, %90, %cst_33 {dimension_numbers = #tpu.dot_dimension_numbers<[1], [0], [0], [1], [0, 0, 1, 1], [], []>} : vector<8x8xbf16>, vector<8x8xbf16>, vector<8x8xf32> -> vector<8x8xf32>
    %c0_34 = arith.constant 0 : index
    %c24 = arith.constant 24 : index
    %107 = vector.load %arg10[%c0_34, %c24] : memref<8x32xf32, #tpu.memory_space<vmem>>, vector<8x8xf32>
    tpu.vector_store %arg10[%c0_34, %c24], %106 {strides = array<i32>} : memref<8x32xf32, #tpu.memory_space<vmem>>, vector<8x8xf32>,
    %c0_35 = arith.constant 0 : index
    %c0_36 = arith.constant 0 : index
    %108 = vector.load %arg10[%c0_35, %c0_36] : memref<8x32xf32, #tpu.memory_space<vmem>>, vector<8x32xf32>
    %109 = arith.truncf %108 : vector<8x32xf32> to vector<8x32xbf16>
    %c0_37 = arith.constant 0 : index
    %c0_38 = arith.constant 0 : index
    %110 = vector.load %arg5[%c0_37, %c0_38] : memref<32x32xbf16, #tpu.memory_space<vmem>>, vector<32x32xbf16>
    %cst_39 = arith.constant dense<0.000000e+00> : vector<8x32xf32>
    %111 = tpu.matmul %109, %110, %cst_39 {dimension_numbers = #tpu.dot_dimension_numbers<[1], [0], [0], [1], [0, 0, 1, 1], [], []>} : vector<8x32xbf16>, vector<32x32xbf16>, vector<8x32xf32> -> vector<8x32xf32>
    %c0_40 = arith.constant 0 : index
    %c0_41 = arith.constant 0 : index
    %112 = vector.load %arg6[%c0_40, %c0_41] : memref<1x32xf32, #tpu.memory_space<vmem>>, vector<1x32xf32>
    %113 = vector.shape_cast %112 : vector<1x32xf32> to vector<32xf32>
    %114 = vector.shape_cast %113 : vector<32xf32> to vector<1x32xf32>
    %115 = vector.broadcast %114 : vector<1x32xf32> to vector<8x32xf32>
    %116 = arith.addf %111, %115 : vector<8x32xf32>
    %117 = arith.addf %1, %116 : vector<8x32xf32>
    %cst_42 = arith.constant dense<0.000000e+00> : vector<8xf32>
    %118 = vector.multi_reduction <add>, %117, %cst_42 [1] : vector<8x32xf32> to vector<8xf32>
    %119 = vector.shape_cast %118 : vector<8xf32> to vector<8x1xf32>
    %cst_43 = arith.constant 3.200000e+01 : f32
    %120 = vector.broadcast %cst_43 : f32 to vector<8x1xf32>
    %121 = arith.divf %119, %120 : vector<8x1xf32>
    %122 = vector.broadcast %121 : vector<8x1xf32> to vector<8x32xf32>
    %123 = arith.subf %117, %122 : vector<8x32xf32>
    %124 = arith.mulf %123, %123 : vector<8x32xf32>
    %cst_44 = arith.constant dense<0.000000e+00> : vector<8xf32>
    %125 = vector.multi_reduction <add>, %124, %cst_44 [1] : vector<8x32xf32> to vector<8xf32>
    %126 = vector.shape_cast %125 : vector<8xf32> to vector<8x1xf32>
    %cst_45 = arith.constant 3.200000e+01 : f32
    %127 = vector.broadcast %cst_45 : f32 to vector<8x1xf32>
    %128 = arith.divf %126, %127 : vector<8x1xf32>
    %129 = vector.broadcast %121 : vector<8x1xf32> to vector<8x32xf32>
    %130 = arith.subf %117, %129 : vector<8x32xf32>
    %cst_46 = arith.constant 9.99999974E-6 : f32
    %131 = vector.broadcast %cst_46 : f32 to vector<8x1xf32>
    %132 = arith.addf %128, %131 : vector<8x1xf32>
    %133 = math.rsqrt %132 : vector<8x1xf32>
    %134 = vector.broadcast %133 : vector<8x1xf32> to vector<8x32xf32>
    %135 = arith.mulf %130, %134 : vector<8x32xf32>
    %c0_47 = arith.constant 0 : index
    %c0_48 = arith.constant 0 : index
    %136 = vector.load %arg7[%c0_47, %c0_48] : memref<1x32xf32, #tpu.memory_space<vmem>>, vector<1x32xf32>
    %137 = vector.shape_cast %136 : vector<1x32xf32> to vector<32xf32>
    %138 = vector.shape_cast %137 : vector<32xf32> to vector<1x32xf32>
    %139 = vector.broadcast %138 : vector<1x32xf32> to vector<8x32xf32>
    %140 = arith.mulf %135, %139 : vector<8x32xf32>
    %c0_49 = arith.constant 0 : index
    %c0_50 = arith.constant 0 : index
    %141 = vector.load %arg8[%c0_49, %c0_50] : memref<1x32xf32, #tpu.memory_space<vmem>>, vector<1x32xf32>
    %142 = vector.shape_cast %141 : vector<1x32xf32> to vector<32xf32>
    %143 = vector.shape_cast %142 : vector<32xf32> to vector<1x32xf32>
    %144 = vector.broadcast %143 : vector<1x32xf32> to vector<8x32xf32>
    %145 = arith.addf %140, %144 : vector<8x32xf32>
    %c0_51 = arith.constant 0 : index
    %c0_52 = arith.constant 0 : index
    %c0_53 = arith.constant 0 : index
    %146 = vector.load %arg9[%c0_51, %c0_52, %c0_53] : memref<1x8x32xf32, #tpu.memory_space<vmem>>, vector<1x8x32xf32>
    %147 = vector.shape_cast %146 : vector<1x8x32xf32> to vector<8x32xf32>
    %148 = vector.shape_cast %145 : vector<8x32xf32> to vector<1x8x32xf32>
    tpu.vector_store %arg9[%c0_51, %c0_52, %c0_53], %148 {strides = array<i32>} : memref<1x8x32xf32, #tpu.memory_space<vmem>>, vector<1x8x32xf32>,
    return
  }
  func.func @transform_0(%arg0: i32) -> (i32, i32, i32) {
    %c0_i32 = arith.constant 0 : i32
    %c0_i32_0 = arith.constant 0 : i32
    %c0_i32_1 = arith.constant 0 : i32
    return %arg0, %c0_i32, %c0_i32_0 : i32, i32, i32
  }
  func.func @transform_1(%arg0: i32) -> (i32, i32) {
    %c0_i32 = arith.constant 0 : i32
    %c0_i32_0 = arith.constant 0 : i32
    %c0_i32_1 = arith.constant 0 : i32
    return %c0_i32, %c0_i32_0 : i32, i32
  }
  func.func @transform_2(%arg0: i32) -> (i32, i32) {
    %c0_i32 = arith.constant 0 : i32
    %c0_i32_0 = arith.constant 0 : i32
    %c0_i32_1 = arith.constant 0 : i32
    return %c0_i32, %c0_i32_0 : i32, i32
  }
  func.func @transform_3(%arg0: i32) -> (i32, i32) {
    %c0_i32 = arith.constant 0 : i32
    %c0_i32_0 = arith.constant 0 : i32
    %c0_i32_1 = arith.constant 0 : i32
    return %c0_i32, %c0_i32_0 : i32, i32
  }
  func.func @transform_4(%arg0: i32) -> (i32, i32) {
    %c0_i32 = arith.constant 0 : i32
    %c0_i32_0 = arith.constant 0 : i32
    %c0_i32_1 = arith.constant 0 : i32
    return %c0_i32, %c0_i32_0 : i32, i32
  }
  func.func @transform_5(%arg0: i32) -> (i32, i32) {
    %c0_i32 = arith.constant 0 : i32
    %c0_i32_0 = arith.constant 0 : i32
    %c0_i32_1 = arith.constant 0 : i32
    return %c0_i32, %c0_i32_0 : i32, i32
  }
  func.func @transform_6(%arg0: i32) -> (i32, i32) {
    %c0_i32 = arith.constant 0 : i32
    %c0_i32_0 = arith.constant 0 : i32
    %c0_i32_1 = arith.constant 0 : i32
    return %c0_i32, %c0_i32_0 : i32, i32
  }
  func.func @transform_7(%arg0: i32) -> (i32, i32) {
    %c0_i32 = arith.constant 0 : i32
    %c0_i32_0 = arith.constant 0 : i32
    %c0_i32_1 = arith.constant 0 : i32
    return %c0_i32, %c0_i32_0 : i32, i32
  }
  func.func @transform_8(%arg0: i32) -> (i32, i32, i32) {
    %c0_i32 = arith.constant 0 : i32
    %c0_i32_0 = arith.constant 0 : i32
    %c0_i32_1 = arith.constant 0 : i32
    return %arg0, %c0_i32, %c0_i32_0 : i32, i32, i32
  }
}

module attributes {stable_mosaic.version = 11 : i64} {
  func.func @_attn_res_ln_kernel(%arg0: i32, %arg1: memref<1x8x32xf32, #tpu.memory_space<vmem>>, %arg2: memref<8x8xi32, #tpu.memory_space<vmem>>, %arg3: memref<32x96xbf16, #tpu.memory_space<vmem>>, %arg4: memref<1x96xf32, #tpu.memory_space<vmem>>, %arg5: memref<32x32xbf16, #tpu.memory_space<vmem>>, %arg6: memref<1x32xf32, #tpu.memory_space<vmem>>, %arg7: memref<1x32xf32, #tpu.memory_space<vmem>>, %arg8: memref<1x32xf32, #tpu.memory_space<vmem>>, %arg9: memref<1x8x32xf32, #tpu.memory_space<vmem>>, %arg10: memref<8x32xf32, #tpu.memory_space<vmem>>) attributes {dimension_semantics = [#tpu.dimension_semantics<parallel>], iteration_bounds = array<i64: 2>, scalar_prefetch = 0 : i64, scratch_operands = 1 : i64, tpu.core_type = #tpu.core_type<tc>, window_params = [{transform_indices = @transform_0, window_bounds = array<i64: 1, 8, 32>}, {pipeline_mode = #tpu.pipeline_mode<synchronous>, transform_indices = @transform_1, window_bounds = array<i64: 8, 8>}, {pipeline_mode = #tpu.pipeline_mode<synchronous>, transform_indices = @transform_2, window_bounds = array<i64: 32, 96>}, {pipeline_mode = #tpu.pipeline_mode<synchronous>, transform_indices = @transform_3, window_bounds = array<i64: 1, 96>}, {pipeline_mode = #tpu.pipeline_mode<synchronous>, transform_indices = @transform_4, window_bounds = array<i64: 32, 32>}, {pipeline_mode = #tpu.pipeline_mode<synchronous>, transform_indices = @transform_5, window_bounds = array<i64: 1, 32>}, {pipeline_mode = #tpu.pipeline_mode<synchronous>, transform_indices = @transform_6, window_bounds = array<i64: 1, 32>}, {pipeline_mode = #tpu.pipeline_mode<synchronous>, transform_indices = @transform_7, window_bounds = array<i64: 1, 32>}, {transform_indices = @transform_8, window_bounds = array<i64: 1, 8, 32>}]} {
    %c0 = arith.constant 0 : index
    %c0_0 = arith.constant 0 : index
    %c0_1 = arith.constant 0 : index
    %0 = vector.load %arg1[%c0, %c0_0, %c0_1] : memref<1x8x32xf32, #tpu.memory_space<vmem>>, vector<1x8x32xf32>
    %1 = vector.shape_cast %0 : vector<1x8x32xf32> to vector<8x32xf32>
    %2 = arith.truncf %1 : vector<8x32xf32> to vector<8x32xbf16>
    %c0_2 = arith.constant 0 : index
    %c0_3 = arith.constant 0 : index
    %3 = vector.load %arg3[%c0_2, %c0_3] : memref<32x96xbf16, #tpu.memory_space<vmem>>, vector<32x96xbf16>
    %cst = arith.constant dense<0.000000e+00> : vector<8x96xf32>
    %4 = tpu.matmul %2, %3, %cst {dimension_numbers = #tpu.dot_dimension_numbers<[1], [0], [0], [1], [0, 0, 1, 1], [], []>} : vector<8x32xbf16>, vector<32x96xbf16>, vector<8x96xf32> -> vector<8x96xf32>
    %c0_4 = arith.constant 0 : index
    %c0_5 = arith.constant 0 : index
    %5 = vector.load %arg4[%c0_4, %c0_5] : memref<1x96xf32, #tpu.memory_space<vmem>>, vector<1x96xf32>
    %6 = vector.shape_cast %5 : vector<1x96xf32> to vector<96xf32>
    %7 = vector.shape_cast %6 : vector<96xf32> to vector<1x96xf32>
    %8 = vector.broadcast %7 : vector<1x96xf32> to vector<8x96xf32>
    %9 = arith.addf %4, %8 : vector<8x96xf32>
    %c0_6 = arith.constant 0 : index
    %c0_7 = arith.constant 0 : index
    %10 = vector.load %arg2[%c0_6, %c0_7] : memref<8x8xi32, #tpu.memory_space<vmem>>, vector<8x8xi32>
    %c1_i32 = arith.constant 1 : i32
    %11 = vector.broadcast %c1_i32 : i32 to vector<8x8xi32>
    %12 = arith.cmpi eq, %10, %11 : vector<8x8xi32>
    %cst_8 = arith.constant -1.000000e+30 : f32
    %cst_9 = arith.constant 0.000000e+00 : f32
    %13 = vector.broadcast %cst_8 : f32 to vector<8x8xf32>
    %14 = vector.broadcast %cst_9 : f32 to vector<8x8xf32>
    %15 = arith.select %12, %13, %14 : vector<8x8xi1>, vector<8x8xf32>
    %16 = vector.extract_strided_slice %9 {offsets = [0, 0], sizes = [8, 8], strides = [1, 1]} : vector<8x96xf32> to vector<8x8xf32>
    %17 = arith.truncf %16 : vector<8x8xf32> to vector<8x8xbf16>
    %18 = vector.extract_strided_slice %9 {offsets = [0, 32], sizes = [8, 8], strides = [1, 1]} : vector<8x96xf32> to vector<8x8xf32>
    %19 = arith.truncf %18 : vector<8x8xf32> to vector<8x8xbf16>
    %20 = vector.extract_strided_slice %9 {offsets = [0, 64], sizes = [8, 8], strides = [1, 1]} : vector<8x96xf32> to vector<8x8xf32>
    %21 = arith.truncf %20 : vector<8x8xf32> to vector<8x8xbf16>
    %cst_10 = arith.constant dense<0.000000e+00> : vector<8x8xf32>
    %22 = tpu.matmul %17, %19, %cst_10 {dimension_numbers = #tpu.dot_dimension_numbers<[1], [1], [0], [0], [0, 0, 1, 0], [], []>} : vector<8x8xbf16>, vector<8x8xbf16>, vector<8x8xf32> -> vector<8x8xf32>
    %cst_11 = arith.constant 0.353553385 : f32
    %23 = vector.broadcast %cst_11 : f32 to vector<8x8xf32>
    %24 = arith.mulf %22, %23 : vector<8x8xf32>
    %25 = arith.addf %24, %15 : vector<8x8xf32>
    %cst_12 = arith.constant dense<0xFF800000> : vector<8xf32>
    %26 = vector.multi_reduction <maximumf>, %25, %cst_12 [1] : vector<8x8xf32> to vector<8xf32>
    %27 = vector.shape_cast %26 : vector<8xf32> to vector<8x1xf32>
    %28 = vector.broadcast %27 : vector<8x1xf32> to vector<8x8xf32>
    %29 = arith.subf %25, %28 : vector<8x8xf32>
    %30 = math.exp %29 : vector<8x8xf32>
    %cst_13 = arith.constant dense<0.000000e+00> : vector<8xf32>
    %31 = vector.multi_reduction <add>, %30, %cst_13 [1] : vector<8x8xf32> to vector<8xf32>
    %32 = vector.shape_cast %31 : vector<8xf32> to vector<8x1xf32>
    %33 = tpu.reciprocal %32 {approx = true} : vector<8x1xf32> -> vector<8x1xf32>
    %34 = vector.broadcast %33 : vector<8x1xf32> to vector<8x8xf32>
    %35 = arith.mulf %30, %34 : vector<8x8xf32>
    %36 = arith.truncf %35 : vector<8x8xf32> to vector<8x8xbf16>
    %cst_14 = arith.constant dense<0.000000e+00> : vector<8x8xf32>
    %37 = tpu.matmul %36, %21, %cst_14 {dimension_numbers = #tpu.dot_dimension_numbers<[1], [0], [0], [1], [0, 0, 1, 1], [], []>} : vector<8x8xbf16>, vector<8x8xbf16>, vector<8x8xf32> -> vector<8x8xf32>
    %c0_15 = arith.constant 0 : index
    %c0_16 = arith.constant 0 : index
    %38 = vector.load %arg10[%c0_15, %c0_16] : memref<8x32xf32, #tpu.memory_space<vmem>>, vector<8x8xf32>
    tpu.vector_store %arg10[%c0_15, %c0_16], %37 {strides = array<i32>} : memref<8x32xf32, #tpu.memory_space<vmem>>, vector<8x8xf32>,
    %39 = vector.extract_strided_slice %9 {offsets = [0, 8], sizes = [8, 8], strides = [1, 1]} : vector<8x96xf32> to vector<8x8xf32>
    %40 = arith.truncf %39 : vector<8x8xf32> to vector<8x8xbf16>
    %41 = vector.extract_strided_slice %9 {offsets = [0, 40], sizes = [8, 8], strides = [1, 1]} : vector<8x96xf32> to vector<8x8xf32>
    %42 = arith.truncf %41 : vector<8x8xf32> to vector<8x8xbf16>
    %43 = vector.extract_strided_slice %9 {offsets = [0, 72], sizes = [8, 8], strides = [1, 1]} : vector<8x96xf32> to vector<8x8xf32>
    %44 = arith.truncf %43 : vector<8x8xf32> to vector<8x8xbf16>
    %cst_17 = arith.constant dense<0.000000e+00> : vector<8x8xf32>
    %45 = tpu.matmul %40, %42, %cst_17 {dimension_numbers = #tpu.dot_dimension_numbers<[1], [1], [0], [0], [0, 0, 1, 0], [], []>} : vector<8x8xbf16>, vector<8x8xbf16>, vector<8x8xf32> -> vector<8x8xf32>
    %cst_18 = arith.constant 0.353553385 : f32
    %46 = vector.broadcast %cst_18 : f32 to vector<8x8xf32>
    %47 = arith.mulf %45, %46 : vector<8x8xf32>
    %48 = arith.addf %47, %15 : vector<8x8xf32>
    %cst_19 = arith.constant dense<0xFF800000> : vector<8xf32>
    %49 = vector.multi_reduction <maximumf>, %48, %cst_19 [1] : vector<8x8xf32> to vector<8xf32>
    %50 = vector.shape_cast %49 : vector<8xf32> to vector<8x1xf32>
    %51 = vector.broadcast %50 : vector<8x1xf32> to vector<8x8xf32>
    %52 = arith.subf %48, %51 : vector<8x8xf32>
    %53 = math.exp %52 : vector<8x8xf32>
    %cst_20 = arith.constant dense<0.000000e+00> : vector<8xf32>
    %54 = vector.multi_reduction <add>, %53, %cst_20 [1] : vector<8x8xf32> to vector<8xf32>
    %55 = vector.shape_cast %54 : vector<8xf32> to vector<8x1xf32>
    %56 = tpu.reciprocal %55 {approx = true} : vector<8x1xf32> -> vector<8x1xf32>
    %57 = vector.broadcast %56 : vector<8x1xf32> to vector<8x8xf32>
    %58 = arith.mulf %53, %57 : vector<8x8xf32>
    %59 = arith.truncf %58 : vector<8x8xf32> to vector<8x8xbf16>
    %cst_21 = arith.constant dense<0.000000e+00> : vector<8x8xf32>
    %60 = tpu.matmul %59, %44, %cst_21 {dimension_numbers = #tpu.dot_dimension_numbers<[1], [0], [0], [1], [0, 0, 1, 1], [], []>} : vector<8x8xbf16>, vector<8x8xbf16>, vector<8x8xf32> -> vector<8x8xf32>
    %c0_22 = arith.constant 0 : index
    %c8 = arith.constant 8 : index
    %61 = vector.load %arg10[%c0_22, %c8] : memref<8x32xf32, #tpu.memory_space<vmem>>, vector<8x8xf32>
    tpu.vector_store %arg10[%c0_22, %c8], %60 {strides = array<i32>} : memref<8x32xf32, #tpu.memory_space<vmem>>, vector<8x8xf32>,
    %62 = vector.extract_strided_slice %9 {offsets = [0, 16], sizes = [8, 8], strides = [1, 1]} : vector<8x96xf32> to vector<8x8xf32>
    %63 = arith.truncf %62 : vector<8x8xf32> to vector<8x8xbf16>
    %64 = vector.extract_strided_slice %9 {offsets = [0, 48], sizes = [8, 8], strides = [1, 1]} : vector<8x96xf32> to vector<8x8xf32>
    %65 = arith.truncf %64 : vector<8x8xf32> to vector<8x8xbf16>
    %66 = vector.extract_strided_slice %9 {offsets = [0, 80], sizes = [8, 8], strides = [1, 1]} : vector<8x96xf32> to vector<8x8xf32>
    %67 = arith.truncf %66 : vector<8x8xf32> to vector<8x8xbf16>
    %cst_23 = arith.constant dense<0.000000e+00> : vector<8x8xf32>
    %68 = tpu.matmul %63, %65, %cst_23 {dimension_numbers = #tpu.dot_dimension_numbers<[1], [1], [0], [0], [0, 0, 1, 0], [], []>} : vector<8x8xbf16>, vector<8x8xbf16>, vector<8x8xf32> -> vector<8x8xf32>
    %cst_24 = arith.constant 0.353553385 : f32
    %69 = vector.broadcast %cst_24 : f32 to vector<8x8xf32>
    %70 = arith.mulf %68, %69 : vector<8x8xf32>
    %71 = arith.addf %70, %15 : vector<8x8xf32>
    %cst_25 = arith.constant dense<0xFF800000> : vector<8xf32>
    %72 = vector.multi_reduction <maximumf>, %71, %cst_25 [1] : vector<8x8xf32> to vector<8xf32>
    %73 = vector.shape_cast %72 : vector<8xf32> to vector<8x1xf32>
    %74 = vector.broadcast %73 : vector<8x1xf32> to vector<8x8xf32>
    %75 = arith.subf %71, %74 : vector<8x8xf32>
    %76 = math.exp %75 : vector<8x8xf32>
    %cst_26 = arith.constant dense<0.000000e+00> : vector<8xf32>
    %77 = vector.multi_reduction <add>, %76, %cst_26 [1] : vector<8x8xf32> to vector<8xf32>
    %78 = vector.shape_cast %77 : vector<8xf32> to vector<8x1xf32>
    %79 = tpu.reciprocal %78 {approx = true} : vector<8x1xf32> -> vector<8x1xf32>
    %80 = vector.broadcast %79 : vector<8x1xf32> to vector<8x8xf32>
    %81 = arith.mulf %76, %80 : vector<8x8xf32>
    %82 = arith.truncf %81 : vector<8x8xf32> to vector<8x8xbf16>
    %cst_27 = arith.constant dense<0.000000e+00> : vector<8x8xf32>
    %83 = tpu.matmul %82, %67, %cst_27 {dimension_numbers = #tpu.dot_dimension_numbers<[1], [0], [0], [1], [0, 0, 1, 1], [], []>} : vector<8x8xbf16>, vector<8x8xbf16>, vector<8x8xf32> -> vector<8x8xf32>
    %c0_28 = arith.constant 0 : index
    %c16 = arith.constant 16 : index
    %84 = vector.load %arg10[%c0_28, %c16] : memref<8x32xf32, #tpu.memory_space<vmem>>, vector<8x8xf32>
    tpu.vector_store %arg10[%c0_28, %c16], %83 {strides = array<i32>} : memref<8x32xf32, #tpu.memory_space<vmem>>, vector<8x8xf32>,
    %85 = vector.extract_strided_slice %9 {offsets = [0, 24], sizes = [8, 8], strides = [1, 1]} : vector<8x96xf32> to vector<8x8xf32>
    %86 = arith.truncf %85 : vector<8x8xf32> to vector<8x8xbf16>
    %87 = vector.extract_strided_slice %9 {offsets = [0, 56], sizes = [8, 8], strides = [1, 1]} : vector<8x96xf32> to vector<8x8xf32>
    %88 = arith.truncf %87 : vector<8x8xf32> to vector<8x8xbf16>
    %89 = vector.extract_strided_slice %9 {offsets = [0, 88], sizes = [8, 8], strides = [1, 1]} : vector<8x96xf32> to vector<8x8xf32>
    %90 = arith.truncf %89 : vector<8x8xf32> to vector<8x8xbf16>
    %cst_29 = arith.constant dense<0.000000e+00> : vector<8x8xf32>
    %91 = tpu.matmul %86, %88, %cst_29 {dimension_numbers = #tpu.dot_dimension_numbers<[1], [1], [0], [0], [0, 0, 1, 0], [], []>} : vector<8x8xbf16>, vector<8x8xbf16>, vector<8x8xf32> -> vector<8x8xf32>
    %cst_30 = arith.constant 0.353553385 : f32
    %92 = vector.broadcast %cst_30 : f32 to vector<8x8xf32>
    %93 = arith.mulf %91, %92 : vector<8x8xf32>
    %94 = arith.addf %93, %15 : vector<8x8xf32>
    %cst_31 = arith.constant dense<0xFF800000> : vector<8xf32>
    %95 = vector.multi_reduction <maximumf>, %94, %cst_31 [1] : vector<8x8xf32> to vector<8xf32>
    %96 = vector.shape_cast %95 : vector<8xf32> to vector<8x1xf32>
    %97 = vector.broadcast %96 : vector<8x1xf32> to vector<8x8xf32>
    %98 = arith.subf %94, %97 : vector<8x8xf32>
    %99 = math.exp %98 : vector<8x8xf32>
    %cst_32 = arith.constant dense<0.000000e+00> : vector<8xf32>
    %100 = vector.multi_reduction <add>, %99, %cst_32 [1] : vector<8x8xf32> to vector<8xf32>
    %101 = vector.shape_cast %100 : vector<8xf32> to vector<8x1xf32>
    %102 = tpu.reciprocal %101 {approx = true} : vector<8x1xf32> -> vector<8x1xf32>
    %103 = vector.broadcast %102 : vector<8x1xf32> to vector<8x8xf32>
    %104 = arith.mulf %99, %103 : vector<8x8xf32>
    %105 = arith.truncf %104 : vector<8x8xf32> to vector<8x8xbf16>
    %cst_33 = arith.constant dense<0.000000e+00> : vector<8x8xf32>
    %106 = tpu.matmul %105, %90, %cst_33 {dimension_numbers = #tpu.dot_dimension_numbers<[1], [0], [0], [1], [0, 0, 1, 1], [], []>} : vector<8x8xbf16>, vector<8x8xbf16>, vector<8x8xf32> -> vector<8x8xf32>
    %c0_34 = arith.constant 0 : index
    %c24 = arith.constant 24 : index
    %107 = vector.load %arg10[%c0_34, %c24] : memref<8x32xf32, #tpu.memory_space<vmem>>, vector<8x8xf32>
    tpu.vector_store %arg10[%c0_34, %c24], %106 {strides = array<i32>} : memref<8x32xf32, #tpu.memory_space<vmem>>, vector<8x8xf32>,
    %c0_35 = arith.constant 0 : index
    %c0_36 = arith.constant 0 : index
    %108 = vector.load %arg10[%c0_35, %c0_36] : memref<8x32xf32, #tpu.memory_space<vmem>>, vector<8x32xf32>
    %109 = arith.truncf %108 : vector<8x32xf32> to vector<8x32xbf16>
    %c0_37 = arith.constant 0 : index
    %c0_38 = arith.constant 0 : index
    %110 = vector.load %arg5[%c0_37, %c0_38] : memref<32x32xbf16, #tpu.memory_space<vmem>>, vector<32x32xbf16>
    %cst_39 = arith.constant dense<0.000000e+00> : vector<8x32xf32>
    %111 = tpu.matmul %109, %110, %cst_39 {dimension_numbers = #tpu.dot_dimension_numbers<[1], [0], [0], [1], [0, 0, 1, 1], [], []>} : vector<8x32xbf16>, vector<32x32xbf16>, vector<8x32xf32> -> vector<8x32xf32>
    %c0_40 = arith.constant 0 : index
    %c0_41 = arith.constant 0 : index
    %112 = vector.load %arg6[%c0_40, %c0_41] : memref<1x32xf32, #tpu.memory_space<vmem>>, vector<1x32xf32>
    %113 = vector.shape_cast %112 : vector<1x32xf32> to vector<32xf32>
    %114 = vector.shape_cast %113 : vector<32xf32> to vector<1x32xf32>
    %115 = vector.broadcast %114 : vector<1x32xf32> to vector<8x32xf32>
    %116 = arith.addf %111, %115 : vector<8x32xf32>
    %117 = arith.addf %1, %116 : vector<8x32xf32>
    %cst_42 = arith.constant dense<0.000000e+00> : vector<8xf32>
    %118 = vector.multi_reduction <add>, %117, %cst_42 [1] : vector<8x32xf32> to vector<8xf32>
    %119 = vector.shape_cast %118 : vector<8xf32> to vector<8x1xf32>
    %cst_43 = arith.constant 3.200000e+01 : f32
    %120 = vector.broadcast %cst_43 : f32 to vector<8x1xf32>
    %121 = arith.divf %119, %120 : vector<8x1xf32>
    %122 = vector.broadcast %121 : vector<8x1xf32> to vector<8x32xf32>
    %123 = arith.subf %117, %122 : vector<8x32xf32>
    %124 = arith.mulf %123, %123 : vector<8x32xf32>
    %cst_44 = arith.constant dense<0.000000e+00> : vector<8xf32>
    %125 = vector.multi_reduction <add>, %124, %cst_44 [1] : vector<8x32xf32> to vector<8xf32>
    %126 = vector.shape_cast %125 : vector<8xf32> to vector<8x1xf32>
    %cst_45 = arith.constant 3.200000e+01 : f32
    %127 = vector.broadcast %cst_45 : f32 to vector<8x1xf32>
    %128 = arith.divf %126, %127 : vector<8x1xf32>
    %129 = vector.broadcast %121 : vector<8x1xf32> to vector<8x32xf32>
    %130 = arith.subf %117, %129 : vector<8x32xf32>
    %cst_46 = arith.constant 9.99999974E-6 : f32
    %131 = vector.broadcast %cst_46 : f32 to vector<8x1xf32>
    %132 = arith.addf %128, %131 : vector<8x1xf32>
    %133 = math.rsqrt %132 : vector<8x1xf32>
    %134 = vector.broadcast %133 : vector<8x1xf32> to vector<8x32xf32>
    %135 = arith.mulf %130, %134 : vector<8x32xf32>
    %c0_47 = arith.constant 0 : index
    %c0_48 = arith.constant 0 : index
    %136 = vector.load %arg7[%c0_47, %c0_48] : memref<1x32xf32, #tpu.memory_space<vmem>>, vector<1x32xf32>
    %137 = vector.shape_cast %136 : vector<1x32xf32> to vector<32xf32>
    %138 = vector.shape_cast %137 : vector<32xf32> to vector<1x32xf32>
    %139 = vector.broadcast %138 : vector<1x32xf32> to vector<8x32xf32>
    %140 = arith.mulf %135, %139 : vector<8x32xf32>
    %c0_49 = arith.constant 0 : index
    %c0_50 = arith.constant 0 : index
    %141 = vector.load %arg8[%c0_49, %c0_50] : memref<1x32xf32, #tpu.memory_space<vmem>>, vector<1x32xf32>
    %142 = vector.shape_cast %141 : vector<1x32xf32> to vector<32xf32>
    %143 = vector.shape_cast %142 : vector<32xf32> to vector<1x32xf32>
    %144 = vector.broadcast %143 : vector<1x32xf32> to vector<8x32xf32>
    %145 = arith.addf %140, %144 : vector<8x32xf32>
    %c0_51 = arith.constant 0 : index
    %c0_52 = arith.constant 0 : index
    %c0_53 = arith.constant 0 : index
    %146 = vector.load %arg9[%c0_51, %c0_52, %c0_53] : memref<1x8x32xf32, #tpu.memory_space<vmem>>, vector<1x8x32xf32>
    %147 = vector.shape_cast %146 : vector<1x8x32xf32> to vector<8x32xf32>
    %148 = vector.shape_cast %145 : vector<8x32xf32> to vector<1x8x32xf32>
    tpu.vector_store %arg9[%c0_51, %c0_52, %c0_53], %148 {strides = array<i32>} : memref<1x8x32xf32, #tpu.memory_space<vmem>>, vector<1x8x32xf32>,
    return
  }
  func.func @transform_0(%arg0: i32) -> (i32, i32, i32) {
    %c0_i32 = arith.constant 0 : i32
    %c0_i32_0 = arith.constant 0 : i32
    %c0_i32_1 = arith.constant 0 : i32
    return %arg0, %c0_i32, %c0_i32_0 : i32, i32, i32
  }
  func.func @transform_1(%arg0: i32) -> (i32, i32) {
    %c0_i32 = arith.constant 0 : i32
    %c0_i32_0 = arith.constant 0 : i32
    %c0_i32_1 = arith.constant 0 : i32
    return %c0_i32, %c0_i32_0 : i32, i32
  }
  func.func @transform_2(%arg0: i32) -> (i32, i32) {
    %c0_i32 = arith.constant 0 : i32
    %c0_i32_0 = arith.constant 0 : i32
    %c0_i32_1 = arith.constant 0 : i32
    return %c0_i32, %c0_i32_0 : i32, i32
  }
  func.func @transform_3(%arg0: i32) -> (i32, i32) {
    %c0_i32 = arith.constant 0 : i32
    %c0_i32_0 = arith.constant 0 : i32
    %c0_i32_1 = arith.constant 0 : i32
    return %c0_i32, %c0_i32_0 : i32, i32
  }
  func.func @transform_4(%arg0: i32) -> (i32, i32) {
    %c0_i32 = arith.constant 0 : i32
    %c0_i32_0 = arith.constant 0 : i32
    %c0_i32_1 = arith.constant 0 : i32
    return %c0_i32, %c0_i32_0 : i32, i32
  }
  func.func @transform_5(%arg0: i32) -> (i32, i32) {
    %c0_i32 = arith.constant 0 : i32
    %c0_i32_0 = arith.constant 0 : i32
    %c0_i32_1 = arith.constant 0 : i32
    return %c0_i32, %c0_i32_0 : i32, i32
  }
  func.func @transform_6(%arg0: i32) -> (i32, i32) {
    %c0_i32 = arith.constant 0 : i32
    %c0_i32_0 = arith.constant 0 : i32
    %c0_i32_1 = arith.constant 0 : i32
    return %c0_i32, %c0_i32_0 : i32, i32
  }
  func.func @transform_7(%arg0: i32) -> (i32, i32) {
    %c0_i32 = arith.constant 0 : i32
    %c0_i32_0 = arith.constant 0 : i32
    %c0_i32_1 = arith.constant 0 : i32
    return %c0_i32, %c0_i32_0 : i32, i32
  }
  func.func @transform_8(%arg0: i32) -> (i32, i32, i32) {
    %c0_i32 = arith.constant 0 : i32
    %c0_i32_0 = arith.constant 0 : i32
    %c0_i32_1 = arith.constant 0 : i32
    return %arg0, %c0_i32, %c0_i32_0 : i32, i32, i32
  }
}

module attributes {stable_mosaic.version = 11 : i64} {
  func.func @_ff_res_ln_kernel(%arg0: i32, %arg1: i32, %arg2: memref<1x8x32xf32, #tpu.memory_space<vmem>>, %arg3: memref<32x64xbf16, #tpu.memory_space<vmem>>, %arg4: memref<1x64xf32, #tpu.memory_space<vmem>>, %arg5: memref<64x32xbf16, #tpu.memory_space<vmem>>, %arg6: memref<1x32xf32, #tpu.memory_space<vmem>>, %arg7: memref<1x32xf32, #tpu.memory_space<vmem>>, %arg8: memref<1x32xf32, #tpu.memory_space<vmem>>, %arg9: memref<1x8x32xf32, #tpu.memory_space<vmem>>) attributes {dimension_semantics = [#tpu.dimension_semantics<parallel>, #tpu.dimension_semantics<parallel>], iteration_bounds = array<i64: 2, 1>, scalar_prefetch = 0 : i64, scratch_operands = 0 : i64, tpu.core_type = #tpu.core_type<tc>, window_params = [{transform_indices = @transform_0, window_bounds = array<i64: 1, 8, 32>}, {pipeline_mode = #tpu.pipeline_mode<synchronous>, transform_indices = @transform_1, window_bounds = array<i64: 32, 64>}, {pipeline_mode = #tpu.pipeline_mode<synchronous>, transform_indices = @transform_2, window_bounds = array<i64: 1, 64>}, {pipeline_mode = #tpu.pipeline_mode<synchronous>, transform_indices = @transform_3, window_bounds = array<i64: 64, 32>}, {pipeline_mode = #tpu.pipeline_mode<synchronous>, transform_indices = @transform_4, window_bounds = array<i64: 1, 32>}, {pipeline_mode = #tpu.pipeline_mode<synchronous>, transform_indices = @transform_5, window_bounds = array<i64: 1, 32>}, {pipeline_mode = #tpu.pipeline_mode<synchronous>, transform_indices = @transform_6, window_bounds = array<i64: 1, 32>}, {transform_indices = @transform_7, window_bounds = array<i64: 1, 8, 32>}]} {
    %c0 = arith.constant 0 : index
    %c0_0 = arith.constant 0 : index
    %c0_1 = arith.constant 0 : index
    %0 = vector.load %arg2[%c0, %c0_0, %c0_1] : memref<1x8x32xf32, #tpu.memory_space<vmem>>, vector<1x8x32xf32>
    %1 = vector.shape_cast %0 : vector<1x8x32xf32> to vector<8x32xf32>
    %2 = arith.truncf %1 : vector<8x32xf32> to vector<8x32xbf16>
    %c0_2 = arith.constant 0 : index
    %c0_3 = arith.constant 0 : index
    %3 = vector.load %arg3[%c0_2, %c0_3] : memref<32x64xbf16, #tpu.memory_space<vmem>>, vector<32x64xbf16>
    %cst = arith.constant dense<0.000000e+00> : vector<8x64xf32>
    %4 = tpu.matmul %2, %3, %cst {dimension_numbers = #tpu.dot_dimension_numbers<[1], [0], [0], [1], [0, 0, 1, 1], [], []>} : vector<8x32xbf16>, vector<32x64xbf16>, vector<8x64xf32> -> vector<8x64xf32>
    %c0_4 = arith.constant 0 : index
    %c0_5 = arith.constant 0 : index
    %5 = vector.load %arg4[%c0_4, %c0_5] : memref<1x64xf32, #tpu.memory_space<vmem>>, vector<1x64xf32>
    %6 = vector.shape_cast %5 : vector<1x64xf32> to vector<64xf32>
    %7 = vector.shape_cast %6 : vector<64xf32> to vector<1x64xf32>
    %8 = vector.broadcast %7 : vector<1x64xf32> to vector<8x64xf32>
    %9 = arith.addf %4, %8 : vector<8x64xf32>
    %cst_6 = arith.constant 5.000000e-01 : f32
    %10 = vector.broadcast %cst_6 : f32 to vector<8x64xf32>
    %11 = arith.mulf %10, %9 : vector<8x64xf32>
    %cst_7 = arith.constant 0.707106769 : f32
    %12 = vector.broadcast %cst_7 : f32 to vector<8x64xf32>
    %13 = arith.mulf %9, %12 : vector<8x64xf32>
    %14 = math.erf %13 : vector<8x64xf32>
    %cst_8 = arith.constant 1.000000e+00 : f32
    %15 = vector.broadcast %cst_8 : f32 to vector<8x64xf32>
    %16 = arith.addf %15, %14 : vector<8x64xf32>
    %17 = arith.mulf %11, %16 : vector<8x64xf32>
    %18 = arith.truncf %17 : vector<8x64xf32> to vector<8x64xbf16>
    %c0_9 = arith.constant 0 : index
    %c0_10 = arith.constant 0 : index
    %19 = vector.load %arg5[%c0_9, %c0_10] : memref<64x32xbf16, #tpu.memory_space<vmem>>, vector<64x32xbf16>
    %cst_11 = arith.constant dense<0.000000e+00> : vector<8x32xf32>
    %20 = tpu.matmul %18, %19, %cst_11 {dimension_numbers = #tpu.dot_dimension_numbers<[1], [0], [0], [1], [0, 0, 1, 1], [], []>} : vector<8x64xbf16>, vector<64x32xbf16>, vector<8x32xf32> -> vector<8x32xf32>
    %c0_12 = arith.constant 0 : index
    %c0_13 = arith.constant 0 : index
    %21 = vector.load %arg6[%c0_12, %c0_13] : memref<1x32xf32, #tpu.memory_space<vmem>>, vector<1x32xf32>
    %22 = vector.shape_cast %21 : vector<1x32xf32> to vector<32xf32>
    %23 = vector.shape_cast %22 : vector<32xf32> to vector<1x32xf32>
    %24 = vector.broadcast %23 : vector<1x32xf32> to vector<8x32xf32>
    %25 = arith.addf %20, %24 : vector<8x32xf32>
    %26 = arith.addf %1, %25 : vector<8x32xf32>
    %cst_14 = arith.constant dense<0.000000e+00> : vector<8xf32>
    %27 = vector.multi_reduction <add>, %26, %cst_14 [1] : vector<8x32xf32> to vector<8xf32>
    %28 = vector.shape_cast %27 : vector<8xf32> to vector<8x1xf32>
    %cst_15 = arith.constant 3.200000e+01 : f32
    %29 = vector.broadcast %cst_15 : f32 to vector<8x1xf32>
    %30 = arith.divf %28, %29 : vector<8x1xf32>
    %31 = vector.broadcast %30 : vector<8x1xf32> to vector<8x32xf32>
    %32 = arith.subf %26, %31 : vector<8x32xf32>
    %33 = arith.mulf %32, %32 : vector<8x32xf32>
    %cst_16 = arith.constant dense<0.000000e+00> : vector<8xf32>
    %34 = vector.multi_reduction <add>, %33, %cst_16 [1] : vector<8x32xf32> to vector<8xf32>
    %35 = vector.shape_cast %34 : vector<8xf32> to vector<8x1xf32>
    %cst_17 = arith.constant 3.200000e+01 : f32
    %36 = vector.broadcast %cst_17 : f32 to vector<8x1xf32>
    %37 = arith.divf %35, %36 : vector<8x1xf32>
    %38 = vector.broadcast %30 : vector<8x1xf32> to vector<8x32xf32>
    %39 = arith.subf %26, %38 : vector<8x32xf32>
    %cst_18 = arith.constant 9.99999974E-6 : f32
    %40 = vector.broadcast %cst_18 : f32 to vector<8x1xf32>
    %41 = arith.addf %37, %40 : vector<8x1xf32>
    %42 = math.rsqrt %41 : vector<8x1xf32>
    %43 = vector.broadcast %42 : vector<8x1xf32> to vector<8x32xf32>
    %44 = arith.mulf %39, %43 : vector<8x32xf32>
    %c0_19 = arith.constant 0 : index
    %c0_20 = arith.constant 0 : index
    %45 = vector.load %arg7[%c0_19, %c0_20] : memref<1x32xf32, #tpu.memory_space<vmem>>, vector<1x32xf32>
    %46 = vector.shape_cast %45 : vector<1x32xf32> to vector<32xf32>
    %47 = vector.shape_cast %46 : vector<32xf32> to vector<1x32xf32>
    %48 = vector.broadcast %47 : vector<1x32xf32> to vector<8x32xf32>
    %49 = arith.mulf %44, %48 : vector<8x32xf32>
    %c0_21 = arith.constant 0 : index
    %c0_22 = arith.constant 0 : index
    %50 = vector.load %arg8[%c0_21, %c0_22] : memref<1x32xf32, #tpu.memory_space<vmem>>, vector<1x32xf32>
    %51 = vector.shape_cast %50 : vector<1x32xf32> to vector<32xf32>
    %52 = vector.shape_cast %51 : vector<32xf32> to vector<1x32xf32>
    %53 = vector.broadcast %52 : vector<1x32xf32> to vector<8x32xf32>
    %54 = arith.addf %49, %53 : vector<8x32xf32>
    %c0_23 = arith.constant 0 : index
    %c0_24 = arith.constant 0 : index
    %c0_25 = arith.constant 0 : index
    %55 = vector.load %arg9[%c0_23, %c0_24, %c0_25] : memref<1x8x32xf32, #tpu.memory_space<vmem>>, vector<1x8x32xf32>
    %56 = vector.shape_cast %55 : vector<1x8x32xf32> to vector<8x32xf32>
    %57 = vector.shape_cast %54 : vector<8x32xf32> to vector<1x8x32xf32>
    tpu.vector_store %arg9[%c0_23, %c0_24, %c0_25], %57 {strides = array<i32>} : memref<1x8x32xf32, #tpu.memory_space<vmem>>, vector<1x8x32xf32>,
    return
  }
  func.func @transform_0(%arg0: i32, %arg1: i32) -> (i32, i32, i32) {
    %c0_i32 = arith.constant 0 : i32
    %c0_i32_0 = arith.constant 0 : i32
    return %arg0, %arg1, %c0_i32 : i32, i32, i32
  }
  func.func @transform_1(%arg0: i32, %arg1: i32) -> (i32, i32) {
    %c0_i32 = arith.constant 0 : i32
    %c0_i32_0 = arith.constant 0 : i32
    %c0_i32_1 = arith.constant 0 : i32
    return %c0_i32, %c0_i32_0 : i32, i32
  }
  func.func @transform_2(%arg0: i32, %arg1: i32) -> (i32, i32) {
    %c0_i32 = arith.constant 0 : i32
    %c0_i32_0 = arith.constant 0 : i32
    %c0_i32_1 = arith.constant 0 : i32
    return %c0_i32, %c0_i32_0 : i32, i32
  }
  func.func @transform_3(%arg0: i32, %arg1: i32) -> (i32, i32) {
    %c0_i32 = arith.constant 0 : i32
    %c0_i32_0 = arith.constant 0 : i32
    %c0_i32_1 = arith.constant 0 : i32
    return %c0_i32, %c0_i32_0 : i32, i32
  }
  func.func @transform_4(%arg0: i32, %arg1: i32) -> (i32, i32) {
    %c0_i32 = arith.constant 0 : i32
    %c0_i32_0 = arith.constant 0 : i32
    %c0_i32_1 = arith.constant 0 : i32
    return %c0_i32, %c0_i32_0 : i32, i32
  }
  func.func @transform_5(%arg0: i32, %arg1: i32) -> (i32, i32) {
    %c0_i32 = arith.constant 0 : i32
    %c0_i32_0 = arith.constant 0 : i32
    %c0_i32_1 = arith.constant 0 : i32
    return %c0_i32, %c0_i32_0 : i32, i32
  }
  func.func @transform_6(%arg0: i32, %arg1: i32) -> (i32, i32) {
    %c0_i32 = arith.constant 0 : i32
    %c0_i32_0 = arith.constant 0 : i32
    %c0_i32_1 = arith.constant 0 : i32
    return %c0_i32, %c0_i32_0 : i32, i32
  }
  func.func @transform_7(%arg0: i32, %arg1: i32) -> (i32, i32, i32) {
    %c0_i32 = arith.constant 0 : i32
    %c0_i32_0 = arith.constant 0 : i32
    return %arg0, %arg1, %c0_i32 : i32, i32, i32
  }
}

module attributes {stable_mosaic.version = 11 : i64} {
  func.func @_ff_res_ln_kernel(%arg0: i32, %arg1: i32, %arg2: memref<1x8x32xf32, #tpu.memory_space<vmem>>, %arg3: memref<32x64xbf16, #tpu.memory_space<vmem>>, %arg4: memref<1x64xf32, #tpu.memory_space<vmem>>, %arg5: memref<64x32xbf16, #tpu.memory_space<vmem>>, %arg6: memref<1x32xf32, #tpu.memory_space<vmem>>, %arg7: memref<1x32xf32, #tpu.memory_space<vmem>>, %arg8: memref<1x32xf32, #tpu.memory_space<vmem>>, %arg9: memref<1x8x32xf32, #tpu.memory_space<vmem>>) attributes {dimension_semantics = [#tpu.dimension_semantics<parallel>, #tpu.dimension_semantics<parallel>], iteration_bounds = array<i64: 2, 1>, scalar_prefetch = 0 : i64, scratch_operands = 0 : i64, tpu.core_type = #tpu.core_type<tc>, window_params = [{transform_indices = @transform_0, window_bounds = array<i64: 1, 8, 32>}, {pipeline_mode = #tpu.pipeline_mode<synchronous>, transform_indices = @transform_1, window_bounds = array<i64: 32, 64>}, {pipeline_mode = #tpu.pipeline_mode<synchronous>, transform_indices = @transform_2, window_bounds = array<i64: 1, 64>}, {pipeline_mode = #tpu.pipeline_mode<synchronous>, transform_indices = @transform_3, window_bounds = array<i64: 64, 32>}, {pipeline_mode = #tpu.pipeline_mode<synchronous>, transform_indices = @transform_4, window_bounds = array<i64: 1, 32>}, {pipeline_mode = #tpu.pipeline_mode<synchronous>, transform_indices = @transform_5, window_bounds = array<i64: 1, 32>}, {pipeline_mode = #tpu.pipeline_mode<synchronous>, transform_indices = @transform_6, window_bounds = array<i64: 1, 32>}, {transform_indices = @transform_7, window_bounds = array<i64: 1, 8, 32>}]} {
    %c0 = arith.constant 0 : index
    %c0_0 = arith.constant 0 : index
    %c0_1 = arith.constant 0 : index
    %0 = vector.load %arg2[%c0, %c0_0, %c0_1] : memref<1x8x32xf32, #tpu.memory_space<vmem>>, vector<1x8x32xf32>
    %1 = vector.shape_cast %0 : vector<1x8x32xf32> to vector<8x32xf32>
    %2 = arith.truncf %1 : vector<8x32xf32> to vector<8x32xbf16>
    %c0_2 = arith.constant 0 : index
    %c0_3 = arith.constant 0 : index
    %3 = vector.load %arg3[%c0_2, %c0_3] : memref<32x64xbf16, #tpu.memory_space<vmem>>, vector<32x64xbf16>
    %cst = arith.constant dense<0.000000e+00> : vector<8x64xf32>
    %4 = tpu.matmul %2, %3, %cst {dimension_numbers = #tpu.dot_dimension_numbers<[1], [0], [0], [1], [0, 0, 1, 1], [], []>} : vector<8x32xbf16>, vector<32x64xbf16>, vector<8x64xf32> -> vector<8x64xf32>
    %c0_4 = arith.constant 0 : index
    %c0_5 = arith.constant 0 : index
    %5 = vector.load %arg4[%c0_4, %c0_5] : memref<1x64xf32, #tpu.memory_space<vmem>>, vector<1x64xf32>
    %6 = vector.shape_cast %5 : vector<1x64xf32> to vector<64xf32>
    %7 = vector.shape_cast %6 : vector<64xf32> to vector<1x64xf32>
    %8 = vector.broadcast %7 : vector<1x64xf32> to vector<8x64xf32>
    %9 = arith.addf %4, %8 : vector<8x64xf32>
    %cst_6 = arith.constant 5.000000e-01 : f32
    %10 = vector.broadcast %cst_6 : f32 to vector<8x64xf32>
    %11 = arith.mulf %10, %9 : vector<8x64xf32>
    %cst_7 = arith.constant 0.707106769 : f32
    %12 = vector.broadcast %cst_7 : f32 to vector<8x64xf32>
    %13 = arith.mulf %9, %12 : vector<8x64xf32>
    %14 = math.erf %13 : vector<8x64xf32>
    %cst_8 = arith.constant 1.000000e+00 : f32
    %15 = vector.broadcast %cst_8 : f32 to vector<8x64xf32>
    %16 = arith.addf %15, %14 : vector<8x64xf32>
    %17 = arith.mulf %11, %16 : vector<8x64xf32>
    %18 = arith.truncf %17 : vector<8x64xf32> to vector<8x64xbf16>
    %c0_9 = arith.constant 0 : index
    %c0_10 = arith.constant 0 : index
    %19 = vector.load %arg5[%c0_9, %c0_10] : memref<64x32xbf16, #tpu.memory_space<vmem>>, vector<64x32xbf16>
    %cst_11 = arith.constant dense<0.000000e+00> : vector<8x32xf32>
    %20 = tpu.matmul %18, %19, %cst_11 {dimension_numbers = #tpu.dot_dimension_numbers<[1], [0], [0], [1], [0, 0, 1, 1], [], []>} : vector<8x64xbf16>, vector<64x32xbf16>, vector<8x32xf32> -> vector<8x32xf32>
    %c0_12 = arith.constant 0 : index
    %c0_13 = arith.constant 0 : index
    %21 = vector.load %arg6[%c0_12, %c0_13] : memref<1x32xf32, #tpu.memory_space<vmem>>, vector<1x32xf32>
    %22 = vector.shape_cast %21 : vector<1x32xf32> to vector<32xf32>
    %23 = vector.shape_cast %22 : vector<32xf32> to vector<1x32xf32>
    %24 = vector.broadcast %23 : vector<1x32xf32> to vector<8x32xf32>
    %25 = arith.addf %20, %24 : vector<8x32xf32>
    %26 = arith.addf %1, %25 : vector<8x32xf32>
    %cst_14 = arith.constant dense<0.000000e+00> : vector<8xf32>
    %27 = vector.multi_reduction <add>, %26, %cst_14 [1] : vector<8x32xf32> to vector<8xf32>
    %28 = vector.shape_cast %27 : vector<8xf32> to vector<8x1xf32>
    %cst_15 = arith.constant 3.200000e+01 : f32
    %29 = vector.broadcast %cst_15 : f32 to vector<8x1xf32>
    %30 = arith.divf %28, %29 : vector<8x1xf32>
    %31 = vector.broadcast %30 : vector<8x1xf32> to vector<8x32xf32>
    %32 = arith.subf %26, %31 : vector<8x32xf32>
    %33 = arith.mulf %32, %32 : vector<8x32xf32>
    %cst_16 = arith.constant dense<0.000000e+00> : vector<8xf32>
    %34 = vector.multi_reduction <add>, %33, %cst_16 [1] : vector<8x32xf32> to vector<8xf32>
    %35 = vector.shape_cast %34 : vector<8xf32> to vector<8x1xf32>
    %cst_17 = arith.constant 3.200000e+01 : f32
    %36 = vector.broadcast %cst_17 : f32 to vector<8x1xf32>
    %37 = arith.divf %35, %36 : vector<8x1xf32>
    %38 = vector.broadcast %30 : vector<8x1xf32> to vector<8x32xf32>
    %39 = arith.subf %26, %38 : vector<8x32xf32>
    %cst_18 = arith.constant 9.99999974E-6 : f32
    %40 = vector.broadcast %cst_18 : f32 to vector<8x1xf32>
    %41 = arith.addf %37, %40 : vector<8x1xf32>
    %42 = math.rsqrt %41 : vector<8x1xf32>
    %43 = vector.broadcast %42 : vector<8x1xf32> to vector<8x32xf32>
    %44 = arith.mulf %39, %43 : vector<8x32xf32>
    %c0_19 = arith.constant 0 : index
    %c0_20 = arith.constant 0 : index
    %45 = vector.load %arg7[%c0_19, %c0_20] : memref<1x32xf32, #tpu.memory_space<vmem>>, vector<1x32xf32>
    %46 = vector.shape_cast %45 : vector<1x32xf32> to vector<32xf32>
    %47 = vector.shape_cast %46 : vector<32xf32> to vector<1x32xf32>
    %48 = vector.broadcast %47 : vector<1x32xf32> to vector<8x32xf32>
    %49 = arith.mulf %44, %48 : vector<8x32xf32>
    %c0_21 = arith.constant 0 : index
    %c0_22 = arith.constant 0 : index
    %50 = vector.load %arg8[%c0_21, %c0_22] : memref<1x32xf32, #tpu.memory_space<vmem>>, vector<1x32xf32>
    %51 = vector.shape_cast %50 : vector<1x32xf32> to vector<32xf32>
    %52 = vector.shape_cast %51 : vector<32xf32> to vector<1x32xf32>
    %53 = vector.broadcast %52 : vector<1x32xf32> to vector<8x32xf32>
    %54 = arith.addf %49, %53 : vector<8x32xf32>
    %c0_23 = arith.constant 0 : index
    %c0_24 = arith.constant 0 : index
    %c0_25 = arith.constant 0 : index
    %55 = vector.load %arg9[%c0_23, %c0_24, %c0_25] : memref<1x8x32xf32, #tpu.memory_space<vmem>>, vector<1x8x32xf32>
    %56 = vector.shape_cast %55 : vector<1x8x32xf32> to vector<8x32xf32>
    %57 = vector.shape_cast %54 : vector<8x32xf32> to vector<1x8x32xf32>
    tpu.vector_store %arg9[%c0_23, %c0_24, %c0_25], %57 {strides = array<i32>} : memref<1x8x32xf32, #tpu.memory_space<vmem>>, vector<1x8x32xf32>,
    return
  }
  func.func @transform_0(%arg0: i32, %arg1: i32) -> (i32, i32, i32) {
    %c0_i32 = arith.constant 0 : i32
    %c0_i32_0 = arith.constant 0 : i32
    return %arg0, %arg1, %c0_i32 : i32, i32, i32
  }
  func.func @transform_1(%arg0: i32, %arg1: i32) -> (i32, i32) {
    %c0_i32 = arith.constant 0 : i32
    %c0_i32_0 = arith.constant 0 : i32
    %c0_i32_1 = arith.constant 0 : i32
    return %c0_i32, %c0_i32_0 : i32, i32
  }
  func.func @transform_2(%arg0: i32, %arg1: i32) -> (i32, i32) {
    %c0_i32 = arith.constant 0 : i32
    %c0_i32_0 = arith.constant 0 : i32
    %c0_i32_1 = arith.constant 0 : i32
    return %c0_i32, %c0_i32_0 : i32, i32
  }
  func.func @transform_3(%arg0: i32, %arg1: i32) -> (i32, i32) {
    %c0_i32 = arith.constant 0 : i32
    %c0_i32_0 = arith.constant 0 : i32
    %c0_i32_1 = arith.constant 0 : i32
    return %c0_i32, %c0_i32_0 : i32, i32
  }
  func.func @transform_4(%arg0: i32, %arg1: i32) -> (i32, i32) {
    %c0_i32 = arith.constant 0 : i32
    %c0_i32_0 = arith.constant 0 : i32
    %c0_i32_1 = arith.constant 0 : i32
    return %c0_i32, %c0_i32_0 : i32, i32
  }
  func.func @transform_5(%arg0: i32, %arg1: i32) -> (i32, i32) {
    %c0_i32 = arith.constant 0 : i32
    %c0_i32_0 = arith.constant 0 : i32
    %c0_i32_1 = arith.constant 0 : i32
    return %c0_i32, %c0_i32_0 : i32, i32
  }
  func.func @transform_6(%arg0: i32, %arg1: i32) -> (i32, i32) {
    %c0_i32 = arith.constant 0 : i32
    %c0_i32_0 = arith.constant 0 : i32
    %c0_i32_1 = arith.constant 0 : i32
    return %c0_i32, %c0_i32_0 : i32, i32
  }
  func.func @transform_7(%arg0: i32, %arg1: i32) -> (i32, i32, i32) {
    %c0_i32 = arith.constant 0 : i32
    %c0_i32_0 = arith.constant 0 : i32
    return %arg0, %arg1, %c0_i32 : i32, i32, i32
  }
}

</mosaic_0001>

<llo_original>
// kernel: trans_layer_forward.4
$region0: #{trans_layer_forward.4}
  #allocation0 [shape = 'u32[]', space=smem, size = 0x4, offset = 0x4, fixed_abs, tag = 'smem constant byte address 0x4 - core index']
  #allocation1 [shape = 'u32[72,128]{1,0:T(1,128)}', space=vmem, size = 0x9000, scoped, tag = 'internal scratch']
  #allocation2 [shape = 'f32[8,32]{1,0:T(8,128)}', space=vmem, size = 0x1000, scoped, tag = 'scratch operand']
  %s0 = inlined_call_operand.vmem [shape: f32[2,8,32], index: 0, kind: input, shape index: {}, may-alias: {0,8}]
  %s1 = inlined_call_operand.vmem [shape: s32[8,8], index: 1, kind: input, shape index: {}]
  %s2 = inlined_call_operand.hbm [shape: bf16[32,96], index: 2, kind: input, shape index: {}]
  %s3 = inlined_call_operand.hbm [shape: f32[1,96], index: 3, kind: input, shape index: {}]
  %s4 = inlined_call_operand.hbm [shape: bf16[32,32], index: 4, kind: input, shape index: {}]
  %s5 = inlined_call_operand.hbm [shape: f32[1,32], index: 5, kind: input, shape index: {}]
  %s6 = inlined_call_operand.hbm [shape: f32[1,32], index: 6, kind: input, shape index: {}]
  %s7 = inlined_call_operand.hbm [shape: f32[1,32], index: 7, kind: input, shape index: {}]
  %s8 = inlined_call_operand.vmem [shape: f32[2,8,32], index: 8, kind: output, shape index: {}, may-alias: {0,8}]
  %s9 = sld [smem:[#allocation0]]
  $region89: #{trans_layer_forward.4} parent=0
    _
  %s11 = ssub.s32 1, %s9
  %s12 = scalar_select 0, %s11, %s9
  $region1: #{trans_layer_forward.4} parent=0
    #allocation3 [shape = 'u8[8192]{0}', space=vmem, size = 0x2000, scoped, tag = 'input window, operand 2, single buffered']
    #allocation4 [shape = 's32[2]{0}', space=sflag, size = 0x8, scoped, tag = 'scoped memory for trans_layer_forward.4']
    #allocation5 [shape = 'u8[512]{0}', space=vmem, size = 0x400, scoped, tag = 'input window, operand 3, single buffered']
    #allocation6 [shape = 's32[1]{0}', space=sflag, size = 0x4, scoped, tag = 'scoped memory for trans_layer_forward.4']
    #allocation7 [shape = 'u8[8192]{0}', space=vmem, size = 0x2000, scoped, tag = 'input window, operand 4, single buffered']
    #allocation8 [shape = 'u8[512]{0}', space=vmem, size = 0x400, scoped, tag = 'input window, operand 5, single buffered']
    #allocation9 [shape = 's32[1]{0}', space=sflag, size = 0x4, scoped, tag = 'scoped memory for trans_layer_forward.4']
    #allocation10 [shape = 'u8[512]{0}', space=vmem, size = 0x400, scoped, tag = 'input window, operand 6, single buffered']
    #allocation11 [shape = 'u8[512]{0}', space=vmem, size = 0x400, scoped, tag = 'input window, operand 7, single buffered']
    #allocation12 [shape = 's32[1]{0}', space=sflag, size = 0x4, scoped, tag = 'scoped memory for trans_layer_forward.4']
    %13 = vsyncpa [#allocation4], 0
    %14 = vsyncpa [#allocation6], 0
    %15 = vsyncpa [#allocation9], 0
    %16 = vsyncpa [#allocation12], 0
    loop: start=0, step=1, limit=4
    $region2: #{trans_layer_forward.4} parent=1 // loop_pre_header
      _
    $region3: #{trans_layer_forward.4} parent=1 // loop_header
      %s18 = sphi 0, %s22
      %p19 = scmp.ge.s32.totalorder %s18, 4
      %s28 = sphi 0, %s30
      %s31 = sphi 0, %s28
      %s32 = sphi 0, %s31
      %s48 = sphi 0, %s32
      %s52 = sphi 0, %s52
      %s54 = sphi 0, %s52
      %s55 = sphi 0, %s54
      %s69 = sphi 0, %s55
      %s73 = sphi 0, %s73
      %s75 = sphi 0, %s73
      %s76 = sphi 0, %s75
      %s90 = sphi 0, %s76
      %s94 = sphi 0, %s94
      %s96 = sphi 0, %s94
      %s97 = sphi 0, %s96
      %s111 = sphi 0, %s97
      %s115 = sphi 0, %s115
      %s117 = sphi 0, %s115
      %s118 = sphi 0, %s117
      %s132 = sphi 0, %s118
      %s136 = sphi 0, %s136
      %s138 = sphi 0, %s136
      %s139 = sphi 0, %s138
      %s153 = sphi 0, %s139
      %s157 = sphi 0, %s157
      %s159 = sphi 0, %s157
      %s160 = sphi 0, %s159
      %s174 = sphi 0, %s160
      %s178 = sphi 0, %s178
      %s180 = sphi 0, %s178
      %s181 = sphi 0, %s180
      %s195 = sphi 0, %s181
      %s201 = sphi 0, %s203
      %s204 = sphi 0, %s201
      %s205 = sphi 0, %s204
      %s221 = sphi 0, %s205
    $region4: #{trans_layer_forward.4} parent=1 // loop_header_branch
      %21 = sbr.rel (%p19) target = $region8
    $region5: #{trans_layer_forward.4} parent=1 // loop_body
      %s23 = ssub.s32 %s18, 1
      %s24 = ssub.s32 %s18, 2
      %s25 = sadd.s32 %s18, 1
      %s26 = ssub.s32 %s18, %s25
      %p27 = scmp.eq.s32.totalorder %s26, 0
      %s29 = sadd.s32 %s28, 1
      %s30 = scalar_select %p27, %s28, %s29
      %p33 = pneg %p27
      %p34 = scmp.eq.s32.totalorder %s18, 1
      %p35 = por %p33, %p34
      %p36 = scmp.ne.s32.totalorder %s28, %s31
      %p37 = scmp.eq.s32.totalorder %s18, 0
      %p38 = por %p36, %p37
      %p39 = scmp.ne.s32.totalorder %s28, %s31
      %p40 = scmp.eq.s32.totalorder %s23, 1
      %p41 = por %p39, %p40
      %p42 = scmp.ne.s32.totalorder %s31, %s32
      %p43 = scmp.eq.s32.totalorder %s23, 0
      %p44 = por %p42, %p43
      %p45 = scmp.ne.s32.totalorder %s31, %s32
      %p46 = scmp.eq.s32.totalorder %s24, 1
      %p47 = por %p45, %p46
      %p49 = scmp.ne.s32.totalorder %s32, %s48
      %p50 = scmp.eq.s32.totalorder %s24, 0
      %p51 = por %p49, %p50
      %s53 = sadd.s32 %s52, 1
      %p56 = scmp.eq.s32.totalorder %s18, 1
      %p57 = scmp.ne.s32.totalorder %s52, %s54
      %p58 = scmp.eq.s32.totalorder %s18, 0
      %p59 = por %p57, %p58
      %p60 = scmp.ne.s32.totalorder %s52, %s54
      %p61 = scmp.eq.s32.totalorder %s23, 1
      %p62 = por %p60, %p61
      %p63 = scmp.ne.s32.totalorder %s54, %s55
      %p64 = scmp.eq.s32.totalorder %s23, 0
      %p65 = por %p63, %p64
      %p66 = scmp.ne.s32.totalorder %s54, %s55
      %p67 = scmp.eq.s32.totalorder %s24, 1
      %p68 = por %p66, %p67
      %p70 = scmp.ne.s32.totalorder %s55, %s69
      %p71 = scmp.eq.s32.totalorder %s24, 0
      %p72 = por %p70, %p71
      %s74 = sadd.s32 %s73, 1
      %p77 = scmp.eq.s32.totalorder %s18, 1
      %p78 = scmp.ne.s32.totalorder %s73, %s75
      %p79 = scmp.eq.s32.totalorder %s18, 0
      %p80 = por %p78, %p79
      %p81 = scmp.ne.s32.totalorder %s73, %s75
      %p82 = scmp.eq.s32.totalorder %s23, 1
      %p83 = por %p81, %p82
      %p84 = scmp.ne.s32.totalorder %s75, %s76
      %p85 = scmp.eq.s32.totalorder %s23, 0
      %p86 = por %p84, %p85
      %p87 = scmp.ne.s32.totalorder %s75, %s76
      %p88 = scmp.eq.s32.totalorder %s24, 1
      %p89 = por %p87, %p88
      %p91 = scmp.ne.s32.totalorder %s76, %s90
      %p92 = scmp.eq.s32.totalorder %s24, 0
      %p93 = por %p91, %p92
      %s95 = sadd.s32 %s94, 1
      %p98 = scmp.eq.s32.totalorder %s18, 1
      %p99 = scmp.ne.s32.totalorder %s94, %s96
      %p100 = scmp.eq.s32.totalorder %s18, 0
      %p101 = por %p99, %p100
      %p102 = scmp.ne.s32.totalorder %s94, %s96
      %p103 = scmp.eq.s32.totalorder %s23, 1
      %p104 = por %p102, %p103
      %p105 = scmp.ne.s32.totalorder %s96, %s97
      %p106 = scmp.eq.s32.totalorder %s23, 0
      %p107 = por %p105, %p106
      %p108 = scmp.ne.s32.totalorder %s96, %s97
      %p109 = scmp.eq.s32.totalorder %s24, 1
      %p110 = por %p108, %p109
      %p112 = scmp.ne.s32.totalorder %s97, %s111
      %p113 = scmp.eq.s32.totalorder %s24, 0
      %p114 = por %p112, %p113
      %s116 = sadd.s32 %s115, 1
      %p119 = scmp.eq.s32.totalorder %s18, 1
      %p120 = scmp.ne.s32.totalorder %s115, %s117
      %p121 = scmp.eq.s32.totalorder %s18, 0
      %p122 = por %p120, %p121
      %p123 = scmp.ne.s32.totalorder %s115, %s117
      %p124 = scmp.eq.s32.totalorder %s23, 1
      %p125 = por %p123, %p124
      %p126 = scmp.ne.s32.totalorder %s117, %s118
      %p127 = scmp.eq.s32.totalorder %s23, 0
      %p128 = por %p126, %p127
      %p129 = scmp.ne.s32.totalorder %s117, %s118
      %p130 = scmp.eq.s32.totalorder %s24, 1
      %p131 = por %p129, %p130
      %p133 = scmp.ne.s32.totalorder %s118, %s132
      %p134 = scmp.eq.s32.totalorder %s24, 0
      %p135 = por %p133, %p134
      %s137 = sadd.s32 %s136, 1
      %p140 = scmp.eq.s32.totalorder %s18, 1
      %p141 = scmp.ne.s32.totalorder %s136, %s138
      %p142 = scmp.eq.s32.totalorder %s18, 0
      %p143 = por %p141, %p142
      %p144 = scmp.ne.s32.totalorder %s136, %s138
      %p145 = scmp.eq.s32.totalorder %s23, 1
      %p146 = por %p144, %p145
      %p147 = scmp.ne.s32.totalorder %s138, %s139
      %p148 = scmp.eq.s32.totalorder %s23, 0
      %p149 = por %p147, %p148
      %p150 = scmp.ne.s32.totalorder %s138, %s139
      %p151 = scmp.eq.s32.totalorder %s24, 1
      %p152 = por %p150, %p151
      %p154 = scmp.ne.s32.totalorder %s139, %s153
      %p155 = scmp.eq.s32.totalorder %s24, 0
      %p156 = por %p154, %p155
      %s158 = sadd.s32 %s157, 1
      %p161 = scmp.eq.s32.totalorder %s18, 1
      %p162 = scmp.ne.s32.totalorder %s157, %s159
      %p163 = scmp.eq.s32.totalorder %s18, 0
      %p164 = por %p162, %p163
      %p165 = scmp.ne.s32.totalorder %s157, %s159
      %p166 = scmp.eq.s32.totalorder %s23, 1
      %p167 = por %p165, %p166
      %p168 = scmp.ne.s32.totalorder %s159, %s160
      %p169 = scmp.eq.s32.totalorder %s23, 0
      %p170 = por %p168, %p169
      %p171 = scmp.ne.s32.totalorder %s159, %s160
      %p172 = scmp.eq.s32.totalorder %s24, 1
      %p173 = por %p171, %p172
      %p175 = scmp.ne.s32.totalorder %s160, %s174
      %p176 = scmp.eq.s32.totalorder %s24, 0
      %p177 = por %p175, %p176
      %s179 = sadd.s32 %s178, 1
      %p182 = scmp.eq.s32.totalorder %s18, 1
      %p183 = scmp.ne.s32.totalorder %s178, %s180
      %p184 = scmp.eq.s32.totalorder %s18, 0
      %p185 = por %p183, %p184
      %p186 = scmp.ne.s32.totalorder %s178, %s180
      %p187 = scmp.eq.s32.totalorder %s23, 1
      %p188 = por %p186, %p187
      %p189 = scmp.ne.s32.totalorder %s180, %s181
      %p190 = scmp.eq.s32.totalorder %s23, 0
      %p191 = por %p189, %p190
      %p192 = scmp.ne.s32.totalorder %s180, %s181
      %p193 = scmp.eq.s32.totalorder %s24, 1
      %p194 = por %p192, %p193
      %p196 = scmp.ne.s32.totalorder %s181, %s195
      %p197 = scmp.eq.s32.totalorder %s24, 0
      %p198 = por %p196, %p197
      %s199 = ssub.s32 %s18, %s25
      %p200 = scmp.eq.s32.totalorder %s199, 0
      %s202 = sadd.s32 %s201, 1
      %s203 = scalar_select %p200, %s201, %s202
      %p206 = pneg %p200
      %p207 = scmp.eq.s32.totalorder %s18, 1
      %p208 = por %p206, %p207
      %p209 = scmp.ne.s32.totalorder %s201, %s204
      %p210 = scmp.eq.s32.totalorder %s18, 0
      %p211 = por %p209, %p210
      %p212 = scmp.ne.s32.totalorder %s201, %s204
      %p213 = scmp.eq.s32.totalorder %s23, 1
      %p214 = por %p212, %p213
      %p215 = scmp.ne.s32.totalorder %s204, %s205
      %p216 = scmp.eq.s32.totalorder %s23, 0
      %p217 = por %p215, %p216
      %p218 = scmp.ne.s32.totalorder %s204, %s205
      %p219 = scmp.eq.s32.totalorder %s24, 1
      %p220 = por %p218, %p219
      %p222 = scmp.ne.s32.totalorder %s205, %s221
      %p223 = scmp.eq.s32.totalorder %s24, 0
      %p224 = por %p222, %p223
      %p225 = scmp.le.s32.totalorder 1, %s18
      %p226 = scmp.lt.s32.totalorder %s18, 3
      %p227 = pnand %p225, %p226
      %p228 = pneg %p227
      // Predicated region
      $region9: #{trans_layer_forward.4} parent=5 // pred_check
        _
      $region10: #{trans_layer_forward.4} parent=5 // pred_check_branch
        %230 = sbr.rel (%p227) target = $region12
      $region11: #{trans_layer_forward.4} parent=5 // pred_region
        %s231 = ssub.s32 %s18, 1
        // Predicated region
        $region13: #{trans_layer_forward.4} parent=11 // pred_check
          %p232 = pneg %p65
        $region14: #{trans_layer_forward.4} parent=11 // pred_check_branch
          %234 = sbr.rel (%p232) target = $region16
        $region15: #{trans_layer_forward.4} parent=11 // pred_region
          _
        $region16: #{trans_layer_forward.4} parent=11 // pred_fallthru
          _
        // Predicated region
        $region17: #{trans_layer_forward.4} parent=11 // pred_check
          %p235 = pneg %p86
        $region18: #{trans_layer_forward.4} parent=11 // pred_check_branch
          %237 = sbr.rel (%p235) target = $region20
        $region19: #{trans_layer_forward.4} parent=11 // pred_region
          %239 = vsyncadd [#allocation4], 0
          %s240 = sshll.u32 %s2, 4
          %s241 = int_to_ptr.hbm [resolvable:$true] %s240
          %s242 = sshll.u32 [#allocation3], 4
          %s243 = int_to_ptr.vmem [resolvable:$true] %s242
          %248 = dma.hbm_to_vmem [thread:$0]  %s241, 256, %s243, [#allocation4], 64, 64, 4
        $region20: #{trans_layer_forward.4} parent=11 // pred_fallthru
          _
        // Predicated region
        $region21: #{trans_layer_forward.4} parent=11 // pred_check
          %p249 = pneg %p107
        $region22: #{trans_layer_forward.4} parent=11 // pred_check_branch
          %251 = sbr.rel (%p249) target = $region24
        $region23: #{trans_layer_forward.4} parent=11 // pred_region
          %253 = vsyncadd [#allocation6], 0
          %s255 = sshll.u32 %s3, 4
          %s256 = int_to_ptr.hbm [resolvable:$true] %s255
          %s257 = sshll.u32 [#allocation5], 4
          %s258 = int_to_ptr.vmem [resolvable:$true] %s257
          %260 = dma.hbm_to_vmem [thread:$0]  %s256, 16, %s258, [#allocation6]
        $region24: #{trans_layer_forward.4} parent=11 // pred_fallthru
          _
        // Predicated region
        $region25: #{trans_layer_forward.4} parent=11 // pred_check
          %p261 = pneg %p128
        $region26: #{trans_layer_forward.4} parent=11 // pred_check_branch
          %263 = sbr.rel (%p261) target = $region28
        $region27: #{trans_layer_forward.4} parent=11 // pred_region
          %265 = vsyncadd [#allocation6], 0
          %s266 = sshll.u32 %s4, 4
          %s267 = int_to_ptr.hbm [resolvable:$true] %s266
          %s268 = sshll.u32 [#allocation7], 4
          %s269 = int_to_ptr.vmem [resolvable:$true] %s268
          %274 = dma.hbm_to_vmem [thread:$0]  %s267, 256, %s269, [#allocation6], 64, 64, 4
        $region28: #{trans_layer_forward.4} parent=11 // pred_fallthru
          _
        // Predicated region
        $region29: #{trans_layer_forward.4} parent=11 // pred_check
          %p275 = pneg %p149
        $region30: #{trans_layer_forward.4} parent=11 // pred_check_branch
          %277 = sbr.rel (%p275) target = $region32
        $region31: #{trans_layer_forward.4} parent=11 // pred_region
          %279 = vsyncadd [#allocation9], 0
          %s281 = sshll.u32 %s5, 4
          %s282 = int_to_ptr.hbm [resolvable:$true] %s281
          %s283 = sshll.u32 [#allocation8], 4
          %s284 = int_to_ptr.vmem [resolvable:$true] %s283
          %286 = dma.hbm_to_vmem [thread:$0]  %s282, 16, %s284, [#allocation9]
        $region32: #{trans_layer_forward.4} parent=11 // pred_fallthru
          _
        // Predicated region
        $region33: #{trans_layer_forward.4} parent=11 // pred_check
          %p287 = pneg %p170
        $region34: #{trans_layer_forward.4} parent=11 // pred_check_branch
          %289 = sbr.rel (%p287) target = $region36
        $region35: #{trans_layer_forward.4} parent=11 // pred_region
          %291 = vsyncadd [#allocation9], 0
          %s293 = sshll.u32 %s6, 4
          %s294 = int_to_ptr.hbm [resolvable:$true] %s293
          %s295 = sshll.u32 [#allocation10], 4
          %s296 = int_to_ptr.vmem [resolvable:$true] %s295
          %298 = dma.hbm_to_vmem [thread:$0]  %s294, 16, %s296, [#allocation9]
        $region36: #{trans_layer_forward.4} parent=11 // pred_fallthru
          _
        // Predicated region
        $region37: #{trans_layer_forward.4} parent=11 // pred_check
          %p299 = pneg %p191
        $region38: #{trans_layer_forward.4} parent=11 // pred_check_branch
          %301 = sbr.rel (%p299) target = $region40
        $region39: #{trans_layer_forward.4} parent=11 // pred_region
          %303 = vsyncadd [#allocation12], 0
          %s305 = sshll.u32 %s7, 4
          %s306 = int_to_ptr.hbm [resolvable:$true] %s305
          %s307 = sshll.u32 [#allocation11], 4
          %s308 = int_to_ptr.vmem [resolvable:$true] %s307
          %310 = dma.hbm_to_vmem [thread:$0]  %s306, 16, %s308, [#allocation12]
        $region40: #{trans_layer_forward.4} parent=11 // pred_fallthru
          _
      $region12: #{trans_layer_forward.4} parent=5 // pred_fallthru
        _
      %p311 = scmp.lt.s32.totalorder %s18, 2
      // Predicated region
      $region41: #{trans_layer_forward.4} parent=5 // pred_check
        %p312 = pneg %p311
      $region42: #{trans_layer_forward.4} parent=5 // pred_check_branch
        %314 = sbr.rel (%p312) target = $region44
      $region43: #{trans_layer_forward.4} parent=5 // pred_region
        // Predicated region
        $region45: #{trans_layer_forward.4} parent=43 // pred_check
          %p315 = pneg %p38
        $region46: #{trans_layer_forward.4} parent=43 // pred_check_branch
          %317 = sbr.rel (%p315) target = $region48
        $region47: #{trans_layer_forward.4} parent=43 // pred_region
          %p318 = scmp.lt.s32.totalorder %s18, 1
          %s319 = scalar_select %p318, %s18, 1
          %s320 = smul.addr %s319, 8
          %s321 = scalar_lea.vmem %s0, %s320
        $region48: #{trans_layer_forward.4} parent=43 // pred_fallthru
          _
      $region44: #{trans_layer_forward.4} parent=5 // pred_fallthru
        _
      %p322 = scmp.le.s32.totalorder 1, %s18
      %p323 = scmp.lt.s32.totalorder %s18, 3
      %p324 = pnand %p322, %p323
      %p325 = pneg %p324
      // Predicated region
      $region49: #{trans_layer_forward.4} parent=5 // pred_check
        _
      $region50: #{trans_layer_forward.4} parent=5 // pred_check_branch
        %327 = sbr.rel (%p324) target = $region52
      $region51: #{trans_layer_forward.4} parent=5 // pred_region
        %s328 = ssub.s32 %s18, 1
        // Predicated region
        $region53: #{trans_layer_forward.4} parent=51 // pred_check
          %p329 = pneg %p86
        $region54: #{trans_layer_forward.4} parent=51 // pred_check_branch
          %331 = sbr.rel (%p329) target = $region56
        $region55: #{trans_layer_forward.4} parent=51 // pred_region
          %333 = dma.done [#allocation4], 256
        $region56: #{trans_layer_forward.4} parent=51 // pred_fallthru
          _
        // Predicated region
        $region57: #{trans_layer_forward.4} parent=51 // pred_check
          %p334 = pneg %p107
        $region58: #{trans_layer_forward.4} parent=51 // pred_check_branch
          %336 = sbr.rel (%p334) target = $region60
        $region59: #{trans_layer_forward.4} parent=51 // pred_region
          %338 = dma.done [#allocation6], 16
        $region60: #{trans_layer_forward.4} parent=51 // pred_fallthru
          _
        // Predicated region
        $region61: #{trans_layer_forward.4} parent=51 // pred_check
          %p339 = pneg %p128
        $region62: #{trans_layer_forward.4} parent=51 // pred_check_branch
          %341 = sbr.rel (%p339) target = $region64
        $region63: #{trans_layer_forward.4} parent=51 // pred_region
          %343 = dma.done [#allocation6], 256
        $region64: #{trans_layer_forward.4} parent=51 // pred_fallthru
          _
        // Predicated region
        $region65: #{trans_layer_forward.4} parent=51 // pred_check
          %p344 = pneg %p149
        $region66: #{trans_layer_forward.4} parent=51 // pred_check_branch
          %346 = sbr.rel (%p344) target = $region68
        $region67: #{trans_layer_forward.4} parent=51 // pred_region
          %348 = dma.done [#allocation9], 16
        $region68: #{trans_layer_forward.4} parent=51 // pred_fallthru
          _
        // Predicated region
        $region69: #{trans_layer_forward.4} parent=51 // pred_check
          %p349 = pneg %p170
        $region70: #{trans_layer_forward.4} parent=51 // pred_check_branch
          %351 = sbr.rel (%p349) target = $region72
        $region71: #{trans_layer_forward.4} parent=51 // pred_region
          %353 = dma.done [#allocation9], 16
        $region72: #{trans_layer_forward.4} parent=51 // pred_fallthru
          _
        // Predicated region
        $region73: #{trans_layer_forward.4} parent=51 // pred_check
          %p354 = pneg %p191
        $region74: #{trans_layer_forward.4} parent=51 // pred_check_branch
          %356 = sbr.rel (%p354) target = $region76
        $region75: #{trans_layer_forward.4} parent=51 // pred_region
          %358 = dma.done [#allocation12], 16
        $region76: #{trans_layer_forward.4} parent=51 // pred_fallthru
          _
        %p359 = scmp.lt.s32.totalorder %s23, 1
        %s360 = scalar_select %p359, %s23, 1
        %s361 = smul.addr %s360, 8
        %s362 = scalar_lea.vmem %s0, %s361
        %p363 = pneg %p44
        %p364 = pneg %p41
        %p365 = pneg %p65
        %p366 = pneg %p62
        %p367 = pneg %p86
        %p368 = pneg %p83
        %p369 = pneg %p107
        %p370 = pneg %p104
        %p371 = pneg %p128
        %p372 = pneg %p125
        %p373 = pneg %p149
        %p374 = pneg %p146
        %p375 = pneg %p170
        %p376 = pneg %p167
        %p377 = pneg %p191
        %p378 = pneg %p188
        %p379 = pneg %p217
        %p380 = pneg %p214
        %p381 = scmp.lt.s32.totalorder %s23, 1
        %s382 = scalar_select %p381, %s23, 1
        %s383 = smul.addr %s382, 8
        %s384 = scalar_lea.vmem %s8, %s383
        %p385 = scmp.lt.s32.totalorder %s23, 1
        %s386 = scalar_select %p385, %s23, 1
        %s387 = smul.addr %s386, 8
        %s388 = scalar_lea.vmem %s0, %s387
        %p389 = scmp.lt.s32.totalorder %s23, 1
        %s390 = scalar_select %p389, %s23, 1
        %s391 = smul.addr %s390, 8
        %s392 = scalar_lea.vmem %s8, %s391
        %v394 = vld [vmem:[%s388] sm:$0xff]
        %v395 = vpack.c.bf16 %v394, %v394
        %v396 = vld [vmem:[#allocation3] sm:$0xf]
        %v397 = vld [vmem:[#allocation3 + $0x4] sm:$0xf]
        %v398 = vld [vmem:[#allocation3 + $0x8] sm:$0xf]
        %v399 = vld [vmem:[#allocation3 + $0xc] sm:$0xf]
        %v400 = vld [vmem:[#allocation5] sm:$0x1]
        %v402 = vperm.slane %v400, 0
        %v408 = vunpack.c.l.b16 %v396
        %v409 = vunpack.c.l.b16 %v397
        %v410 = vunpack.c.l.b16 %v398
        %v411 = vunpack.c.l.b16 %v399
        %v412 = vpack.c.b16 %v409, %v408
        %v413 = vpack.c.b16 %v411, %v410
        %vm416 = vcmask 261120
        %v418 = vsel %vm416, %v395, 0
        %420 = vmatpush.bf16.msra.mxu0 0
        %421 = vmatpush.bf16.msra.mxu0 0
        %422 = vmatpush.bf16.msra.mxu0 0
        %423 = vmatpush.bf16.msra.mxu0 0
        %424 = vmatpush.bf16.msra.mxu0 0
        %425 = vmatpush.bf16.msra.mxu0 0
        %426 = vmatpush.bf16.msra.mxu0 %v413
        %427 = vmatpush.bf16.msra.mxu0 %v412
        %428 = vmatmul.bf16.gmra.mxu0 %v418
        %v429 = vpop.f32.mrf.mxu0
        %v430 = vadd.f32 %v402, %v429
        %v431 = vpop.f32.mrf.mxu0
        %432 = vdwg.mxu0
        %v433 = vld [vmem:[%s1] sm:$0xff]
        %vm434 = vcmp.eq.s32.totalorder %v433, 1
        %v435 = vsel %vm434, -1e+30, 0.0
        %v436 = vpack.c.bf16 %v430, %v430
        %438 = vrot.lane.b32.xlu0 %v436, 96
        %v439 = vpop.permute.xlu0 %438
        %vm440 = vcmask 64512
        %v442 = vsel %vm440, %v436, 0
        %v445 = vsel %vm440, %v439, 0
        %447 = vmatpush.bf16.xpose.msra.mxu0 0
        %448 = vmatpush.bf16.xpose.msra.mxu0 0
        %449 = vmatpush.bf16.xpose.msra.mxu0 0
        %450 = vmatpush.bf16.xpose.msra.mxu0 0
        %451 = vmatpush.bf16.xpose.msra.mxu0 0
        %452 = vmatpush.bf16.xpose.msra.mxu0 0
        %453 = vmatpush.bf16.xpose.msra.mxu0 0
        %454 = vmatpush.bf16.xpose.msra.mxu0 %v445
        %455 = vmatmul.bf16.gmra.mxu0 %v442
        %v456 = vpop.f32.mrf.mxu0
        %v457 = vadd.f32 0.0, %v456
        %v458 = vpop.f32.mrf.mxu0
        %459 = vdwg.mxu0
        %v460 = vmul.f32 %v457, 0.35355338
        %v461 = vadd.f32 %v460, %v435
        %v462 = vsel %vm440, %v461, -inf
        %463 = vmax.xlane.f32.xlu0 %v462
        %v464 = vpop.xlane.xlu0 %463
        %v465 = vsub.f32 %v461, %v464
        %v466 = vmul.f32 %v465, 1.442695
        %v467 = vpow.pop %v466
        %v468 = vsel %vm440, %v467, 0.0
        %469 = vadd.xlane.f32.xlu0 %v468
        %v470 = vpop.xlane.xlu0 %469
        %v471 = vrcp.pop %v470
        %v472 = vmul.f32 %v467, %v471
        %v473 = vpack.c.bf16 %v472, %v472
        %474 = vrot.lane.b32.xlu0 %v436, 64
        %v475 = vpop.permute.xlu0 %474
        %v477 = vsel %vm440, %v473, 0
        %vm479 = vcmask 1043456
        %v481 = vsel %vm479, %v475, 0
        %483 = vmatpush.bf16.msra.mxu0 0
        %484 = vmatpush.bf16.msra.mxu0 0
        %485 = vmatpush.bf16.msra.mxu0 0
        %486 = vmatpush.bf16.msra.mxu0 0
        %487 = vmatpush.bf16.msra.mxu0 0
        %488 = vmatpush.bf16.msra.mxu0 0
        %489 = vmatpush.bf16.msra.mxu0 0
        %490 = vmatpush.bf16.msra.mxu0 %v481
        %491 = vmatmul.bf16.gmra.mxu0 %v477
        %v492 = vpop.f32.mrf.mxu0
        %v493 = vadd.f32 0.0, %v492
        %v494 = vpop.f32.mrf.mxu0
        %495 = vdwg.mxu0
        %496 = vst.msk [vmem:[#allocation2] sm:$0xff] %vm440, %v493
        %497 = vrot.lane.b32.xlu0 %v436, 120
        %v498 = vpop.permute.xlu0 %497
        %499 = vrot.lane.b32.xlu0 %v436, 88
        %v500 = vpop.permute.xlu0 %499
        %v502 = vsel %vm440, %v498, 0
        %v505 = vsel %vm440, %v500, 0
        %507 = vmatpush.bf16.xpose.msra.mxu0 0
        %508 = vmatpush.bf16.xpose.msra.mxu0 0
        %509 = vmatpush.bf16.xpose.msra.mxu0 0
        %510 = vmatpush.bf16.xpose.msra.mxu0 0
        %511 = vmatpush.bf16.xpose.msra.mxu0 0
        %512 = vmatpush.bf16.xpose.msra.mxu0 0
        %513 = vmatpush.bf16.xpose.msra.mxu0 0
        %514 = vmatpush.bf16.xpose.msra.mxu0 %v505
        %515 = vmatmul.bf16.gmra.mxu0 %v502
        %v516 = vpop.f32.mrf.mxu0
        %v517 = vadd.f32 0.0, %v516
        %v518 = vpop.f32.mrf.mxu0
        %519 = vdwg.mxu0
        %v520 = vmul.f32 %v517, 0.35355338
        %v521 = vadd.f32 %v520, %v435
        %v522 = vsel %vm440, %v521, -inf
        %523 = vmax.xlane.f32.xlu0 %v522
        %v524 = vpop.xlane.xlu0 %523
        %v525 = vsub.f32 %v521, %v524
        %v526 = vmul.f32 %v525, 1.442695
        %v527 = vpow.pop %v526
        %v528 = vsel %vm440, %v527, 0.0
        %529 = vadd.xlane.f32.xlu0 %v528
        %v530 = vpop.xlane.xlu0 %529
        %v531 = vrcp.pop %v530
        %v532 = vmul.f32 %v527, %v531
        %v533 = vpack.c.bf16 %v532, %v532
        %534 = vrot.lane.b32.xlu0 %v436, 56
        %v535 = vpop.permute.xlu0 %534
        %v537 = vsel %vm440, %v533, 0
        %v540 = vsel %vm479, %v535, 0
        %542 = vmatpush.bf16.msra.mxu0 0
        %543 = vmatpush.bf16.msra.mxu0 0
        %544 = vmatpush.bf16.msra.mxu0 0
        %545 = vmatpush.bf16.msra.mxu0 0
        %546 = vmatpush.bf16.msra.mxu0 0
        %547 = vmatpush.bf16.msra.mxu0 0
        %548 = vmatpush.bf16.msra.mxu0 0
        %549 = vmatpush.bf16.msra.mxu0 %v540
        %550 = vmatmul.bf16.gmra.mxu0 %v537
        %v551 = vpop.f32.mrf.mxu0
        %v552 = vadd.f32 0.0, %v551
        %v553 = vpop.f32.mrf.mxu0
        %554 = vdwg.mxu0
        %556 = vrot.lane.b32.xlu0 %v552, 8
        %v557 = vpop.permute.xlu0 %556
        %vm559 = vcmask 130112
        %560 = vst.msk [vmem:[#allocation2] sm:$0xff] %vm559, %v557
        %561 = vrot.lane.b32.xlu0 %v436, 112
        %v562 = vpop.permute.xlu0 %561
        %563 = vrot.lane.b32.xlu0 %v436, 80
        %v564 = vpop.permute.xlu0 %563
        %v566 = vsel %vm440, %v562, 0
        %v569 = vsel %vm440, %v564, 0
        %571 = vmatpush.bf16.xpose.msra.mxu0 0
        %572 = vmatpush.bf16.xpose.msra.mxu0 0
        %573 = vmatpush.bf16.xpose.msra.mxu0 0
        %574 = vmatpush.bf16.xpose.msra.mxu0 0
        %575 = vmatpush.bf16.xpose.msra.mxu0 0
        %576 = vmatpush.bf16.xpose.msra.mxu0 0
        %577 = vmatpush.bf16.xpose.msra.mxu0 0
        %578 = vmatpush.bf16.xpose.msra.mxu0 %v569
        %579 = vmatmul.bf16.gmra.mxu0 %v566
        %v580 = vpop.f32.mrf.mxu0
        %v581 = vadd.f32 0.0, %v580
        %v582 = vpop.f32.mrf.mxu0
        %583 = vdwg.mxu0
        %v584 = vmul.f32 %v581, 0.35355338
        %v585 = vadd.f32 %v584, %v435
        %v586 = vsel %vm440, %v585, -inf
        %587 = vmax.xlane.f32.xlu0 %v586
        %v588 = vpop.xlane.xlu0 %587
        %v589 = vsub.f32 %v585, %v588
        %v590 = vmul.f32 %v589, 1.442695
        %v591 = vpow.pop %v590
        %v592 = vsel %vm440, %v591, 0.0
        %593 = vadd.xlane.f32.xlu0 %v592
        %v594 = vpop.xlane.xlu0 %593
        %v595 = vrcp.pop %v594
        %v596 = vmul.f32 %v591, %v595
        %v597 = vpack.c.bf16 %v596, %v596
        %598 = vrot.lane.b32.xlu0 %v436, 48
        %v599 = vpop.permute.xlu0 %598
        %v601 = vsel %vm440, %v597, 0
        %v604 = vsel %vm479, %v599, 0
        %606 = vmatpush.bf16.msra.mxu0 0
        %607 = vmatpush.bf16.msra.mxu0 0
        %608 = vmatpush.bf16.msra.mxu0 0
        %609 = vmatpush.bf16.msra.mxu0 0
        %610 = vmatpush.bf16.msra.mxu0 0
        %611 = vmatpush.bf16.msra.mxu0 0
        %612 = vmatpush.bf16.msra.mxu0 0
        %613 = vmatpush.bf16.msra.mxu0 %v604
        %614 = vmatmul.bf16.gmra.mxu0 %v601
        %v615 = vpop.f32.mrf.mxu0
        %v616 = vadd.f32 0.0, %v615
        %v617 = vpop.f32.mrf.mxu0
        %618 = vdwg.mxu0
        %620 = vrot.lane.b32.xlu0 %v616, 16
        %v621 = vpop.permute.xlu0 %620
        %vm623 = vcmask 195712
        %624 = vst.msk [vmem:[#allocation2] sm:$0xff] %vm623, %v621
        %625 = vrot.lane.b32.xlu0 %v436, 104
        %v626 = vpop.permute.xlu0 %625
        %627 = vrot.lane.b32.xlu0 %v436, 72
        %v628 = vpop.permute.xlu0 %627
        %v630 = vsel %vm440, %v626, 0
        %v633 = vsel %vm440, %v628, 0
        %635 = vmatpush.bf16.xpose.msra.mxu0 0
        %636 = vmatpush.bf16.xpose.msra.mxu0 0
        %637 = vmatpush.bf16.xpose.msra.mxu0 0
        %638 = vmatpush.bf16.xpose.msra.mxu0 0
        %639 = vmatpush.bf16.xpose.msra.mxu0 0
        %640 = vmatpush.bf16.xpose.msra.mxu0 0
        %641 = vmatpush.bf16.xpose.msra.mxu0 0
        %642 = vmatpush.bf16.xpose.msra.mxu0 %v633
        %643 = vmatmul.bf16.gmra.mxu0 %v630
        %v644 = vpop.f32.mrf.mxu0
        %v645 = vadd.f32 0.0, %v644
        %v646 = vpop.f32.mrf.mxu0
        %647 = vdwg.mxu0
        %v648 = vmul.f32 %v645, 0.35355338
        %v649 = vadd.f32 %v648, %v435
        %v650 = vsel %vm440, %v649, -inf
        %651 = vmax.xlane.f32.xlu0 %v650
        %v652 = vpop.xlane.xlu0 %651
        %v653 = vsub.f32 %v649, %v652
        %v654 = vmul.f32 %v653, 1.442695
        %v655 = vpow.pop %v654
        %v656 = vsel %vm440, %v655, 0.0
        %657 = vadd.xlane.f32.xlu0 %v656
        %v658 = vpop.xlane.xlu0 %657
        %v659 = vrcp.pop %v658
        %v660 = vmul.f32 %v655, %v659
        %v661 = vpack.c.bf16 %v660, %v660
        %662 = vrot.lane.b32.xlu0 %v436, 40
        %v663 = vpop.permute.xlu0 %662
        %v665 = vsel %vm440, %v661, 0
        %v668 = vsel %vm479, %v663, 0
        %670 = vmatpush.bf16.msra.mxu0 0
        %671 = vmatpush.bf16.msra.mxu0 0
        %672 = vmatpush.bf16.msra.mxu0 0
        %673 = vmatpush.bf16.msra.mxu0 0
        %674 = vmatpush.bf16.msra.mxu0 0
        %675 = vmatpush.bf16.msra.mxu0 0
        %676 = vmatpush.bf16.msra.mxu0 0
        %677 = vmatpush.bf16.msra.mxu0 %v668
        %678 = vmatmul.bf16.gmra.mxu0 %v665
        %v679 = vpop.f32.mrf.mxu0
        %v680 = vadd.f32 0.0, %v679
        %v681 = vpop.f32.mrf.mxu0
        %682 = vdwg.mxu0
        %684 = vrot.lane.b32.xlu0 %v680, 24
        %v685 = vpop.permute.xlu0 %684
        %vm687 = vcmask 261312
        %688 = vst.msk [vmem:[#allocation2] sm:$0xff] %vm687, %v685
        %v689 = vld [vmem:[#allocation2] sm:$0xff]
        %v690 = vpack.c.bf16 %v689, %v689
        %v691 = vld [vmem:[#allocation7] sm:$0xf]
        %v692 = vld [vmem:[#allocation7 + $0x4] sm:$0xf]
        %v693 = vld [vmem:[#allocation7 + $0x8] sm:$0xf]
        %v694 = vld [vmem:[#allocation7 + $0xc] sm:$0xf]
        %v695 = vld [vmem:[#allocation8] sm:$0x1]
        %v697 = vperm.slane %v695, 0
        %v703 = vunpack.c.l.b16 %v691
        %v704 = vunpack.c.l.b16 %v692
        %v705 = vunpack.c.l.b16 %v693
        %v706 = vunpack.c.l.b16 %v694
        %v707 = vpack.c.b16 %v704, %v703
        %v708 = vpack.c.b16 %v706, %v705
        %v712 = vsel %vm416, %v690, 0
        %714 = vmatpush.bf16.msra.mxu0 0
        %715 = vmatpush.bf16.msra.mxu0 0
        %716 = vmatpush.bf16.msra.mxu0 0
        %717 = vmatpush.bf16.msra.mxu0 0
        %718 = vmatpush.bf16.msra.mxu0 0
        %719 = vmatpush.bf16.msra.mxu0 0
        %720 = vmatpush.bf16.msra.mxu0 %v708
        %721 = vmatpush.bf16.msra.mxu0 %v707
        %722 = vmatmul.bf16.gmra.mxu0 %v712
        %v723 = vpop.f32.mrf.mxu0
        %v724 = vadd.f32 %v697, %v723
        %v725 = vpop.f32.mrf.mxu0
        %726 = vdwg.mxu0
        %v727 = vadd.f32 %v394, %v724
        %v728 = vsel %vm416, %v727, 0.0
        %729 = vadd.xlane.f32.xlu0 %v728
        %v730 = vpop.xlane.xlu0 %729
        %v731 = vrcp.pop 32.0
        %v732 = vmul.f32 32.0, %v731
        %v733 = vsub.f32 1.0, %v732
        %v734 = vmul.f32 %v731, %v733
        %v735 = vadd.f32 %v731, %v734
        %vm736 = vweird.f32 %v731
        %v737 = vsel %vm736, %v731, %v735
        %v738 = vmul.f32 %v730, %v737
        %v739 = vsub.f32 %v727, %v738
        %v740 = vmul.f32 %v739, %v739
        %v741 = vsel %vm416, %v740, 0.0
        %742 = vadd.xlane.f32.xlu0 %v741
        %v743 = vpop.xlane.xlu0 %742
        %v744 = vmul.f32 %v743, %v737
        %v745 = vadd.f32 %v744, 1e-05
        %v746 = vrsqrt.pop %v745
        %v747 = vmul.f32 %v746, %v745
        %v748 = vmul.f32 %v747, %v746
        %v749 = vmul.f32 0.5, %v748
        %v750 = vsub.f32 1.5, %v749
        %v751 = vmul.f32 %v746, %v750
        %vm752 = vweird.f32 %v745
        %vm753 = vweird.f32 %v746
        %vm754 = vmor %vm752, %vm753
        %v755 = vsel %vm754, %v746, %v751
        %v756 = vmul.f32 %v739, %v755
        %v757 = vld [vmem:[#allocation10] sm:$0x1]
        %v759 = vperm.slane %v757, 0
        %v761 = vmul.f32 %v756, %v759
        %v762 = vld [vmem:[#allocation11] sm:$0x1]
        %v764 = vperm.slane %v762, 0
        %v766 = vadd.f32 %v761, %v764
        %767 = vst.msk [vmem:[%s392] sm:$0xff] %vm416, %v766
        %p768 = scmp.lt.s32.totalorder %s23, 1
        %s769 = scalar_select %p768, %s23, 1
        %s770 = smul.addr %s769, 8
        %s771 = scalar_lea.vmem %s8, %s770
        // Predicated region
        $region77: #{trans_layer_forward.4} parent=51 // pred_check
          %p772 = pneg %p214
        $region78: #{trans_layer_forward.4} parent=51 // pred_check_branch
          %774 = sbr.rel (%p772) target = $region80
        $region79: #{trans_layer_forward.4} parent=51 // pred_region
          _
        $region80: #{trans_layer_forward.4} parent=51 // pred_fallthru
          _
      $region52: #{trans_layer_forward.4} parent=5 // pred_fallthru
        _
      %p775 = scmp.le.s32.totalorder 2, %s18
      // Predicated region
      $region81: #{trans_layer_forward.4} parent=5 // pred_check
        %p776 = pneg %p775
      $region82: #{trans_layer_forward.4} parent=5 // pred_check_branch
        %778 = sbr.rel (%p776) target = $region84
      $region83: #{trans_layer_forward.4} parent=5 // pred_region
        %s779 = ssub.s32 %s18, 2
        // Predicated region
        $region85: #{trans_layer_forward.4} parent=83 // pred_check
          %p780 = pneg %p220
        $region86: #{trans_layer_forward.4} parent=83 // pred_check_branch
          %782 = sbr.rel (%p780) target = $region88
        $region87: #{trans_layer_forward.4} parent=83 // pred_region
          %p783 = scmp.lt.s32.totalorder %s24, 1
          %s784 = scalar_select %p783, %s24, 1
          %s785 = smul.addr %s784, 8
          %s786 = scalar_lea.vmem %s8, %s785
        $region88: #{trans_layer_forward.4} parent=83 // pred_fallthru
          _
      $region84: #{trans_layer_forward.4} parent=5 // pred_fallthru
        _
    $region6: #{trans_layer_forward.4} parent=1 // loop_footer
      %s22 = sadd.s32 1, %s18
    $region7: #{trans_layer_forward.4} parent=1 // loop_footer_branch
      %17 = sbr.rel target = $region3
    $region8: #{trans_layer_forward.4} parent=1 // loop_exit
      _
    %787 = vsyncpa [#allocation4], 1
    %s788 = scalar_lea.sflag [#allocation4], 1
    %789 = vsyncpa %s788, 1
    %790 = vsyncpa [#allocation6], 1
    %791 = vsyncpa [#allocation9], 1
    %792 = vsyncpa [#allocation12], 1

// kernel: trans_layer_forward.6
$region0: #{trans_layer_forward.6}
  #allocation0 [shape = 'u32[]', space=smem, size = 0x4, offset = 0x4, fixed_abs, tag = 'smem constant byte address 0x4 - core index']
  #allocation1 [shape = 'u32[72,128]{1,0:T(1,128)}', space=vmem, size = 0x9000, scoped, tag = 'internal scratch']
  #allocation2 [shape = 'f32[8,32]{1,0:T(8,128)}', space=vmem, size = 0x1000, scoped, tag = 'scratch operand']
  %s0 = inlined_call_operand.vmem [shape: f32[2,8,32], index: 0, kind: input, shape index: {}, may-alias: {0,8}]
  %s1 = inlined_call_operand.vmem [shape: s32[8,8], index: 1, kind: input, shape index: {}]
  %s2 = inlined_call_operand.vmem [shape: bf16[32,96], index: 2, kind: input, shape index: {}]
  %s3 = inlined_call_operand.hbm [shape: f32[1,96], index: 3, kind: input, shape index: {}]
  %s4 = inlined_call_operand.vmem [shape: bf16[32,32], index: 4, kind: input, shape index: {}]
  %s5 = inlined_call_operand.hbm [shape: f32[1,32], index: 5, kind: input, shape index: {}]
  %s6 = inlined_call_operand.hbm [shape: f32[1,32], index: 6, kind: input, shape index: {}]
  %s7 = inlined_call_operand.hbm [shape: f32[1,32], index: 7, kind: input, shape index: {}]
  %s8 = inlined_call_operand.vmem [shape: f32[2,8,32], index: 8, kind: output, shape index: {}, may-alias: {0,8}]
  %s9 = sld [smem:[#allocation0]]
  $region81: #{trans_layer_forward.6} parent=0
    _
  %s11 = ssub.s32 1, %s9
  %s12 = scalar_select 0, %s11, %s9
  $region1: #{trans_layer_forward.6} parent=0
    #allocation3 [shape = 'u8[512]{0}', space=vmem, size = 0x400, scoped, tag = 'input window, operand 3, single buffered']
    #allocation4 [shape = 's32[2]{0}', space=sflag, size = 0x8, scoped, tag = 'scoped memory for trans_layer_forward.6']
    #allocation5 [shape = 'u8[512]{0}', space=vmem, size = 0x400, scoped, tag = 'input window, operand 5, single buffered']
    #allocation6 [shape = 's32[1]{0}', space=sflag, size = 0x4, scoped, tag = 'scoped memory for trans_layer_forward.6']
    #allocation7 [shape = 'u8[512]{0}', space=vmem, size = 0x400, scoped, tag = 'input window, operand 6, single buffered']
    #allocation8 [shape = 'u8[512]{0}', space=vmem, size = 0x400, scoped, tag = 'input window, operand 7, single buffered']
    #allocation9 [shape = 's32[1]{0}', space=sflag, size = 0x4, scoped, tag = 'scoped memory for trans_layer_forward.6']
    %13 = vsyncpa [#allocation4], 0
    %14 = vsyncpa [#allocation6], 0
    %15 = vsyncpa [#allocation9], 0
    loop: start=0, step=1, limit=4
    $region2: #{trans_layer_forward.6} parent=1 // loop_pre_header
      _
    $region3: #{trans_layer_forward.6} parent=1 // loop_header
      %s17 = sphi 0, %s21
      %p18 = scmp.ge.s32.totalorder %s17, 4
      %s27 = sphi 0, %s29
      %s30 = sphi 0, %s27
      %s31 = sphi 0, %s30
      %s47 = sphi 0, %s31
      %s51 = sphi 0, %s51
      %s53 = sphi 0, %s51
      %s54 = sphi 0, %s53
      %s68 = sphi 0, %s54
      %s72 = sphi 0, %s72
      %s74 = sphi 0, %s72
      %s75 = sphi 0, %s74
      %s89 = sphi 0, %s75
      %s93 = sphi 0, %s93
      %s95 = sphi 0, %s93
      %s96 = sphi 0, %s95
      %s110 = sphi 0, %s96
      %s114 = sphi 0, %s114
      %s116 = sphi 0, %s114
      %s117 = sphi 0, %s116
      %s131 = sphi 0, %s117
      %s135 = sphi 0, %s135
      %s137 = sphi 0, %s135
      %s138 = sphi 0, %s137
      %s152 = sphi 0, %s138
      %s156 = sphi 0, %s156
      %s158 = sphi 0, %s156
      %s159 = sphi 0, %s158
      %s173 = sphi 0, %s159
      %s177 = sphi 0, %s177
      %s179 = sphi 0, %s177
      %s180 = sphi 0, %s179
      %s194 = sphi 0, %s180
      %s200 = sphi 0, %s202
      %s203 = sphi 0, %s200
      %s204 = sphi 0, %s203
      %s220 = sphi 0, %s204
    $region4: #{trans_layer_forward.6} parent=1 // loop_header_branch
      %20 = sbr.rel (%p18) target = $region8
    $region5: #{trans_layer_forward.6} parent=1 // loop_body
      %s22 = ssub.s32 %s17, 1
      %s23 = ssub.s32 %s17, 2
      %s24 = sadd.s32 %s17, 1
      %s25 = ssub.s32 %s17, %s24
      %p26 = scmp.eq.s32.totalorder %s25, 0
      %s28 = sadd.s32 %s27, 1
      %s29 = scalar_select %p26, %s27, %s28
      %p32 = pneg %p26
      %p33 = scmp.eq.s32.totalorder %s17, 1
      %p34 = por %p32, %p33
      %p35 = scmp.ne.s32.totalorder %s27, %s30
      %p36 = scmp.eq.s32.totalorder %s17, 0
      %p37 = por %p35, %p36
      %p38 = scmp.ne.s32.totalorder %s27, %s30
      %p39 = scmp.eq.s32.totalorder %s22, 1
      %p40 = por %p38, %p39
      %p41 = scmp.ne.s32.totalorder %s30, %s31
      %p42 = scmp.eq.s32.totalorder %s22, 0
      %p43 = por %p41, %p42
      %p44 = scmp.ne.s32.totalorder %s30, %s31
      %p45 = scmp.eq.s32.totalorder %s23, 1
      %p46 = por %p44, %p45
      %p48 = scmp.ne.s32.totalorder %s31, %s47
      %p49 = scmp.eq.s32.totalorder %s23, 0
      %p50 = por %p48, %p49
      %s52 = sadd.s32 %s51, 1
      %p55 = scmp.eq.s32.totalorder %s17, 1
      %p56 = scmp.ne.s32.totalorder %s51, %s53
      %p57 = scmp.eq.s32.totalorder %s17, 0
      %p58 = por %p56, %p57
      %p59 = scmp.ne.s32.totalorder %s51, %s53
      %p60 = scmp.eq.s32.totalorder %s22, 1
      %p61 = por %p59, %p60
      %p62 = scmp.ne.s32.totalorder %s53, %s54
      %p63 = scmp.eq.s32.totalorder %s22, 0
      %p64 = por %p62, %p63
      %p65 = scmp.ne.s32.totalorder %s53, %s54
      %p66 = scmp.eq.s32.totalorder %s23, 1
      %p67 = por %p65, %p66
      %p69 = scmp.ne.s32.totalorder %s54, %s68
      %p70 = scmp.eq.s32.totalorder %s23, 0
      %p71 = por %p69, %p70
      %s73 = sadd.s32 %s72, 1
      %p76 = scmp.eq.s32.totalorder %s17, 1
      %p77 = scmp.ne.s32.totalorder %s72, %s74
      %p78 = scmp.eq.s32.totalorder %s17, 0
      %p79 = por %p77, %p78
      %p80 = scmp.ne.s32.totalorder %s72, %s74
      %p81 = scmp.eq.s32.totalorder %s22, 1
      %p82 = por %p80, %p81
      %p83 = scmp.ne.s32.totalorder %s74, %s75
      %p84 = scmp.eq.s32.totalorder %s22, 0
      %p85 = por %p83, %p84
      %p86 = scmp.ne.s32.totalorder %s74, %s75
      %p87 = scmp.eq.s32.totalorder %s23, 1
      %p88 = por %p86, %p87
      %p90 = scmp.ne.s32.totalorder %s75, %s89
      %p91 = scmp.eq.s32.totalorder %s23, 0
      %p92 = por %p90, %p91
      %s94 = sadd.s32 %s93, 1
      %p97 = scmp.eq.s32.totalorder %s17, 1
      %p98 = scmp.ne.s32.totalorder %s93, %s95
      %p99 = scmp.eq.s32.totalorder %s17, 0
      %p100 = por %p98, %p99
      %p101 = scmp.ne.s32.totalorder %s93, %s95
      %p102 = scmp.eq.s32.totalorder %s22, 1
      %p103 = por %p101, %p102
      %p104 = scmp.ne.s32.totalorder %s95, %s96
      %p105 = scmp.eq.s32.totalorder %s22, 0
      %p106 = por %p104, %p105
      %p107 = scmp.ne.s32.totalorder %s95, %s96
      %p108 = scmp.eq.s32.totalorder %s23, 1
      %p109 = por %p107, %p108
      %p111 = scmp.ne.s32.totalorder %s96, %s110
      %p112 = scmp.eq.s32.totalorder %s23, 0
      %p113 = por %p111, %p112
      %s115 = sadd.s32 %s114, 1
      %p118 = scmp.eq.s32.totalorder %s17, 1
      %p119 = scmp.ne.s32.totalorder %s114, %s116
      %p120 = scmp.eq.s32.totalorder %s17, 0
      %p121 = por %p119, %p120
      %p122 = scmp.ne.s32.totalorder %s114, %s116
      %p123 = scmp.eq.s32.totalorder %s22, 1
      %p124 = por %p122, %p123
      %p125 = scmp.ne.s32.totalorder %s116, %s117
      %p126 = scmp.eq.s32.totalorder %s22, 0
      %p127 = por %p125, %p126
      %p128 = scmp.ne.s32.totalorder %s116, %s117
      %p129 = scmp.eq.s32.totalorder %s23, 1
      %p130 = por %p128, %p129
      %p132 = scmp.ne.s32.totalorder %s117, %s131
      %p133 = scmp.eq.s32.totalorder %s23, 0
      %p134 = por %p132, %p133
      %s136 = sadd.s32 %s135, 1
      %p139 = scmp.eq.s32.totalorder %s17, 1
      %p140 = scmp.ne.s32.totalorder %s135, %s137
      %p141 = scmp.eq.s32.totalorder %s17, 0
      %p142 = por %p140, %p141
      %p143 = scmp.ne.s32.totalorder %s135, %s137
      %p144 = scmp.eq.s32.totalorder %s22, 1
      %p145 = por %p143, %p144
      %p146 = scmp.ne.s32.totalorder %s137, %s138
      %p147 = scmp.eq.s32.totalorder %s22, 0
      %p148 = por %p146, %p147
      %p149 = scmp.ne.s32.totalorder %s137, %s138
      %p150 = scmp.eq.s32.totalorder %s23, 1
      %p151 = por %p149, %p150
      %p153 = scmp.ne.s32.totalorder %s138, %s152
      %p154 = scmp.eq.s32.totalorder %s23, 0
      %p155 = por %p153, %p154
      %s157 = sadd.s32 %s156, 1
      %p160 = scmp.eq.s32.totalorder %s17, 1
      %p161 = scmp.ne.s32.totalorder %s156, %s158
      %p162 = scmp.eq.s32.totalorder %s17, 0
      %p163 = por %p161, %p162
      %p164 = scmp.ne.s32.totalorder %s156, %s158
      %p165 = scmp.eq.s32.totalorder %s22, 1
      %p166 = por %p164, %p165
      %p167 = scmp.ne.s32.totalorder %s158, %s159
      %p168 = scmp.eq.s32.totalorder %s22, 0
      %p169 = por %p167, %p168
      %p170 = scmp.ne.s32.totalorder %s158, %s159
      %p171 = scmp.eq.s32.totalorder %s23, 1
      %p172 = por %p170, %p171
      %p174 = scmp.ne.s32.totalorder %s159, %s173
      %p175 = scmp.eq.s32.totalorder %s23, 0
      %p176 = por %p174, %p175
      %s178 = sadd.s32 %s177, 1
      %p181 = scmp.eq.s32.totalorder %s17, 1
      %p182 = scmp.ne.s32.totalorder %s177, %s179
      %p183 = scmp.eq.s32.totalorder %s17, 0
      %p184 = por %p182, %p183
      %p185 = scmp.ne.s32.totalorder %s177, %s179
      %p186 = scmp.eq.s32.totalorder %s22, 1
      %p187 = por %p185, %p186
      %p188 = scmp.ne.s32.totalorder %s179, %s180
      %p189 = scmp.eq.s32.totalorder %s22, 0
      %p190 = por %p188, %p189
      %p191 = scmp.ne.s32.totalorder %s179, %s180
      %p192 = scmp.eq.s32.totalorder %s23, 1
      %p193 = por %p191, %p192
      %p195 = scmp.ne.s32.totalorder %s180, %s194
      %p196 = scmp.eq.s32.totalorder %s23, 0
      %p197 = por %p195, %p196
      %s198 = ssub.s32 %s17, %s24
      %p199 = scmp.eq.s32.totalorder %s198, 0
      %s201 = sadd.s32 %s200, 1
      %s202 = scalar_select %p199, %s200, %s201
      %p205 = pneg %p199
      %p206 = scmp.eq.s32.totalorder %s17, 1
      %p207 = por %p205, %p206
      %p208 = scmp.ne.s32.totalorder %s200, %s203
      %p209 = scmp.eq.s32.totalorder %s17, 0
      %p210 = por %p208, %p209
      %p211 = scmp.ne.s32.totalorder %s200, %s203
      %p212 = scmp.eq.s32.totalorder %s22, 1
      %p213 = por %p211, %p212
      %p214 = scmp.ne.s32.totalorder %s203, %s204
      %p215 = scmp.eq.s32.totalorder %s22, 0
      %p216 = por %p214, %p215
      %p217 = scmp.ne.s32.totalorder %s203, %s204
      %p218 = scmp.eq.s32.totalorder %s23, 1
      %p219 = por %p217, %p218
      %p221 = scmp.ne.s32.totalorder %s204, %s220
      %p222 = scmp.eq.s32.totalorder %s23, 0
      %p223 = por %p221, %p222
      %p224 = scmp.le.s32.totalorder 1, %s17
      %p225 = scmp.lt.s32.totalorder %s17, 3
      %p226 = pnand %p224, %p225
      %p227 = pneg %p226
      // Predicated region
      $region9: #{trans_layer_forward.6} parent=5 // pred_check
        _
      $region10: #{trans_layer_forward.6} parent=5 // pred_check_branch
        %229 = sbr.rel (%p226) target = $region12
      $region11: #{trans_layer_forward.6} parent=5 // pred_region
        %s230 = ssub.s32 %s17, 1
        // Predicated region
        $region13: #{trans_layer_forward.6} parent=11 // pred_check
          %p231 = pneg %p64
        $region14: #{trans_layer_forward.6} parent=11 // pred_check_branch
          %233 = sbr.rel (%p231) target = $region16
        $region15: #{trans_layer_forward.6} parent=11 // pred_region
          _
        $region16: #{trans_layer_forward.6} parent=11 // pred_fallthru
          _
        // Predicated region
        $region17: #{trans_layer_forward.6} parent=11 // pred_check
          %p234 = pneg %p85
        $region18: #{trans_layer_forward.6} parent=11 // pred_check_branch
          %236 = sbr.rel (%p234) target = $region20
        $region19: #{trans_layer_forward.6} parent=11 // pred_region
          _
        $region20: #{trans_layer_forward.6} parent=11 // pred_fallthru
          _
        // Predicated region
        $region21: #{trans_layer_forward.6} parent=11 // pred_check
          %p237 = pneg %p106
        $region22: #{trans_layer_forward.6} parent=11 // pred_check_branch
          %239 = sbr.rel (%p237) target = $region24
        $region23: #{trans_layer_forward.6} parent=11 // pred_region
          %241 = vsyncadd [#allocation4], 0
          %s243 = sshll.u32 %s3, 4
          %s244 = int_to_ptr.hbm [resolvable:$true] %s243
          %s245 = sshll.u32 [#allocation3], 4
          %s246 = int_to_ptr.vmem [resolvable:$true] %s245
          %248 = dma.hbm_to_vmem [thread:$0]  %s244, 16, %s246, [#allocation4]
        $region24: #{trans_layer_forward.6} parent=11 // pred_fallthru
          _
        // Predicated region
        $region25: #{trans_layer_forward.6} parent=11 // pred_check
          %p249 = pneg %p127
        $region26: #{trans_layer_forward.6} parent=11 // pred_check_branch
          %251 = sbr.rel (%p249) target = $region28
        $region27: #{trans_layer_forward.6} parent=11 // pred_region
          _
        $region28: #{trans_layer_forward.6} parent=11 // pred_fallthru
          _
        // Predicated region
        $region29: #{trans_layer_forward.6} parent=11 // pred_check
          %p252 = pneg %p148
        $region30: #{trans_layer_forward.6} parent=11 // pred_check_branch
          %254 = sbr.rel (%p252) target = $region32
        $region31: #{trans_layer_forward.6} parent=11 // pred_region
          %256 = vsyncadd [#allocation6], 0
          %s258 = sshll.u32 %s5, 4
          %s259 = int_to_ptr.hbm [resolvable:$true] %s258
          %s260 = sshll.u32 [#allocation5], 4
          %s261 = int_to_ptr.vmem [resolvable:$true] %s260
          %263 = dma.hbm_to_vmem [thread:$0]  %s259, 16, %s261, [#allocation6]
        $region32: #{trans_layer_forward.6} parent=11 // pred_fallthru
          _
        // Predicated region
        $region33: #{trans_layer_forward.6} parent=11 // pred_check
          %p264 = pneg %p169
        $region34: #{trans_layer_forward.6} parent=11 // pred_check_branch
          %266 = sbr.rel (%p264) target = $region36
        $region35: #{trans_layer_forward.6} parent=11 // pred_region
          %268 = vsyncadd [#allocation6], 0
          %s270 = sshll.u32 %s6, 4
          %s271 = int_to_ptr.hbm [resolvable:$true] %s270
          %s272 = sshll.u32 [#allocation7], 4
          %s273 = int_to_ptr.vmem [resolvable:$true] %s272
          %275 = dma.hbm_to_vmem [thread:$0]  %s271, 16, %s273, [#allocation6]
        $region36: #{trans_layer_forward.6} parent=11 // pred_fallthru
          _
        // Predicated region
        $region37: #{trans_layer_forward.6} parent=11 // pred_check
          %p276 = pneg %p190
        $region38: #{trans_layer_forward.6} parent=11 // pred_check_branch
          %278 = sbr.rel (%p276) target = $region40
        $region39: #{trans_layer_forward.6} parent=11 // pred_region
          %280 = vsyncadd [#allocation9], 0
          %s282 = sshll.u32 %s7, 4
          %s283 = int_to_ptr.hbm [resolvable:$true] %s282
          %s284 = sshll.u32 [#allocation8], 4
          %s285 = int_to_ptr.vmem [resolvable:$true] %s284
          %287 = dma.hbm_to_vmem [thread:$0]  %s283, 16, %s285, [#allocation9]
        $region40: #{trans_layer_forward.6} parent=11 // pred_fallthru
          _
      $region12: #{trans_layer_forward.6} parent=5 // pred_fallthru
        _
      %p288 = scmp.lt.s32.totalorder %s17, 2
      // Predicated region
      $region41: #{trans_layer_forward.6} parent=5 // pred_check
        %p289 = pneg %p288
      $region42: #{trans_layer_forward.6} parent=5 // pred_check_branch
        %291 = sbr.rel (%p289) target = $region44
      $region43: #{trans_layer_forward.6} parent=5 // pred_region
        // Predicated region
        $region45: #{trans_layer_forward.6} parent=43 // pred_check
          %p292 = pneg %p37
        $region46: #{trans_layer_forward.6} parent=43 // pred_check_branch
          %294 = sbr.rel (%p292) target = $region48
        $region47: #{trans_layer_forward.6} parent=43 // pred_region
          %p295 = scmp.lt.s32.totalorder %s17, 1
          %s296 = scalar_select %p295, %s17, 1
          %s297 = smul.addr %s296, 8
          %s298 = scalar_lea.vmem %s0, %s297
        $region48: #{trans_layer_forward.6} parent=43 // pred_fallthru
          _
      $region44: #{trans_layer_forward.6} parent=5 // pred_fallthru
        _
      %p299 = scmp.le.s32.totalorder 1, %s17
      %p300 = scmp.lt.s32.totalorder %s17, 3
      %p301 = pnand %p299, %p300
      %p302 = pneg %p301
      // Predicated region
      $region49: #{trans_layer_forward.6} parent=5 // pred_check
        _
      $region50: #{trans_layer_forward.6} parent=5 // pred_check_branch
        %304 = sbr.rel (%p301) target = $region52
      $region51: #{trans_layer_forward.6} parent=5 // pred_region
        %s305 = ssub.s32 %s17, 1
        // Predicated region
        $region53: #{trans_layer_forward.6} parent=51 // pred_check
          %p306 = pneg %p106
        $region54: #{trans_layer_forward.6} parent=51 // pred_check_branch
          %308 = sbr.rel (%p306) target = $region56
        $region55: #{trans_layer_forward.6} parent=51 // pred_region
          %310 = dma.done [#allocation4], 16
        $region56: #{trans_layer_forward.6} parent=51 // pred_fallthru
          _
        // Predicated region
        $region57: #{trans_layer_forward.6} parent=51 // pred_check
          %p311 = pneg %p148
        $region58: #{trans_layer_forward.6} parent=51 // pred_check_branch
          %313 = sbr.rel (%p311) target = $region60
        $region59: #{trans_layer_forward.6} parent=51 // pred_region
          %315 = dma.done [#allocation6], 16
        $region60: #{trans_layer_forward.6} parent=51 // pred_fallthru
          _
        // Predicated region
        $region61: #{trans_layer_forward.6} parent=51 // pred_check
          %p316 = pneg %p169
        $region62: #{trans_layer_forward.6} parent=51 // pred_check_branch
          %318 = sbr.rel (%p316) target = $region64
        $region63: #{trans_layer_forward.6} parent=51 // pred_region
          %320 = dma.done [#allocation6], 16
        $region64: #{trans_layer_forward.6} parent=51 // pred_fallthru
          _
        // Predicated region
        $region65: #{trans_layer_forward.6} parent=51 // pred_check
          %p321 = pneg %p190
        $region66: #{trans_layer_forward.6} parent=51 // pred_check_branch
          %323 = sbr.rel (%p321) target = $region68
        $region67: #{trans_layer_forward.6} parent=51 // pred_region
          %325 = dma.done [#allocation9], 16
        $region68: #{trans_layer_forward.6} parent=51 // pred_fallthru
          _
        %p326 = scmp.lt.s32.totalorder %s22, 1
        %s327 = scalar_select %p326, %s22, 1
        %s328 = smul.addr %s327, 8
        %s329 = scalar_lea.vmem %s0, %s328
        %p330 = pneg %p43
        %p331 = pneg %p40
        %p332 = pneg %p64
        %p333 = pneg %p61
        %p334 = pneg %p85
        %p335 = pneg %p82
        %p336 = pneg %p106
        %p337 = pneg %p103
        %p338 = pneg %p127
        %p339 = pneg %p124
        %p340 = pneg %p148
        %p341 = pneg %p145
        %p342 = pneg %p169
        %p343 = pneg %p166
        %p344 = pneg %p190
        %p345 = pneg %p187
        %p346 = pneg %p216
        %p347 = pneg %p213
        %p348 = scmp.lt.s32.totalorder %s22, 1
        %s349 = scalar_select %p348, %s22, 1
        %s350 = smul.addr %s349, 8
        %s351 = scalar_lea.vmem %s8, %s350
        %p352 = scmp.lt.s32.totalorder %s22, 1
        %s353 = scalar_select %p352, %s22, 1
        %s354 = smul.addr %s353, 8
        %s355 = scalar_lea.vmem %s0, %s354
        %p356 = scmp.lt.s32.totalorder %s22, 1
        %s357 = scalar_select %p356, %s22, 1
        %s358 = smul.addr %s357, 8
        %s359 = scalar_lea.vmem %s8, %s358
        %v361 = vld [vmem:[%s355] sm:$0xff]
        %v362 = vpack.c.bf16 %v361, %v361
        %v363 = vld [vmem:[%s2] sm:$0xf]
        %v364 = vld [vmem:[%s2 + $0x4] sm:$0xf]
        %v365 = vld [vmem:[%s2 + $0x8] sm:$0xf]
        %v366 = vld [vmem:[%s2 + $0xc] sm:$0xf]
        %v367 = vld [vmem:[#allocation3] sm:$0x1]
        %v369 = vperm.slane %v367, 0
        %v375 = vunpack.c.l.b16 %v363
        %v376 = vunpack.c.l.b16 %v364
        %v377 = vunpack.c.l.b16 %v365
        %v378 = vunpack.c.l.b16 %v366
        %v379 = vpack.c.b16 %v376, %v375
        %v380 = vpack.c.b16 %v378, %v377
        %vm383 = vcmask 261120
        %v385 = vsel %vm383, %v362, 0
        %387 = vmatpush.bf16.msra.mxu0 0
        %388 = vmatpush.bf16.msra.mxu0 0
        %389 = vmatpush.bf16.msra.mxu0 0
        %390 = vmatpush.bf16.msra.mxu0 0
        %391 = vmatpush.bf16.msra.mxu0 0
        %392 = vmatpush.bf16.msra.mxu0 0
        %393 = vmatpush.bf16.msra.mxu0 %v380
        %394 = vmatpush.bf16.msra.mxu0 %v379
        %395 = vmatmul.bf16.gmra.mxu0 %v385
        %v396 = vpop.f32.mrf.mxu0
        %v397 = vadd.f32 %v369, %v396
        %v398 = vpop.f32.mrf.mxu0
        %399 = vdwg.mxu0
        %v400 = vld [vmem:[%s1] sm:$0xff]
        %vm401 = vcmp.eq.s32.totalorder %v400, 1
        %v402 = vsel %vm401, -1e+30, 0.0
        %v403 = vpack.c.bf16 %v397, %v397
        %405 = vrot.lane.b32.xlu0 %v403, 96
        %v406 = vpop.permute.xlu0 %405
        %vm407 = vcmask 64512
        %v409 = vsel %vm407, %v403, 0
        %v412 = vsel %vm407, %v406, 0
        %414 = vmatpush.bf16.xpose.msra.mxu0 0
        %415 = vmatpush.bf16.xpose.msra.mxu0 0
        %416 = vmatpush.bf16.xpose.msra.mxu0 0
        %417 = vmatpush.bf16.xpose.msra.mxu0 0
        %418 = vmatpush.bf16.xpose.msra.mxu0 0
        %419 = vmatpush.bf16.xpose.msra.mxu0 0
        %420 = vmatpush.bf16.xpose.msra.mxu0 0
        %421 = vmatpush.bf16.xpose.msra.mxu0 %v412
        %422 = vmatmul.bf16.gmra.mxu0 %v409
        %v423 = vpop.f32.mrf.mxu0
        %v424 = vadd.f32 0.0, %v423
        %v425 = vpop.f32.mrf.mxu0
        %426 = vdwg.mxu0
        %v427 = vmul.f32 %v424, 0.35355338
        %v428 = vadd.f32 %v427, %v402
        %v429 = vsel %vm407, %v428, -inf
        %430 = vmax.xlane.f32.xlu0 %v429
        %v431 = vpop.xlane.xlu0 %430
        %v432 = vsub.f32 %v428, %v431
        %v433 = vmul.f32 %v432, 1.442695
        %v434 = vpow.pop %v433
        %v435 = vsel %vm407, %v434, 0.0
        %436 = vadd.xlane.f32.xlu0 %v435
        %v437 = vpop.xlane.xlu0 %436
        %v438 = vrcp.pop %v437
        %v439 = vmul.f32 %v434, %v438
        %v440 = vpack.c.bf16 %v439, %v439
        %441 = vrot.lane.b32.xlu0 %v403, 64
        %v442 = vpop.permute.xlu0 %441
        %v444 = vsel %vm407, %v440, 0
        %vm446 = vcmask 1043456
        %v448 = vsel %vm446, %v442, 0
        %450 = vmatpush.bf16.msra.mxu0 0
        %451 = vmatpush.bf16.msra.mxu0 0
        %452 = vmatpush.bf16.msra.mxu0 0
        %453 = vmatpush.bf16.msra.mxu0 0
        %454 = vmatpush.bf16.msra.mxu0 0
        %455 = vmatpush.bf16.msra.mxu0 0
        %456 = vmatpush.bf16.msra.mxu0 0
        %457 = vmatpush.bf16.msra.mxu0 %v448
        %458 = vmatmul.bf16.gmra.mxu0 %v444
        %v459 = vpop.f32.mrf.mxu0
        %v460 = vadd.f32 0.0, %v459
        %v461 = vpop.f32.mrf.mxu0
        %462 = vdwg.mxu0
        %463 = vst.msk [vmem:[#allocation2] sm:$0xff] %vm407, %v460
        %464 = vrot.lane.b32.xlu0 %v403, 120
        %v465 = vpop.permute.xlu0 %464
        %466 = vrot.lane.b32.xlu0 %v403, 88
        %v467 = vpop.permute.xlu0 %466
        %v469 = vsel %vm407, %v465, 0
        %v472 = vsel %vm407, %v467, 0
        %474 = vmatpush.bf16.xpose.msra.mxu0 0
        %475 = vmatpush.bf16.xpose.msra.mxu0 0
        %476 = vmatpush.bf16.xpose.msra.mxu0 0
        %477 = vmatpush.bf16.xpose.msra.mxu0 0
        %478 = vmatpush.bf16.xpose.msra.mxu0 0
        %479 = vmatpush.bf16.xpose.msra.mxu0 0
        %480 = vmatpush.bf16.xpose.msra.mxu0 0
        %481 = vmatpush.bf16.xpose.msra.mxu0 %v472
        %482 = vmatmul.bf16.gmra.mxu0 %v469
        %v483 = vpop.f32.mrf.mxu0
        %v484 = vadd.f32 0.0, %v483
        %v485 = vpop.f32.mrf.mxu0
        %486 = vdwg.mxu0
        %v487 = vmul.f32 %v484, 0.35355338
        %v488 = vadd.f32 %v487, %v402
        %v489 = vsel %vm407, %v488, -inf
        %490 = vmax.xlane.f32.xlu0 %v489
        %v491 = vpop.xlane.xlu0 %490
        %v492 = vsub.f32 %v488, %v491
        %v493 = vmul.f32 %v492, 1.442695
        %v494 = vpow.pop %v493
        %v495 = vsel %vm407, %v494, 0.0
        %496 = vadd.xlane.f32.xlu0 %v495
        %v497 = vpop.xlane.xlu0 %496
        %v498 = vrcp.pop %v497
        %v499 = vmul.f32 %v494, %v498
        %v500 = vpack.c.bf16 %v499, %v499
        %501 = vrot.lane.b32.xlu0 %v403, 56
        %v502 = vpop.permute.xlu0 %501
        %v504 = vsel %vm407, %v500, 0
        %v507 = vsel %vm446, %v502, 0
        %509 = vmatpush.bf16.msra.mxu0 0
        %510 = vmatpush.bf16.msra.mxu0 0
        %511 = vmatpush.bf16.msra.mxu0 0
        %512 = vmatpush.bf16.msra.mxu0 0
        %513 = vmatpush.bf16.msra.mxu0 0
        %514 = vmatpush.bf16.msra.mxu0 0
        %515 = vmatpush.bf16.msra.mxu0 0
        %516 = vmatpush.bf16.msra.mxu0 %v507
        %517 = vmatmul.bf16.gmra.mxu0 %v504
        %v518 = vpop.f32.mrf.mxu0
        %v519 = vadd.f32 0.0, %v518
        %v520 = vpop.f32.mrf.mxu0
        %521 = vdwg.mxu0
        %523 = vrot.lane.b32.xlu0 %v519, 8
        %v524 = vpop.permute.xlu0 %523
        %vm526 = vcmask 130112
        %527 = vst.msk [vmem:[#allocation2] sm:$0xff] %vm526, %v524
        %528 = vrot.lane.b32.xlu0 %v403, 112
        %v529 = vpop.permute.xlu0 %528
        %530 = vrot.lane.b32.xlu0 %v403, 80
        %v531 = vpop.permute.xlu0 %530
        %v533 = vsel %vm407, %v529, 0
        %v536 = vsel %vm407, %v531, 0
        %538 = vmatpush.bf16.xpose.msra.mxu0 0
        %539 = vmatpush.bf16.xpose.msra.mxu0 0
        %540 = vmatpush.bf16.xpose.msra.mxu0 0
        %541 = vmatpush.bf16.xpose.msra.mxu0 0
        %542 = vmatpush.bf16.xpose.msra.mxu0 0
        %543 = vmatpush.bf16.xpose.msra.mxu0 0
        %544 = vmatpush.bf16.xpose.msra.mxu0 0
        %545 = vmatpush.bf16.xpose.msra.mxu0 %v536
        %546 = vmatmul.bf16.gmra.mxu0 %v533
        %v547 = vpop.f32.mrf.mxu0
        %v548 = vadd.f32 0.0, %v547
        %v549 = vpop.f32.mrf.mxu0
        %550 = vdwg.mxu0
        %v551 = vmul.f32 %v548, 0.35355338
        %v552 = vadd.f32 %v551, %v402
        %v553 = vsel %vm407, %v552, -inf
        %554 = vmax.xlane.f32.xlu0 %v553
        %v555 = vpop.xlane.xlu0 %554
        %v556 = vsub.f32 %v552, %v555
        %v557 = vmul.f32 %v556, 1.442695
        %v558 = vpow.pop %v557
        %v559 = vsel %vm407, %v558, 0.0
        %560 = vadd.xlane.f32.xlu0 %v559
        %v561 = vpop.xlane.xlu0 %560
        %v562 = vrcp.pop %v561
        %v563 = vmul.f32 %v558, %v562
        %v564 = vpack.c.bf16 %v563, %v563
        %565 = vrot.lane.b32.xlu0 %v403, 48
        %v566 = vpop.permute.xlu0 %565
        %v568 = vsel %vm407, %v564, 0
        %v571 = vsel %vm446, %v566, 0
        %573 = vmatpush.bf16.msra.mxu0 0
        %574 = vmatpush.bf16.msra.mxu0 0
        %575 = vmatpush.bf16.msra.mxu0 0
        %576 = vmatpush.bf16.msra.mxu0 0
        %577 = vmatpush.bf16.msra.mxu0 0
        %578 = vmatpush.bf16.msra.mxu0 0
        %579 = vmatpush.bf16.msra.mxu0 0
        %580 = vmatpush.bf16.msra.mxu0 %v571
        %581 = vmatmul.bf16.gmra.mxu0 %v568
        %v582 = vpop.f32.mrf.mxu0
        %v583 = vadd.f32 0.0, %v582
        %v584 = vpop.f32.mrf.mxu0
        %585 = vdwg.mxu0
        %587 = vrot.lane.b32.xlu0 %v583, 16
        %v588 = vpop.permute.xlu0 %587
        %vm590 = vcmask 195712
        %591 = vst.msk [vmem:[#allocation2] sm:$0xff] %vm590, %v588
        %592 = vrot.lane.b32.xlu0 %v403, 104
        %v593 = vpop.permute.xlu0 %592
        %594 = vrot.lane.b32.xlu0 %v403, 72
        %v595 = vpop.permute.xlu0 %594
        %v597 = vsel %vm407, %v593, 0
        %v600 = vsel %vm407, %v595, 0
        %602 = vmatpush.bf16.xpose.msra.mxu0 0
        %603 = vmatpush.bf16.xpose.msra.mxu0 0
        %604 = vmatpush.bf16.xpose.msra.mxu0 0
        %605 = vmatpush.bf16.xpose.msra.mxu0 0
        %606 = vmatpush.bf16.xpose.msra.mxu0 0
        %607 = vmatpush.bf16.xpose.msra.mxu0 0
        %608 = vmatpush.bf16.xpose.msra.mxu0 0
        %609 = vmatpush.bf16.xpose.msra.mxu0 %v600
        %610 = vmatmul.bf16.gmra.mxu0 %v597
        %v611 = vpop.f32.mrf.mxu0
        %v612 = vadd.f32 0.0, %v611
        %v613 = vpop.f32.mrf.mxu0
        %614 = vdwg.mxu0
        %v615 = vmul.f32 %v612, 0.35355338
        %v616 = vadd.f32 %v615, %v402
        %v617 = vsel %vm407, %v616, -inf
        %618 = vmax.xlane.f32.xlu0 %v617
        %v619 = vpop.xlane.xlu0 %618
        %v620 = vsub.f32 %v616, %v619
        %v621 = vmul.f32 %v620, 1.442695
        %v622 = vpow.pop %v621
        %v623 = vsel %vm407, %v622, 0.0
        %624 = vadd.xlane.f32.xlu0 %v623
        %v625 = vpop.xlane.xlu0 %624
        %v626 = vrcp.pop %v625
        %v627 = vmul.f32 %v622, %v626
        %v628 = vpack.c.bf16 %v627, %v627
        %629 = vrot.lane.b32.xlu0 %v403, 40
        %v630 = vpop.permute.xlu0 %629
        %v632 = vsel %vm407, %v628, 0
        %v635 = vsel %vm446, %v630, 0
        %637 = vmatpush.bf16.msra.mxu0 0
        %638 = vmatpush.bf16.msra.mxu0 0
        %639 = vmatpush.bf16.msra.mxu0 0
        %640 = vmatpush.bf16.msra.mxu0 0
        %641 = vmatpush.bf16.msra.mxu0 0
        %642 = vmatpush.bf16.msra.mxu0 0
        %643 = vmatpush.bf16.msra.mxu0 0
        %644 = vmatpush.bf16.msra.mxu0 %v635
        %645 = vmatmul.bf16.gmra.mxu0 %v632
        %v646 = vpop.f32.mrf.mxu0
        %v647 = vadd.f32 0.0, %v646
        %v648 = vpop.f32.mrf.mxu0
        %649 = vdwg.mxu0
        %651 = vrot.lane.b32.xlu0 %v647, 24
        %v652 = vpop.permute.xlu0 %651
        %vm654 = vcmask 261312
        %655 = vst.msk [vmem:[#allocation2] sm:$0xff] %vm654, %v652
        %v656 = vld [vmem:[#allocation2] sm:$0xff]
        %v657 = vpack.c.bf16 %v656, %v656
        %v658 = vld [vmem:[%s4] sm:$0xf]
        %v659 = vld [vmem:[%s4 + $0x4] sm:$0xf]
        %v660 = vld [vmem:[%s4 + $0x8] sm:$0xf]
        %v661 = vld [vmem:[%s4 + $0xc] sm:$0xf]
        %v662 = vld [vmem:[#allocation5] sm:$0x1]
        %v664 = vperm.slane %v662, 0
        %v670 = vunpack.c.l.b16 %v658
        %v671 = vunpack.c.l.b16 %v659
        %v672 = vunpack.c.l.b16 %v660
        %v673 = vunpack.c.l.b16 %v661
        %v674 = vpack.c.b16 %v671, %v670
        %v675 = vpack.c.b16 %v673, %v672
        %v679 = vsel %vm383, %v657, 0
        %681 = vmatpush.bf16.msra.mxu0 0
        %682 = vmatpush.bf16.msra.mxu0 0
        %683 = vmatpush.bf16.msra.mxu0 0
        %684 = vmatpush.bf16.msra.mxu0 0
        %685 = vmatpush.bf16.msra.mxu0 0
        %686 = vmatpush.bf16.msra.mxu0 0
        %687 = vmatpush.bf16.msra.mxu0 %v675
        %688 = vmatpush.bf16.msra.mxu0 %v674
        %689 = vmatmul.bf16.gmra.mxu0 %v679
        %v690 = vpop.f32.mrf.mxu0
        %v691 = vadd.f32 %v664, %v690
        %v692 = vpop.f32.mrf.mxu0
        %693 = vdwg.mxu0
        %v694 = vadd.f32 %v361, %v691
        %v695 = vsel %vm383, %v694, 0.0
        %696 = vadd.xlane.f32.xlu0 %v695
        %v697 = vpop.xlane.xlu0 %696
        %v698 = vrcp.pop 32.0
        %v699 = vmul.f32 32.0, %v698
        %v700 = vsub.f32 1.0, %v699
        %v701 = vmul.f32 %v698, %v700
        %v702 = vadd.f32 %v698, %v701
        %vm703 = vweird.f32 %v698
        %v704 = vsel %vm703, %v698, %v702
        %v705 = vmul.f32 %v697, %v704
        %v706 = vsub.f32 %v694, %v705
        %v707 = vmul.f32 %v706, %v706
        %v708 = vsel %vm383, %v707, 0.0
        %709 = vadd.xlane.f32.xlu0 %v708
        %v710 = vpop.xlane.xlu0 %709
        %v711 = vmul.f32 %v710, %v704
        %v712 = vadd.f32 %v711, 1e-05
        %v713 = vrsqrt.pop %v712
        %v714 = vmul.f32 %v713, %v712
        %v715 = vmul.f32 %v714, %v713
        %v716 = vmul.f32 0.5, %v715
        %v717 = vsub.f32 1.5, %v716
        %v718 = vmul.f32 %v713, %v717
        %vm719 = vweird.f32 %v712
        %vm720 = vweird.f32 %v713
        %vm721 = vmor %vm719, %vm720
        %v722 = vsel %vm721, %v713, %v718
        %v723 = vmul.f32 %v706, %v722
        %v724 = vld [vmem:[#allocation7] sm:$0x1]
        %v726 = vperm.slane %v724, 0
        %v728 = vmul.f32 %v723, %v726
        %v729 = vld [vmem:[#allocation8] sm:$0x1]
        %v731 = vperm.slane %v729, 0
        %v733 = vadd.f32 %v728, %v731
        %734 = vst.msk [vmem:[%s359] sm:$0xff] %vm383, %v733
        %p735 = scmp.lt.s32.totalorder %s22, 1
        %s736 = scalar_select %p735, %s22, 1
        %s737 = smul.addr %s736, 8
        %s738 = scalar_lea.vmem %s8, %s737
        // Predicated region
        $region69: #{trans_layer_forward.6} parent=51 // pred_check
          %p739 = pneg %p213
        $region70: #{trans_layer_forward.6} parent=51 // pred_check_branch
          %741 = sbr.rel (%p739) target = $region72
        $region71: #{trans_layer_forward.6} parent=51 // pred_region
          _
        $region72: #{trans_layer_forward.6} parent=51 // pred_fallthru
          _
      $region52: #{trans_layer_forward.6} parent=5 // pred_fallthru
        _
      %p742 = scmp.le.s32.totalorder 2, %s17
      // Predicated region
      $region73: #{trans_layer_forward.6} parent=5 // pred_check
        %p743 = pneg %p742
      $region74: #{trans_layer_forward.6} parent=5 // pred_check_branch
        %745 = sbr.rel (%p743) target = $region76
      $region75: #{trans_layer_forward.6} parent=5 // pred_region
        %s746 = ssub.s32 %s17, 2
        // Predicated region
        $region77: #{trans_layer_forward.6} parent=75 // pred_check
          %p747 = pneg %p219
        $region78: #{trans_layer_forward.6} parent=75 // pred_check_branch
          %749 = sbr.rel (%p747) target = $region80
        $region79: #{trans_layer_forward.6} parent=75 // pred_region
          %p750 = scmp.lt.s32.totalorder %s23, 1
          %s751 = scalar_select %p750, %s23, 1
          %s752 = smul.addr %s751, 8
          %s753 = scalar_lea.vmem %s8, %s752
        $region80: #{trans_layer_forward.6} parent=75 // pred_fallthru
          _
      $region76: #{trans_layer_forward.6} parent=5 // pred_fallthru
        _
    $region6: #{trans_layer_forward.6} parent=1 // loop_footer
      %s21 = sadd.s32 1, %s17
    $region7: #{trans_layer_forward.6} parent=1 // loop_footer_branch
      %16 = sbr.rel target = $region3
    $region8: #{trans_layer_forward.6} parent=1 // loop_exit
      _
    %754 = vsyncpa [#allocation4], 1
    %s755 = scalar_lea.sflag [#allocation4], 1
    %756 = vsyncpa %s755, 1
    %757 = vsyncpa [#allocation6], 1
    %758 = vsyncpa [#allocation9], 1

// kernel: trans_layer_forward.5
$region0: #{trans_layer_forward.5}
  #allocation0 [shape = 'u32[]', space=smem, size = 0x4, offset = 0x4, fixed_abs, tag = 'smem constant byte address 0x4 - core index']
  #allocation1 [shape = 'u32[72,128]{1,0:T(1,128)}', space=vmem, size = 0x9000, scoped, tag = 'internal scratch']
  %s0 = inlined_call_operand.vmem [shape: f32[2,8,32], index: 0, kind: input, shape index: {}, may-alias: {0,7}]
  %s1 = inlined_call_operand.vmem [shape: bf16[32,64], index: 1, kind: input, shape index: {}]
  %s2 = inlined_call_operand.hbm [shape: f32[1,64], index: 2, kind: input, shape index: {}]
  %s3 = inlined_call_operand.vmem [shape: bf16[64,32], index: 3, kind: input, shape index: {}]
  %s4 = inlined_call_operand.hbm [shape: f32[1,32], index: 4, kind: input, shape index: {}]
  %s5 = inlined_call_operand.hbm [shape: f32[1,32], index: 5, kind: input, shape index: {}]
  %s6 = inlined_call_operand.hbm [shape: f32[1,32], index: 6, kind: input, shape index: {}]
  %s7 = inlined_call_operand.vmem [shape: f32[2,8,32], index: 7, kind: output, shape index: {}, may-alias: {0,7}]
  %s8 = sld [smem:[#allocation0]]
  $region77: #{trans_layer_forward.5} parent=0
    _
  %s10 = ssub.s32 1, %s8
  %s11 = scalar_select 0, %s10, %s8
  $region1: #{trans_layer_forward.5} parent=0
    #allocation2 [shape = 'u8[512]{0}', space=vmem, size = 0x400, scoped, tag = 'input window, operand 2, single buffered']
    #allocation3 [shape = 's32[2]{0}', space=sflag, size = 0x8, scoped, tag = 'scoped memory for trans_layer_forward.5']
    #allocation4 [shape = 'u8[512]{0}', space=vmem, size = 0x400, scoped, tag = 'input window, operand 4, single buffered']
    #allocation5 [shape = 's32[1]{0}', space=sflag, size = 0x4, scoped, tag = 'scoped memory for trans_layer_forward.5']
    #allocation6 [shape = 'u8[512]{0}', space=vmem, size = 0x400, scoped, tag = 'input window, operand 5, single buffered']
    #allocation7 [shape = 'u8[512]{0}', space=vmem, size = 0x400, scoped, tag = 'input window, operand 6, single buffered']
    #allocation8 [shape = 's32[1]{0}', space=sflag, size = 0x4, scoped, tag = 'scoped memory for trans_layer_forward.5']
    %12 = vsyncpa [#allocation3], 0
    %13 = vsyncpa [#allocation5], 0
    %14 = vsyncpa [#allocation8], 0
    loop: start=0, step=1, limit=4
    $region2: #{trans_layer_forward.5} parent=1 // loop_pre_header
      _
    $region3: #{trans_layer_forward.5} parent=1 // loop_header
      %s16 = sphi 0, %s20
      %p17 = scmp.ge.s32.totalorder %s16, 4
      %s23 = sphi 0, %s35
      %s24 = sphi 0, %s31
      %s25 = sphi 0, %s23
      %s26 = sphi 0, %s24
      %s27 = sphi 0, %s25
      %s28 = sphi 0, %s26
      %s40 = sphi 0, %s42
      %s43 = sphi 0, %s40
      %s44 = sphi 0, %s43
      %s60 = sphi 0, %s44
      %s64 = sphi 0, %s64
      %s66 = sphi 0, %s64
      %s67 = sphi 0, %s66
      %s81 = sphi 0, %s67
      %s85 = sphi 0, %s85
      %s87 = sphi 0, %s85
      %s88 = sphi 0, %s87
      %s102 = sphi 0, %s88
      %s106 = sphi 0, %s106
      %s108 = sphi 0, %s106
      %s109 = sphi 0, %s108
      %s123 = sphi 0, %s109
      %s127 = sphi 0, %s127
      %s129 = sphi 0, %s127
      %s130 = sphi 0, %s129
      %s144 = sphi 0, %s130
      %s148 = sphi 0, %s148
      %s150 = sphi 0, %s148
      %s151 = sphi 0, %s150
      %s165 = sphi 0, %s151
      %s169 = sphi 0, %s169
      %s171 = sphi 0, %s169
      %s172 = sphi 0, %s171
      %s186 = sphi 0, %s172
      %s194 = sphi 0, %s196
      %s197 = sphi 0, %s194
      %s198 = sphi 0, %s197
      %s214 = sphi 0, %s198
    $region4: #{trans_layer_forward.5} parent=1 // loop_header_branch
      %19 = sbr.rel (%p17) target = $region8
    $region5: #{trans_layer_forward.5} parent=1 // loop_body
      %s21 = ssub.s32 %s16, 1
      %s22 = ssub.s32 %s16, 2
      %s29 = sadd.s32 1, %s24
      %p30 = scmp.ge.s32.totalorder %s29, 1
      %s31 = scalar_select %p30, 0, %s29
      %s32 = sadd.s32 1, %s23
      %s33 = scalar_select %p30, %s32, %s23
      %p34 = scmp.ge.s32.totalorder %s33, 2
      %s35 = scalar_select %p34, 0, %s33
      %s36 = ssub.s32 %s23, %s35
      %s37 = ssub.s32 %s24, %s31
      %s38 = sor.u32 %s36, %s37
      %p39 = scmp.eq.s32.totalorder %s38, 0
      %s41 = sadd.s32 %s40, 1
      %s42 = scalar_select %p39, %s40, %s41
      %p45 = pneg %p39
      %p46 = scmp.eq.s32.totalorder %s16, 1
      %p47 = por %p45, %p46
      %p48 = scmp.ne.s32.totalorder %s40, %s43
      %p49 = scmp.eq.s32.totalorder %s16, 0
      %p50 = por %p48, %p49
      %p51 = scmp.ne.s32.totalorder %s40, %s43
      %p52 = scmp.eq.s32.totalorder %s21, 1
      %p53 = por %p51, %p52
      %p54 = scmp.ne.s32.totalorder %s43, %s44
      %p55 = scmp.eq.s32.totalorder %s21, 0
      %p56 = por %p54, %p55
      %p57 = scmp.ne.s32.totalorder %s43, %s44
      %p58 = scmp.eq.s32.totalorder %s22, 1
      %p59 = por %p57, %p58
      %p61 = scmp.ne.s32.totalorder %s44, %s60
      %p62 = scmp.eq.s32.totalorder %s22, 0
      %p63 = por %p61, %p62
      %s65 = sadd.s32 %s64, 1
      %p68 = scmp.eq.s32.totalorder %s16, 1
      %p69 = scmp.ne.s32.totalorder %s64, %s66
      %p70 = scmp.eq.s32.totalorder %s16, 0
      %p71 = por %p69, %p70
      %p72 = scmp.ne.s32.totalorder %s64, %s66
      %p73 = scmp.eq.s32.totalorder %s21, 1
      %p74 = por %p72, %p73
      %p75 = scmp.ne.s32.totalorder %s66, %s67
      %p76 = scmp.eq.s32.totalorder %s21, 0
      %p77 = por %p75, %p76
      %p78 = scmp.ne.s32.totalorder %s66, %s67
      %p79 = scmp.eq.s32.totalorder %s22, 1
      %p80 = por %p78, %p79
      %p82 = scmp.ne.s32.totalorder %s67, %s81
      %p83 = scmp.eq.s32.totalorder %s22, 0
      %p84 = por %p82, %p83
      %s86 = sadd.s32 %s85, 1
      %p89 = scmp.eq.s32.totalorder %s16, 1
      %p90 = scmp.ne.s32.totalorder %s85, %s87
      %p91 = scmp.eq.s32.totalorder %s16, 0
      %p92 = por %p90, %p91
      %p93 = scmp.ne.s32.totalorder %s85, %s87
      %p94 = scmp.eq.s32.totalorder %s21, 1
      %p95 = por %p93, %p94
      %p96 = scmp.ne.s32.totalorder %s87, %s88
      %p97 = scmp.eq.s32.totalorder %s21, 0
      %p98 = por %p96, %p97
      %p99 = scmp.ne.s32.totalorder %s87, %s88
      %p100 = scmp.eq.s32.totalorder %s22, 1
      %p101 = por %p99, %p100
      %p103 = scmp.ne.s32.totalorder %s88, %s102
      %p104 = scmp.eq.s32.totalorder %s22, 0
      %p105 = por %p103, %p104
      %s107 = sadd.s32 %s106, 1
      %p110 = scmp.eq.s32.totalorder %s16, 1
      %p111 = scmp.ne.s32.totalorder %s106, %s108
      %p112 = scmp.eq.s32.totalorder %s16, 0
      %p113 = por %p111, %p112
      %p114 = scmp.ne.s32.totalorder %s106, %s108
      %p115 = scmp.eq.s32.totalorder %s21, 1
      %p116 = por %p114, %p115
      %p117 = scmp.ne.s32.totalorder %s108, %s109
      %p118 = scmp.eq.s32.totalorder %s21, 0
      %p119 = por %p117, %p118
      %p120 = scmp.ne.s32.totalorder %s108, %s109
      %p121 = scmp.eq.s32.totalorder %s22, 1
      %p122 = por %p120, %p121
      %p124 = scmp.ne.s32.totalorder %s109, %s123
      %p125 = scmp.eq.s32.totalorder %s22, 0
      %p126 = por %p124, %p125
      %s128 = sadd.s32 %s127, 1
      %p131 = scmp.eq.s32.totalorder %s16, 1
      %p132 = scmp.ne.s32.totalorder %s127, %s129
      %p133 = scmp.eq.s32.totalorder %s16, 0
      %p134 = por %p132, %p133
      %p135 = scmp.ne.s32.totalorder %s127, %s129
      %p136 = scmp.eq.s32.totalorder %s21, 1
      %p137 = por %p135, %p136
      %p138 = scmp.ne.s32.totalorder %s129, %s130
      %p139 = scmp.eq.s32.totalorder %s21, 0
      %p140 = por %p138, %p139
      %p141 = scmp.ne.s32.totalorder %s129, %s130
      %p142 = scmp.eq.s32.totalorder %s22, 1
      %p143 = por %p141, %p142
      %p145 = scmp.ne.s32.totalorder %s130, %s144
      %p146 = scmp.eq.s32.totalorder %s22, 0
      %p147 = por %p145, %p146
      %s149 = sadd.s32 %s148, 1
      %p152 = scmp.eq.s32.totalorder %s16, 1
      %p153 = scmp.ne.s32.totalorder %s148, %s150
      %p154 = scmp.eq.s32.totalorder %s16, 0
      %p155 = por %p153, %p154
      %p156 = scmp.ne.s32.totalorder %s148, %s150
      %p157 = scmp.eq.s32.totalorder %s21, 1
      %p158 = por %p156, %p157
      %p159 = scmp.ne.s32.totalorder %s150, %s151
      %p160 = scmp.eq.s32.totalorder %s21, 0
      %p161 = por %p159, %p160
      %p162 = scmp.ne.s32.totalorder %s150, %s151
      %p163 = scmp.eq.s32.totalorder %s22, 1
      %p164 = por %p162, %p163
      %p166 = scmp.ne.s32.totalorder %s151, %s165
      %p167 = scmp.eq.s32.totalorder %s22, 0
      %p168 = por %p166, %p167
      %s170 = sadd.s32 %s169, 1
      %p173 = scmp.eq.s32.totalorder %s16, 1
      %p174 = scmp.ne.s32.totalorder %s169, %s171
      %p175 = scmp.eq.s32.totalorder %s16, 0
      %p176 = por %p174, %p175
      %p177 = scmp.ne.s32.totalorder %s169, %s171
      %p178 = scmp.eq.s32.totalorder %s21, 1
      %p179 = por %p177, %p178
      %p180 = scmp.ne.s32.totalorder %s171, %s172
      %p181 = scmp.eq.s32.totalorder %s21, 0
      %p182 = por %p180, %p181
      %p183 = scmp.ne.s32.totalorder %s171, %s172
      %p184 = scmp.eq.s32.totalorder %s22, 1
      %p185 = por %p183, %p184
      %p187 = scmp.ne.s32.totalorder %s172, %s186
      %p188 = scmp.eq.s32.totalorder %s22, 0
      %p189 = por %p187, %p188
      %s190 = ssub.s32 %s23, %s35
      %s191 = ssub.s32 %s24, %s31
      %s192 = sor.u32 %s190, %s191
      %p193 = scmp.eq.s32.totalorder %s192, 0
      %s195 = sadd.s32 %s194, 1
      %s196 = scalar_select %p193, %s194, %s195
      %p199 = pneg %p193
      %p200 = scmp.eq.s32.totalorder %s16, 1
      %p201 = por %p199, %p200
      %p202 = scmp.ne.s32.totalorder %s194, %s197
      %p203 = scmp.eq.s32.totalorder %s16, 0
      %p204 = por %p202, %p203
      %p205 = scmp.ne.s32.totalorder %s194, %s197
      %p206 = scmp.eq.s32.totalorder %s21, 1
      %p207 = por %p205, %p206
      %p208 = scmp.ne.s32.totalorder %s197, %s198
      %p209 = scmp.eq.s32.totalorder %s21, 0
      %p210 = por %p208, %p209
      %p211 = scmp.ne.s32.totalorder %s197, %s198
      %p212 = scmp.eq.s32.totalorder %s22, 1
      %p213 = por %p211, %p212
      %p215 = scmp.ne.s32.totalorder %s198, %s214
      %p216 = scmp.eq.s32.totalorder %s22, 0
      %p217 = por %p215, %p216
      %p218 = scmp.le.s32.totalorder 1, %s16
      %p219 = scmp.lt.s32.totalorder %s16, 3
      %p220 = pnand %p218, %p219
      %p221 = pneg %p220
      // Predicated region
      $region9: #{trans_layer_forward.5} parent=5 // pred_check
        _
      $region10: #{trans_layer_forward.5} parent=5 // pred_check_branch
        %223 = sbr.rel (%p220) target = $region12
      $region11: #{trans_layer_forward.5} parent=5 // pred_region
        %s224 = ssub.s32 %s16, 1
        // Predicated region
        $region13: #{trans_layer_forward.5} parent=11 // pred_check
          %p225 = pneg %p77
        $region14: #{trans_layer_forward.5} parent=11 // pred_check_branch
          %227 = sbr.rel (%p225) target = $region16
        $region15: #{trans_layer_forward.5} parent=11 // pred_region
          _
        $region16: #{trans_layer_forward.5} parent=11 // pred_fallthru
          _
        // Predicated region
        $region17: #{trans_layer_forward.5} parent=11 // pred_check
          %p228 = pneg %p98
        $region18: #{trans_layer_forward.5} parent=11 // pred_check_branch
          %230 = sbr.rel (%p228) target = $region20
        $region19: #{trans_layer_forward.5} parent=11 // pred_region
          %232 = vsyncadd [#allocation3], 0
          %s234 = sshll.u32 %s2, 4
          %s235 = int_to_ptr.hbm [resolvable:$true] %s234
          %s236 = sshll.u32 [#allocation2], 4
          %s237 = int_to_ptr.vmem [resolvable:$true] %s236
          %239 = dma.hbm_to_vmem [thread:$0]  %s235, 16, %s237, [#allocation3]
        $region20: #{trans_layer_forward.5} parent=11 // pred_fallthru
          _
        // Predicated region
        $region21: #{trans_layer_forward.5} parent=11 // pred_check
          %p240 = pneg %p119
        $region22: #{trans_layer_forward.5} parent=11 // pred_check_branch
          %242 = sbr.rel (%p240) target = $region24
        $region23: #{trans_layer_forward.5} parent=11 // pred_region
          _
        $region24: #{trans_layer_forward.5} parent=11 // pred_fallthru
          _
        // Predicated region
        $region25: #{trans_layer_forward.5} parent=11 // pred_check
          %p243 = pneg %p140
        $region26: #{trans_layer_forward.5} parent=11 // pred_check_branch
          %245 = sbr.rel (%p243) target = $region28
        $region27: #{trans_layer_forward.5} parent=11 // pred_region
          %247 = vsyncadd [#allocation5], 0
          %s249 = sshll.u32 %s4, 4
          %s250 = int_to_ptr.hbm [resolvable:$true] %s249
          %s251 = sshll.u32 [#allocation4], 4
          %s252 = int_to_ptr.vmem [resolvable:$true] %s251
          %254 = dma.hbm_to_vmem [thread:$0]  %s250, 16, %s252, [#allocation5]
        $region28: #{trans_layer_forward.5} parent=11 // pred_fallthru
          _
        // Predicated region
        $region29: #{trans_layer_forward.5} parent=11 // pred_check
          %p255 = pneg %p161
        $region30: #{trans_layer_forward.5} parent=11 // pred_check_branch
          %257 = sbr.rel (%p255) target = $region32
        $region31: #{trans_layer_forward.5} parent=11 // pred_region
          %259 = vsyncadd [#allocation5], 0
          %s261 = sshll.u32 %s5, 4
          %s262 = int_to_ptr.hbm [resolvable:$true] %s261
          %s263 = sshll.u32 [#allocation6], 4
          %s264 = int_to_ptr.vmem [resolvable:$true] %s263
          %266 = dma.hbm_to_vmem [thread:$0]  %s262, 16, %s264, [#allocation5]
        $region32: #{trans_layer_forward.5} parent=11 // pred_fallthru
          _
        // Predicated region
        $region33: #{trans_layer_forward.5} parent=11 // pred_check
          %p267 = pneg %p182
        $region34: #{trans_layer_forward.5} parent=11 // pred_check_branch
          %269 = sbr.rel (%p267) target = $region36
        $region35: #{trans_layer_forward.5} parent=11 // pred_region
          %271 = vsyncadd [#allocation8], 0
          %s273 = sshll.u32 %s6, 4
          %s274 = int_to_ptr.hbm [resolvable:$true] %s273
          %s275 = sshll.u32 [#allocation7], 4
          %s276 = int_to_ptr.vmem [resolvable:$true] %s275
          %278 = dma.hbm_to_vmem [thread:$0]  %s274, 16, %s276, [#allocation8]
        $region36: #{trans_layer_forward.5} parent=11 // pred_fallthru
          _
      $region12: #{trans_layer_forward.5} parent=5 // pred_fallthru
        _
      %p279 = scmp.lt.s32.totalorder %s16, 2
      // Predicated region
      $region37: #{trans_layer_forward.5} parent=5 // pred_check
        %p280 = pneg %p279
      $region38: #{trans_layer_forward.5} parent=5 // pred_check_branch
        %282 = sbr.rel (%p280) target = $region40
      $region39: #{trans_layer_forward.5} parent=5 // pred_region
        // Predicated region
        $region41: #{trans_layer_forward.5} parent=39 // pred_check
          %p283 = pneg %p50
        $region42: #{trans_layer_forward.5} parent=39 // pred_check_branch
          %285 = sbr.rel (%p283) target = $region44
        $region43: #{trans_layer_forward.5} parent=39 // pred_region
          %p286 = scmp.lt.s32.totalorder %s23, 1
          %s287 = scalar_select %p286, %s23, 1
          %p288 = scmp.lt.s32.totalorder %s24, 0
          %s289 = scalar_select %p288, %s24, 0
          %s290 = sadd.s32 %s289, %s287
          %s291 = smul.addr %s290, 8
          %s292 = scalar_lea.vmem %s0, %s291
        $region44: #{trans_layer_forward.5} parent=39 // pred_fallthru
          _
      $region40: #{trans_layer_forward.5} parent=5 // pred_fallthru
        _
      %p293 = scmp.le.s32.totalorder 1, %s16
      %p294 = scmp.lt.s32.totalorder %s16, 3
      %p295 = pnand %p293, %p294
      %p296 = pneg %p295
      // Predicated region
      $region45: #{trans_layer_forward.5} parent=5 // pred_check
        _
      $region46: #{trans_layer_forward.5} parent=5 // pred_check_branch
        %298 = sbr.rel (%p295) target = $region48
      $region47: #{trans_layer_forward.5} parent=5 // pred_region
        %s299 = ssub.s32 %s16, 1
        // Predicated region
        $region49: #{trans_layer_forward.5} parent=47 // pred_check
          %p300 = pneg %p98
        $region50: #{trans_layer_forward.5} parent=47 // pred_check_branch
          %302 = sbr.rel (%p300) target = $region52
        $region51: #{trans_layer_forward.5} parent=47 // pred_region
          %304 = dma.done [#allocation3], 16
        $region52: #{trans_layer_forward.5} parent=47 // pred_fallthru
          _
        // Predicated region
        $region53: #{trans_layer_forward.5} parent=47 // pred_check
          %p305 = pneg %p140
        $region54: #{trans_layer_forward.5} parent=47 // pred_check_branch
          %307 = sbr.rel (%p305) target = $region56
        $region55: #{trans_layer_forward.5} parent=47 // pred_region
          %309 = dma.done [#allocation5], 16
        $region56: #{trans_layer_forward.5} parent=47 // pred_fallthru
          _
        // Predicated region
        $region57: #{trans_layer_forward.5} parent=47 // pred_check
          %p310 = pneg %p161
        $region58: #{trans_layer_forward.5} parent=47 // pred_check_branch
          %312 = sbr.rel (%p310) target = $region60
        $region59: #{trans_layer_forward.5} parent=47 // pred_region
          %314 = dma.done [#allocation5], 16
        $region60: #{trans_layer_forward.5} parent=47 // pred_fallthru
          _
        // Predicated region
        $region61: #{trans_layer_forward.5} parent=47 // pred_check
          %p315 = pneg %p182
        $region62: #{trans_layer_forward.5} parent=47 // pred_check_branch
          %317 = sbr.rel (%p315) target = $region64
        $region63: #{trans_layer_forward.5} parent=47 // pred_region
          %319 = dma.done [#allocation8], 16
        $region64: #{trans_layer_forward.5} parent=47 // pred_fallthru
          _
        %p320 = scmp.lt.s32.totalorder %s25, 1
        %s321 = scalar_select %p320, %s25, 1
        %p322 = scmp.lt.s32.totalorder %s26, 0
        %s323 = scalar_select %p322, %s26, 0
        %s324 = sadd.s32 %s323, %s321
        %s325 = smul.addr %s324, 8
        %s326 = scalar_lea.vmem %s0, %s325
        %p327 = pneg %p56
        %p328 = pneg %p53
        %p329 = pneg %p77
        %p330 = pneg %p74
        %p331 = pneg %p98
        %p332 = pneg %p95
        %p333 = pneg %p119
        %p334 = pneg %p116
        %p335 = pneg %p140
        %p336 = pneg %p137
        %p337 = pneg %p161
        %p338 = pneg %p158
        %p339 = pneg %p182
        %p340 = pneg %p179
        %p341 = pneg %p210
        %p342 = pneg %p207
        %p343 = scmp.lt.s32.totalorder %s25, 1
        %s344 = scalar_select %p343, %s25, 1
        %p345 = scmp.lt.s32.totalorder %s26, 0
        %s346 = scalar_select %p345, %s26, 0
        %s347 = sadd.s32 %s346, %s344
        %s348 = smul.addr %s347, 8
        %s349 = scalar_lea.vmem %s7, %s348
        %p350 = scmp.lt.s32.totalorder %s25, 1
        %s351 = scalar_select %p350, %s25, 1
        %p352 = scmp.lt.s32.totalorder %s26, 0
        %s353 = scalar_select %p352, %s26, 0
        %s354 = sadd.s32 %s353, %s351
        %s355 = smul.addr %s354, 8
        %s356 = scalar_lea.vmem %s0, %s355
        %p357 = scmp.lt.s32.totalorder %s25, 1
        %s358 = scalar_select %p357, %s25, 1
        %p359 = scmp.lt.s32.totalorder %s26, 0
        %s360 = scalar_select %p359, %s26, 0
        %s361 = sadd.s32 %s360, %s358
        %s362 = smul.addr %s361, 8
        %s363 = scalar_lea.vmem %s7, %s362
        %v365 = vld [vmem:[%s356] sm:$0xff]
        %v366 = vpack.c.bf16 %v365, %v365
        %v367 = vld [vmem:[%s1] sm:$0xf]
        %v368 = vld [vmem:[%s1 + $0x4] sm:$0xf]
        %v369 = vld [vmem:[%s1 + $0x8] sm:$0xf]
        %v370 = vld [vmem:[%s1 + $0xc] sm:$0xf]
        %v371 = vld [vmem:[#allocation2] sm:$0x1]
        %v373 = vperm.slane %v371, 0
        %v379 = vunpack.c.l.b16 %v367
        %v380 = vunpack.c.l.b16 %v368
        %v381 = vunpack.c.l.b16 %v369
        %v382 = vunpack.c.l.b16 %v370
        %v383 = vpack.c.b16 %v380, %v379
        %v384 = vpack.c.b16 %v382, %v381
        %vm387 = vcmask 261120
        %v389 = vsel %vm387, %v366, 0
        %391 = vmatpush.bf16.msra.mxu0 0
        %392 = vmatpush.bf16.msra.mxu0 0
        %393 = vmatpush.bf16.msra.mxu0 0
        %394 = vmatpush.bf16.msra.mxu0 0
        %395 = vmatpush.bf16.msra.mxu0 0
        %396 = vmatpush.bf16.msra.mxu0 0
        %397 = vmatpush.bf16.msra.mxu0 %v384
        %398 = vmatpush.bf16.msra.mxu0 %v383
        %399 = vmatmul.bf16.gmra.mxu0 %v389
        %v400 = vpop.f32.mrf.mxu0
        %v401 = vadd.f32 %v373, %v400
        %v402 = vpop.f32.mrf.mxu0
        %403 = vdwg.mxu0
        %v404 = vmul.f32 %v401, 0.5
        %v405 = vmul.f32 %v401, 0.70710677
        %v406 = vmul.f32 %v405, %v405
        %v407 = vmin.f32 16.0, %v406
        %v408 = vmul.f32 %v407, 2.1237322e-06
        %v409 = vadd.f32 %v408, 0.00028619796
        %v410 = vmul.f32 %v407, %v409
        %v411 = vadd.f32 %v410, 0.0036580483
        %v412 = vmul.f32 %v407, %v411
        %v413 = vadd.f32 %v412, 0.05243302
        %v414 = vmul.f32 %v407, %v413
        %v415 = vadd.f32 %v414, 0.18741608
        %v416 = vmul.f32 %v407, %v415
        %v417 = vadd.f32 %v416, 1.1283791
        %v418 = vmul.f32 %v405, %v417
        %v419 = vmul.f32 %v407, 3.8918573e-05
        %v420 = vadd.f32 %v419, 0.001143296
        %v421 = vmul.f32 %v407, %v420
        %v422 = vadd.f32 %v421, 0.014752088
        %v423 = vmul.f32 %v407, %v422
        %v424 = vadd.f32 %v423, 0.112945676
        %v425 = vmul.f32 %v407, %v424
        %v426 = vadd.f32 %v425, 0.4994258
        %v427 = vmul.f32 %v407, %v426
        %v428 = vadd.f32 %v427, 1.0
        %v429 = vrcp.pop %v428
        %v430 = vmul.f32 %v428, %v429
        %v431 = vsub.f32 1.0, %v430
        %v432 = vmul.f32 %v429, %v431
        %v433 = vadd.f32 %v429, %v432
        %vm434 = vweird.f32 %v428
        %vm435 = vweird.f32 %v429
        %vm436 = vmor %vm434, %vm435
        %v437 = vsel %vm436, %v429, %v433
        %v438 = vand.u32 2147483647, %v428
        %vm439 = vcmp.eq.f32.partialorder %v438, 8.507059e+37
        %v440 = vand.u32 %v428, 2147483648
        %v441 = vor.u32 1.1754944e-38, %v440
        %v442 = vsel %vm439, %v441, %v437
        %v443 = vmul.f32 %v418, %v442
        %v444 = vmin.f32 %v443, 1.0
        %v445 = vmax.f32 %v444, -1.0
        %v446 = vadd.f32 %v445, 1.0
        %v447 = vmul.f32 %v404, %v446
        %v448 = vpack.c.bf16 %v447, %v447
        %v449 = vld [vmem:[%s3] sm:$0xf]
        %v450 = vld [vmem:[%s3 + $0x4] sm:$0xf]
        %v451 = vld [vmem:[%s3 + $0x8] sm:$0xf]
        %v452 = vld [vmem:[%s3 + $0xc] sm:$0xf]
        %v453 = vld [vmem:[%s3 + $0x10] sm:$0xf]
        %v454 = vld [vmem:[%s3 + $0x14] sm:$0xf]
        %v455 = vld [vmem:[%s3 + $0x18] sm:$0xf]
        %v456 = vld [vmem:[%s3 + $0x1c] sm:$0xf]
        %v457 = vld [vmem:[#allocation4] sm:$0x1]
        %v459 = vperm.slane %v457, 0
        %v469 = vunpack.c.l.b16 %v449
        %v470 = vunpack.c.l.b16 %v450
        %v471 = vunpack.c.l.b16 %v451
        %v472 = vunpack.c.l.b16 %v452
        %v473 = vunpack.c.l.b16 %v453
        %v474 = vunpack.c.l.b16 %v454
        %v475 = vunpack.c.l.b16 %v455
        %v476 = vunpack.c.l.b16 %v456
        %v477 = vpack.c.b16 %v470, %v469
        %v478 = vpack.c.b16 %v472, %v471
        %v479 = vpack.c.b16 %v474, %v473
        %v480 = vpack.c.b16 %v476, %v475
        %vm485 = vcmask 523264
        %v487 = vsel %vm485, %v448, 0
        %489 = vmatpush.bf16.msra.mxu0 0
        %490 = vmatpush.bf16.msra.mxu0 0
        %491 = vmatpush.bf16.msra.mxu0 0
        %492 = vmatpush.bf16.msra.mxu0 0
        %493 = vmatpush.bf16.msra.mxu0 %v480
        %494 = vmatpush.bf16.msra.mxu0 %v479
        %495 = vmatpush.bf16.msra.mxu0 %v478
        %496 = vmatpush.bf16.msra.mxu0 %v477
        %497 = vmatmul.bf16.gmra.mxu0 %v487
        %v498 = vpop.f32.mrf.mxu0
        %v499 = vadd.f32 %v459, %v498
        %v500 = vpop.f32.mrf.mxu0
        %501 = vdwg.mxu0
        %v502 = vadd.f32 %v365, %v499
        %v503 = vsel %vm387, %v502, 0.0
        %504 = vadd.xlane.f32.xlu0 %v503
        %v505 = vpop.xlane.xlu0 %504
        %v506 = vrcp.pop 32.0
        %v507 = vmul.f32 32.0, %v506
        %v508 = vsub.f32 1.0, %v507
        %v509 = vmul.f32 %v506, %v508
        %v510 = vadd.f32 %v506, %v509
        %vm511 = vweird.f32 %v506
        %v512 = vsel %vm511, %v506, %v510
        %v513 = vmul.f32 %v505, %v512
        %v514 = vsub.f32 %v502, %v513
        %v515 = vmul.f32 %v514, %v514
        %v516 = vsel %vm387, %v515, 0.0
        %517 = vadd.xlane.f32.xlu0 %v516
        %v518 = vpop.xlane.xlu0 %517
        %v519 = vmul.f32 %v518, %v512
        %v520 = vadd.f32 %v519, 1e-05
        %v521 = vrsqrt.pop %v520
        %v522 = vmul.f32 %v521, %v520
        %v523 = vmul.f32 %v522, %v521
        %v524 = vmul.f32 0.5, %v523
        %v525 = vsub.f32 1.5, %v524
        %v526 = vmul.f32 %v521, %v525
        %vm527 = vweird.f32 %v520
        %vm528 = vweird.f32 %v521
        %vm529 = vmor %vm527, %vm528
        %v530 = vsel %vm529, %v521, %v526
        %v531 = vmul.f32 %v514, %v530
        %v532 = vld [vmem:[#allocation6] sm:$0x1]
        %v534 = vperm.slane %v532, 0
        %v536 = vmul.f32 %v531, %v534
        %v537 = vld [vmem:[#allocation7] sm:$0x1]
        %v539 = vperm.slane %v537, 0
        %v541 = vadd.f32 %v536, %v539
        %542 = vst.msk [vmem:[%s363] sm:$0xff] %vm387, %v541
        %p543 = scmp.lt.s32.totalorder %s25, 1
        %s544 = scalar_select %p543, %s25, 1
        %p545 = scmp.lt.s32.totalorder %s26, 0
        %s546 = scalar_select %p545, %s26, 0
        %s547 = sadd.s32 %s546, %s544
        %s548 = smul.addr %s547, 8
        %s549 = scalar_lea.vmem %s7, %s548
        // Predicated region
        $region65: #{trans_layer_forward.5} parent=47 // pred_check
          %p550 = pneg %p207
        $region66: #{trans_layer_forward.5} parent=47 // pred_check_branch
          %552 = sbr.rel (%p550) target = $region68
        $region67: #{trans_layer_forward.5} parent=47 // pred_region
          _
        $region68: #{trans_layer_forward.5} parent=47 // pred_fallthru
          _
      $region48: #{trans_layer_forward.5} parent=5 // pred_fallthru
        _
      %p553 = scmp.le.s32.totalorder 2, %s16
      // Predicated region
      $region69: #{trans_layer_forward.5} parent=5 // pred_check
        %p554 = pneg %p553
      $region70: #{trans_layer_forward.5} parent=5 // pred_check_branch
        %556 = sbr.rel (%p554) target = $region72
      $region71: #{trans_layer_forward.5} parent=5 // pred_region
        %s557 = ssub.s32 %s16, 2
        // Predicated region
        $region73: #{trans_layer_forward.5} parent=71 // pred_check
          %p558 = pneg %p213
        $region74: #{trans_layer_forward.5} parent=71 // pred_check_branch
          %560 = sbr.rel (%p558) target = $region76
        $region75: #{trans_layer_forward.5} parent=71 // pred_region
          %p561 = scmp.lt.s32.totalorder %s27, 1
          %s562 = scalar_select %p561, %s27, 1
          %p563 = scmp.lt.s32.totalorder %s28, 0
          %s564 = scalar_select %p563, %s28, 0
          %s565 = sadd.s32 %s564, %s562
          %s566 = smul.addr %s565, 8
          %s567 = scalar_lea.vmem %s7, %s566
        $region76: #{trans_layer_forward.5} parent=71 // pred_fallthru
          _
      $region72: #{trans_layer_forward.5} parent=5 // pred_fallthru
        _
    $region6: #{trans_layer_forward.5} parent=1 // loop_footer
      %s20 = sadd.s32 1, %s16
    $region7: #{trans_layer_forward.5} parent=1 // loop_footer_branch
      %15 = sbr.rel target = $region3
    $region8: #{trans_layer_forward.5} parent=1 // loop_exit
      _
    %568 = vsyncpa [#allocation3], 1
    %s569 = scalar_lea.sflag [#allocation3], 1
    %570 = vsyncpa %s569, 1
    %571 = vsyncpa [#allocation5], 1
    %572 = vsyncpa [#allocation8], 1

// kernel: trans_layer_forward.7
$region0: #{trans_layer_forward.7}
  #allocation0 [shape = 'u32[]', space=smem, size = 0x4, offset = 0x4, fixed_abs, tag = 'smem constant byte address 0x4 - core index']
  #allocation1 [shape = 'u32[72,128]{1,0:T(1,128)}', space=vmem, size = 0x9000, scoped, tag = 'internal scratch']
  %s0 = inlined_call_operand.hbm [shape: f32[2,8,32], index: 0, kind: input, shape index: {}, may-alias: {0,7}]
  %s1 = inlined_call_operand.vmem [shape: bf16[32,64], index: 1, kind: input, shape index: {}]
  %s2 = inlined_call_operand.vmem [shape: f32[1,64], index: 2, kind: input, shape index: {}]
  %s3 = inlined_call_operand.vmem [shape: bf16[64,32], index: 3, kind: input, shape index: {}]
  %s4 = inlined_call_operand.vmem [shape: f32[1,32], index: 4, kind: input, shape index: {}]
  %s5 = inlined_call_operand.vmem [shape: f32[1,32], index: 5, kind: input, shape index: {}]
  %s6 = inlined_call_operand.vmem [shape: f32[1,32], index: 6, kind: input, shape index: {}]
  %s7 = inlined_call_operand.hbm [shape: f32[2,8,32], index: 7, kind: output, shape index: {}, may-alias: {0,7}]
  %s8 = sld [smem:[#allocation0]]
  $region65: #{trans_layer_forward.7} parent=0
    _
  %s10 = ssub.s32 1, %s8
  %s11 = scalar_select 0, %s10, %s8
  $region1: #{trans_layer_forward.7} parent=0
    #allocation2 [shape = 'u8[8192]{0}', space=vmem, size = 0x2000, scoped, tag = 'input window, operand 0']
    #allocation3 [shape = 's32[2]{0}', space=sflag, size = 0x8, scoped, tag = 'scoped memory for trans_layer_forward.7']
    #allocation4 [shape = 's32[2]{0}', space=sflag, size = 0x8, scoped, tag = 'scoped memory for trans_layer_forward.7']
    #allocation5 [shape = 'u8[8192]{0}', space=vmem, size = 0x2000, scoped, tag = 'output window, operand 0']
    %12 = vsyncpa [#allocation3], 0
    %s13 = scalar_lea.sflag [#allocation3], 1
    %14 = vsyncpa %s13, 0
    %15 = vsyncpa [#allocation4], 0
    %s16 = scalar_lea.sflag [#allocation4], 1
    %17 = vsyncpa %s16, 0
    loop: start=0, step=1, limit=4
    $region2: #{trans_layer_forward.7} parent=1 // loop_pre_header
      _
    $region3: #{trans_layer_forward.7} parent=1 // loop_header
      %s19 = sphi 0, %s23
      %p20 = scmp.ge.s32.totalorder %s19, 4
      %s26 = sphi 0, %s38
      %s27 = sphi 0, %s34
      %s28 = sphi 0, %s26
      %s29 = sphi 0, %s27
      %s30 = sphi 0, %s28
      %s31 = sphi 0, %s29
      %s43 = sphi 0, %s45
      %s46 = sphi 0, %s43
      %s47 = sphi 0, %s46
      %s63 = sphi 0, %s47
      %s67 = sphi 0, %s67
      %s69 = sphi 0, %s67
      %s70 = sphi 0, %s69
      %s84 = sphi 0, %s70
      %s88 = sphi 0, %s88
      %s90 = sphi 0, %s88
      %s91 = sphi 0, %s90
      %s105 = sphi 0, %s91
      %s109 = sphi 0, %s109
      %s111 = sphi 0, %s109
      %s112 = sphi 0, %s111
      %s126 = sphi 0, %s112
      %s130 = sphi 0, %s130
      %s132 = sphi 0, %s130
      %s133 = sphi 0, %s132
      %s147 = sphi 0, %s133
      %s151 = sphi 0, %s151
      %s153 = sphi 0, %s151
      %s154 = sphi 0, %s153
      %s168 = sphi 0, %s154
      %s172 = sphi 0, %s172
      %s174 = sphi 0, %s172
      %s175 = sphi 0, %s174
      %s189 = sphi 0, %s175
      %s197 = sphi 0, %s199
      %s200 = sphi 0, %s197
      %s201 = sphi 0, %s200
      %s217 = sphi 0, %s201
    $region4: #{trans_layer_forward.7} parent=1 // loop_header_branch
      %22 = sbr.rel (%p20) target = $region8
    $region5: #{trans_layer_forward.7} parent=1 // loop_body
      %s24 = ssub.s32 %s19, 1
      %s25 = ssub.s32 %s19, 2
      %s32 = sadd.s32 1, %s27
      %p33 = scmp.ge.s32.totalorder %s32, 1
      %s34 = scalar_select %p33, 0, %s32
      %s35 = sadd.s32 1, %s26
      %s36 = scalar_select %p33, %s35, %s26
      %p37 = scmp.ge.s32.totalorder %s36, 2
      %s38 = scalar_select %p37, 0, %s36
      %s39 = ssub.s32 %s26, %s38
      %s40 = ssub.s32 %s27, %s34
      %s41 = sor.u32 %s39, %s40
      %p42 = scmp.eq.s32.totalorder %s41, 0
      %s44 = sadd.s32 %s43, 1
      %s45 = scalar_select %p42, %s43, %s44
      %p48 = pneg %p42
      %p49 = scmp.eq.s32.totalorder %s19, 1
      %p50 = por %p48, %p49
      %p51 = scmp.ne.s32.totalorder %s43, %s46
      %p52 = scmp.eq.s32.totalorder %s19, 0
      %p53 = por %p51, %p52
      %p54 = scmp.ne.s32.totalorder %s43, %s46
      %p55 = scmp.eq.s32.totalorder %s24, 1
      %p56 = por %p54, %p55
      %p57 = scmp.ne.s32.totalorder %s46, %s47
      %p58 = scmp.eq.s32.totalorder %s24, 0
      %p59 = por %p57, %p58
      %p60 = scmp.ne.s32.totalorder %s46, %s47
      %p61 = scmp.eq.s32.totalorder %s25, 1
      %p62 = por %p60, %p61
      %p64 = scmp.ne.s32.totalorder %s47, %s63
      %p65 = scmp.eq.s32.totalorder %s25, 0
      %p66 = por %p64, %p65
      %s68 = sadd.s32 %s67, 1
      %p71 = scmp.eq.s32.totalorder %s19, 1
      %p72 = scmp.ne.s32.totalorder %s67, %s69
      %p73 = scmp.eq.s32.totalorder %s19, 0
      %p74 = por %p72, %p73
      %p75 = scmp.ne.s32.totalorder %s67, %s69
      %p76 = scmp.eq.s32.totalorder %s24, 1
      %p77 = por %p75, %p76
      %p78 = scmp.ne.s32.totalorder %s69, %s70
      %p79 = scmp.eq.s32.totalorder %s24, 0
      %p80 = por %p78, %p79
      %p81 = scmp.ne.s32.totalorder %s69, %s70
      %p82 = scmp.eq.s32.totalorder %s25, 1
      %p83 = por %p81, %p82
      %p85 = scmp.ne.s32.totalorder %s70, %s84
      %p86 = scmp.eq.s32.totalorder %s25, 0
      %p87 = por %p85, %p86
      %s89 = sadd.s32 %s88, 1
      %p92 = scmp.eq.s32.totalorder %s19, 1
      %p93 = scmp.ne.s32.totalorder %s88, %s90
      %p94 = scmp.eq.s32.totalorder %s19, 0
      %p95 = por %p93, %p94
      %p96 = scmp.ne.s32.totalorder %s88, %s90
      %p97 = scmp.eq.s32.totalorder %s24, 1
      %p98 = por %p96, %p97
      %p99 = scmp.ne.s32.totalorder %s90, %s91
      %p100 = scmp.eq.s32.totalorder %s24, 0
      %p101 = por %p99, %p100
      %p102 = scmp.ne.s32.totalorder %s90, %s91
      %p103 = scmp.eq.s32.totalorder %s25, 1
      %p104 = por %p102, %p103
      %p106 = scmp.ne.s32.totalorder %s91, %s105
      %p107 = scmp.eq.s32.totalorder %s25, 0
      %p108 = por %p106, %p107
      %s110 = sadd.s32 %s109, 1
      %p113 = scmp.eq.s32.totalorder %s19, 1
      %p114 = scmp.ne.s32.totalorder %s109, %s111
      %p115 = scmp.eq.s32.totalorder %s19, 0
      %p116 = por %p114, %p115
      %p117 = scmp.ne.s32.totalorder %s109, %s111
      %p118 = scmp.eq.s32.totalorder %s24, 1
      %p119 = por %p117, %p118
      %p120 = scmp.ne.s32.totalorder %s111, %s112
      %p121 = scmp.eq.s32.totalorder %s24, 0
      %p122 = por %p120, %p121
      %p123 = scmp.ne.s32.totalorder %s111, %s112
      %p124 = scmp.eq.s32.totalorder %s25, 1
      %p125 = por %p123, %p124
      %p127 = scmp.ne.s32.totalorder %s112, %s126
      %p128 = scmp.eq.s32.totalorder %s25, 0
      %p129 = por %p127, %p128
      %s131 = sadd.s32 %s130, 1
      %p134 = scmp.eq.s32.totalorder %s19, 1
      %p135 = scmp.ne.s32.totalorder %s130, %s132
      %p136 = scmp.eq.s32.totalorder %s19, 0
      %p137 = por %p135, %p136
      %p138 = scmp.ne.s32.totalorder %s130, %s132
      %p139 = scmp.eq.s32.totalorder %s24, 1
      %p140 = por %p138, %p139
      %p141 = scmp.ne.s32.totalorder %s132, %s133
      %p142 = scmp.eq.s32.totalorder %s24, 0
      %p143 = por %p141, %p142
      %p144 = scmp.ne.s32.totalorder %s132, %s133
      %p145 = scmp.eq.s32.totalorder %s25, 1
      %p146 = por %p144, %p145
      %p148 = scmp.ne.s32.totalorder %s133, %s147
      %p149 = scmp.eq.s32.totalorder %s25, 0
      %p150 = por %p148, %p149
      %s152 = sadd.s32 %s151, 1
      %p155 = scmp.eq.s32.totalorder %s19, 1
      %p156 = scmp.ne.s32.totalorder %s151, %s153
      %p157 = scmp.eq.s32.totalorder %s19, 0
      %p158 = por %p156, %p157
      %p159 = scmp.ne.s32.totalorder %s151, %s153
      %p160 = scmp.eq.s32.totalorder %s24, 1
      %p161 = por %p159, %p160
      %p162 = scmp.ne.s32.totalorder %s153, %s154
      %p163 = scmp.eq.s32.totalorder %s24, 0
      %p164 = por %p162, %p163
      %p165 = scmp.ne.s32.totalorder %s153, %s154
      %p166 = scmp.eq.s32.totalorder %s25, 1
      %p167 = por %p165, %p166
      %p169 = scmp.ne.s32.totalorder %s154, %s168
      %p170 = scmp.eq.s32.totalorder %s25, 0
      %p171 = por %p169, %p170
      %s173 = sadd.s32 %s172, 1
      %p176 = scmp.eq.s32.totalorder %s19, 1
      %p177 = scmp.ne.s32.totalorder %s172, %s174
      %p178 = scmp.eq.s32.totalorder %s19, 0
      %p179 = por %p177, %p178
      %p180 = scmp.ne.s32.totalorder %s172, %s174
      %p181 = scmp.eq.s32.totalorder %s24, 1
      %p182 = por %p180, %p181
      %p183 = scmp.ne.s32.totalorder %s174, %s175
      %p184 = scmp.eq.s32.totalorder %s24, 0
      %p185 = por %p183, %p184
      %p186 = scmp.ne.s32.totalorder %s174, %s175
      %p187 = scmp.eq.s32.totalorder %s25, 1
      %p188 = por %p186, %p187
      %p190 = scmp.ne.s32.totalorder %s175, %s189
      %p191 = scmp.eq.s32.totalorder %s25, 0
      %p192 = por %p190, %p191
      %s193 = ssub.s32 %s26, %s38
      %s194 = ssub.s32 %s27, %s34
      %s195 = sor.u32 %s193, %s194
      %p196 = scmp.eq.s32.totalorder %s195, 0
      %s198 = sadd.s32 %s197, 1
      %s199 = scalar_select %p196, %s197, %s198
      %p202 = pneg %p196
      %p203 = scmp.eq.s32.totalorder %s19, 1
      %p204 = por %p202, %p203
      %p205 = scmp.ne.s32.totalorder %s197, %s200
      %p206 = scmp.eq.s32.totalorder %s19, 0
      %p207 = por %p205, %p206
      %p208 = scmp.ne.s32.totalorder %s197, %s200
      %p209 = scmp.eq.s32.totalorder %s24, 1
      %p210 = por %p208, %p209
      %p211 = scmp.ne.s32.totalorder %s200, %s201
      %p212 = scmp.eq.s32.totalorder %s24, 0
      %p213 = por %p211, %p212
      %p214 = scmp.ne.s32.totalorder %s200, %s201
      %p215 = scmp.eq.s32.totalorder %s25, 1
      %p216 = por %p214, %p215
      %p218 = scmp.ne.s32.totalorder %s201, %s217
      %p219 = scmp.eq.s32.totalorder %s25, 0
      %p220 = por %p218, %p219
      %p221 = scmp.le.s32.totalorder 1, %s19
      %p222 = scmp.lt.s32.totalorder %s19, 3
      %p223 = pnand %p221, %p222
      %p224 = pneg %p223
      // Predicated region
      $region9: #{trans_layer_forward.7} parent=5 // pred_check
        _
      $region10: #{trans_layer_forward.7} parent=5 // pred_check_branch
        %226 = sbr.rel (%p223) target = $region12
      $region11: #{trans_layer_forward.7} parent=5 // pred_region
        %s227 = ssub.s32 %s19, 1
        // Predicated region
        $region13: #{trans_layer_forward.7} parent=11 // pred_check
          %p228 = pneg %p80
        $region14: #{trans_layer_forward.7} parent=11 // pred_check_branch
          %230 = sbr.rel (%p228) target = $region16
        $region15: #{trans_layer_forward.7} parent=11 // pred_region
          _
        $region16: #{trans_layer_forward.7} parent=11 // pred_fallthru
          _
        // Predicated region
        $region17: #{trans_layer_forward.7} parent=11 // pred_check
          %p231 = pneg %p101
        $region18: #{trans_layer_forward.7} parent=11 // pred_check_branch
          %233 = sbr.rel (%p231) target = $region20
        $region19: #{trans_layer_forward.7} parent=11 // pred_region
          _
        $region20: #{trans_layer_forward.7} parent=11 // pred_fallthru
          _
        // Predicated region
        $region21: #{trans_layer_forward.7} parent=11 // pred_check
          %p234 = pneg %p122
        $region22: #{trans_layer_forward.7} parent=11 // pred_check_branch
          %236 = sbr.rel (%p234) target = $region24
        $region23: #{trans_layer_forward.7} parent=11 // pred_region
          _
        $region24: #{trans_layer_forward.7} parent=11 // pred_fallthru
          _
        // Predicated region
        $region25: #{trans_layer_forward.7} parent=11 // pred_check
          %p237 = pneg %p143
        $region26: #{trans_layer_forward.7} parent=11 // pred_check_branch
          %239 = sbr.rel (%p237) target = $region28
        $region27: #{trans_layer_forward.7} parent=11 // pred_region
          _
        $region28: #{trans_layer_forward.7} parent=11 // pred_fallthru
          _
        // Predicated region
        $region29: #{trans_layer_forward.7} parent=11 // pred_check
          %p240 = pneg %p164
        $region30: #{trans_layer_forward.7} parent=11 // pred_check_branch
          %242 = sbr.rel (%p240) target = $region32
        $region31: #{trans_layer_forward.7} parent=11 // pred_region
          _
        $region32: #{trans_layer_forward.7} parent=11 // pred_fallthru
          _
        // Predicated region
        $region33: #{trans_layer_forward.7} parent=11 // pred_check
          %p243 = pneg %p185
        $region34: #{trans_layer_forward.7} parent=11 // pred_check_branch
          %245 = sbr.rel (%p243) target = $region36
        $region35: #{trans_layer_forward.7} parent=11 // pred_region
          _
        $region36: #{trans_layer_forward.7} parent=11 // pred_fallthru
          _
      $region12: #{trans_layer_forward.7} parent=5 // pred_fallthru
        _
      %p246 = scmp.lt.s32.totalorder %s19, 2
      // Predicated region
      $region37: #{trans_layer_forward.7} parent=5 // pred_check
        %p247 = pneg %p246
      $region38: #{trans_layer_forward.7} parent=5 // pred_check_branch
        %249 = sbr.rel (%p247) target = $region40
      $region39: #{trans_layer_forward.7} parent=5 // pred_region
        // Predicated region
        $region41: #{trans_layer_forward.7} parent=39 // pred_check
          %p250 = pneg %p53
        $region42: #{trans_layer_forward.7} parent=39 // pred_check_branch
          %252 = sbr.rel (%p250) target = $region44
        $region43: #{trans_layer_forward.7} parent=39 // pred_region
          %s253 = sand.u32 %s43, 1
          %s254 = scalar_lea.sflag [#allocation3], %s253
          %s255 = sand.u32 %s43, 1
          %s256 = smul.addr %s255, 8
          %s257 = scalar_lea.vmem [#allocation2], %s256
          %259 = vsyncadd %s254, 0
          %s260 = sadd.s32 %s27, %s26
          %s261 = smul.addr %s260, 8
          %s262 = scalar_lea.hbm %s0, %s261
          %s264 = sshll.u32 %s262, 4
          %s265 = int_to_ptr.hbm [resolvable:$true] %s264
          %s266 = sshll.u32 %s257, 4
          %s267 = int_to_ptr.vmem [resolvable:$true] %s266
          %269 = dma.hbm_to_vmem [thread:$0]  %s265, 128, %s267, %s254
        $region44: #{trans_layer_forward.7} parent=39 // pred_fallthru
          _
      $region40: #{trans_layer_forward.7} parent=5 // pred_fallthru
        _
      %p270 = scmp.le.s32.totalorder 1, %s19
      %p271 = scmp.lt.s32.totalorder %s19, 3
      %p272 = pnand %p270, %p271
      %p273 = pneg %p272
      // Predicated region
      $region45: #{trans_layer_forward.7} parent=5 // pred_check
        _
      $region46: #{trans_layer_forward.7} parent=5 // pred_check_branch
        %275 = sbr.rel (%p272) target = $region48
      $region47: #{trans_layer_forward.7} parent=5 // pred_region
        %s276 = ssub.s32 %s19, 1
        %s277 = sand.u32 %s46, 1
        %s278 = scalar_lea.sflag [#allocation3], %s277
        %s279 = sand.u32 %s46, 1
        %s280 = smul.addr %s279, 8
        %s281 = scalar_lea.vmem [#allocation2], %s280
        // Predicated region
        $region49: #{trans_layer_forward.7} parent=47 // pred_check
          %p282 = pneg %p59
        $region50: #{trans_layer_forward.7} parent=47 // pred_check_branch
          %284 = sbr.rel (%p282) target = $region52
        $region51: #{trans_layer_forward.7} parent=47 // pred_region
          %286 = dma.done %s278, 128
        $region52: #{trans_layer_forward.7} parent=47 // pred_fallthru
          _
        %s287 = sand.u32 %s46, 1
        %s288 = scalar_lea.sflag [#allocation3], %s287
        %s289 = sand.u32 %s46, 1
        %s290 = smul.addr %s289, 8
        %s291 = scalar_lea.vmem [#allocation2], %s290
        %p292 = pneg %p59
        %p293 = pneg %p56
        %p294 = pneg %p80
        %p295 = pneg %p77
        %p296 = pneg %p101
        %p297 = pneg %p98
        %p298 = pneg %p122
        %p299 = pneg %p119
        %p300 = pneg %p143
        %p301 = pneg %p140
        %p302 = pneg %p164
        %p303 = pneg %p161
        %p304 = pneg %p185
        %p305 = pneg %p182
        %p306 = pneg %p213
        %p307 = pneg %p210
        %s308 = sand.u32 %s200, 1
        %s309 = scalar_lea.sflag [#allocation4], %s308
        %s310 = sand.u32 %s200, 1
        %s311 = smul.addr %s310, 8
        %s312 = scalar_lea.vmem [#allocation5], %s311
        %v314 = vld [vmem:[%s281] sm:$0xff]
        %v315 = vpack.c.bf16 %v314, %v314
        %v316 = vld [vmem:[%s1] sm:$0xf]
        %v317 = vld [vmem:[%s1 + $0x4] sm:$0xf]
        %v318 = vld [vmem:[%s1 + $0x8] sm:$0xf]
        %v319 = vld [vmem:[%s1 + $0xc] sm:$0xf]
        %v320 = vld [vmem:[%s2] sm:$0x1]
        %v322 = vperm.slane %v320, 0
        %v328 = vunpack.c.l.b16 %v316
        %v329 = vunpack.c.l.b16 %v317
        %v330 = vunpack.c.l.b16 %v318
        %v331 = vunpack.c.l.b16 %v319
        %v332 = vpack.c.b16 %v329, %v328
        %v333 = vpack.c.b16 %v331, %v330
        %vm336 = vcmask 261120
        %v338 = vsel %vm336, %v315, 0
        %340 = vmatpush.bf16.msra.mxu0 0
        %341 = vmatpush.bf16.msra.mxu0 0
        %342 = vmatpush.bf16.msra.mxu0 0
        %343 = vmatpush.bf16.msra.mxu0 0
        %344 = vmatpush.bf16.msra.mxu0 0
        %345 = vmatpush.bf16.msra.mxu0 0
        %346 = vmatpush.bf16.msra.mxu0 %v333
        %347 = vmatpush.bf16.msra.mxu0 %v332
        %348 = vmatmul.bf16.gmra.mxu0 %v338
        %v349 = vpop.f32.mrf.mxu0
        %v350 = vadd.f32 %v322, %v349
        %v351 = vpop.f32.mrf.mxu0
        %352 = vdwg.mxu0
        %v353 = vmul.f32 %v350, 0.5
        %v354 = vmul.f32 %v350, 0.70710677
        %v355 = vmul.f32 %v354, %v354
        %v356 = vmin.f32 16.0, %v355
        %v357 = vmul.f32 %v356, 2.1237322e-06
        %v358 = vadd.f32 %v357, 0.00028619796
        %v359 = vmul.f32 %v356, %v358
        %v360 = vadd.f32 %v359, 0.0036580483
        %v361 = vmul.f32 %v356, %v360
        %v362 = vadd.f32 %v361, 0.05243302
        %v363 = vmul.f32 %v356, %v362
        %v364 = vadd.f32 %v363, 0.18741608
        %v365 = vmul.f32 %v356, %v364
        %v366 = vadd.f32 %v365, 1.1283791
        %v367 = vmul.f32 %v354, %v366
        %v368 = vmul.f32 %v356, 3.8918573e-05
        %v369 = vadd.f32 %v368, 0.001143296
        %v370 = vmul.f32 %v356, %v369
        %v371 = vadd.f32 %v370, 0.014752088
        %v372 = vmul.f32 %v356, %v371
        %v373 = vadd.f32 %v372, 0.112945676
        %v374 = vmul.f32 %v356, %v373
        %v375 = vadd.f32 %v374, 0.4994258
        %v376 = vmul.f32 %v356, %v375
        %v377 = vadd.f32 %v376, 1.0
        %v378 = vrcp.pop %v377
        %v379 = vmul.f32 %v377, %v378
        %v380 = vsub.f32 1.0, %v379
        %v381 = vmul.f32 %v378, %v380
        %v382 = vadd.f32 %v378, %v381
        %vm383 = vweird.f32 %v377
        %vm384 = vweird.f32 %v378
        %vm385 = vmor %vm383, %vm384
        %v386 = vsel %vm385, %v378, %v382
        %v387 = vand.u32 2147483647, %v377
        %vm388 = vcmp.eq.f32.partialorder %v387, 8.507059e+37
        %v389 = vand.u32 %v377, 2147483648
        %v390 = vor.u32 1.1754944e-38, %v389
        %v391 = vsel %vm388, %v390, %v386
        %v392 = vmul.f32 %v367, %v391
        %v393 = vmin.f32 %v392, 1.0
        %v394 = vmax.f32 %v393, -1.0
        %v395 = vadd.f32 %v394, 1.0
        %v396 = vmul.f32 %v353, %v395
        %v397 = vpack.c.bf16 %v396, %v396
        %v398 = vld [vmem:[%s3] sm:$0xf]
        %v399 = vld [vmem:[%s3 + $0x4] sm:$0xf]
        %v400 = vld [vmem:[%s3 + $0x8] sm:$0xf]
        %v401 = vld [vmem:[%s3 + $0xc] sm:$0xf]
        %v402 = vld [vmem:[%s3 + $0x10] sm:$0xf]
        %v403 = vld [vmem:[%s3 + $0x14] sm:$0xf]
        %v404 = vld [vmem:[%s3 + $0x18] sm:$0xf]
        %v405 = vld [vmem:[%s3 + $0x1c] sm:$0xf]
        %v406 = vld [vmem:[%s4] sm:$0x1]
        %v408 = vperm.slane %v406, 0
        %v418 = vunpack.c.l.b16 %v398
        %v419 = vunpack.c.l.b16 %v399
        %v420 = vunpack.c.l.b16 %v400
        %v421 = vunpack.c.l.b16 %v401
        %v422 = vunpack.c.l.b16 %v402
        %v423 = vunpack.c.l.b16 %v403
        %v424 = vunpack.c.l.b16 %v404
        %v425 = vunpack.c.l.b16 %v405
        %v426 = vpack.c.b16 %v419, %v418
        %v427 = vpack.c.b16 %v421, %v420
        %v428 = vpack.c.b16 %v423, %v422
        %v429 = vpack.c.b16 %v425, %v424
        %vm434 = vcmask 523264
        %v436 = vsel %vm434, %v397, 0
        %438 = vmatpush.bf16.msra.mxu0 0
        %439 = vmatpush.bf16.msra.mxu0 0
        %440 = vmatpush.bf16.msra.mxu0 0
        %441 = vmatpush.bf16.msra.mxu0 0
        %442 = vmatpush.bf16.msra.mxu0 %v429
        %443 = vmatpush.bf16.msra.mxu0 %v428
        %444 = vmatpush.bf16.msra.mxu0 %v427
        %445 = vmatpush.bf16.msra.mxu0 %v426
        %446 = vmatmul.bf16.gmra.mxu0 %v436
        %v447 = vpop.f32.mrf.mxu0
        %v448 = vadd.f32 %v408, %v447
        %v449 = vpop.f32.mrf.mxu0
        %450 = vdwg.mxu0
        %v451 = vadd.f32 %v314, %v448
        %v452 = vsel %vm336, %v451, 0.0
        %453 = vadd.xlane.f32.xlu0 %v452
        %v454 = vpop.xlane.xlu0 %453
        %v455 = vrcp.pop 32.0
        %v456 = vmul.f32 32.0, %v455
        %v457 = vsub.f32 1.0, %v456
        %v458 = vmul.f32 %v455, %v457
        %v459 = vadd.f32 %v455, %v458
        %vm460 = vweird.f32 %v455
        %v461 = vsel %vm460, %v455, %v459
        %v462 = vmul.f32 %v454, %v461
        %v463 = vsub.f32 %v451, %v462
        %v464 = vmul.f32 %v463, %v463
        %v465 = vsel %vm336, %v464, 0.0
        %466 = vadd.xlane.f32.xlu0 %v465
        %v467 = vpop.xlane.xlu0 %466
        %v468 = vmul.f32 %v467, %v461
        %v469 = vadd.f32 %v468, 1e-05
        %v470 = vrsqrt.pop %v469
        %v471 = vmul.f32 %v470, %v469
        %v472 = vmul.f32 %v471, %v470
        %v473 = vmul.f32 0.5, %v472
        %v474 = vsub.f32 1.5, %v473
        %v475 = vmul.f32 %v470, %v474
        %vm476 = vweird.f32 %v469
        %vm477 = vweird.f32 %v470
        %vm478 = vmor %vm476, %vm477
        %v479 = vsel %vm478, %v470, %v475
        %v480 = vmul.f32 %v463, %v479
        %v481 = vld [vmem:[%s5] sm:$0x1]
        %v483 = vperm.slane %v481, 0
        %v485 = vmul.f32 %v480, %v483
        %v486 = vld [vmem:[%s6] sm:$0x1]
        %v488 = vperm.slane %v486, 0
        %v490 = vadd.f32 %v485, %v488
        %491 = vst.msk [vmem:[%s312] sm:$0xff] %vm336, %v490
        %s492 = sand.u32 %s200, 1
        %s493 = scalar_lea.sflag [#allocation4], %s492
        %s494 = sand.u32 %s200, 1
        %s495 = smul.addr %s494, 8
        %s496 = scalar_lea.vmem [#allocation5], %s495
        // Predicated region
        $region53: #{trans_layer_forward.7} parent=47 // pred_check
          %p497 = pneg %p210
        $region54: #{trans_layer_forward.7} parent=47 // pred_check_branch
          %499 = sbr.rel (%p497) target = $region56
        $region55: #{trans_layer_forward.7} parent=47 // pred_region
          %501 = vsyncadd %s493, 0
          %s502 = sadd.s32 %s29, %s28
          %s503 = smul.addr %s502, 8
          %s504 = scalar_lea.hbm %s7, %s503
          %s506 = sshll.u32 %s496, 4
          %s507 = int_to_ptr.vmem [resolvable:$true] %s506
          %s508 = sshll.u32 %s504, 4
          %s509 = int_to_ptr.hbm [resolvable:$true] %s508
          %511 = dma.vmem_to_hbm [thread:$0]  %s507, 128, %s509, %s493
        $region56: #{trans_layer_forward.7} parent=47 // pred_fallthru
          _
      $region48: #{trans_layer_forward.7} parent=5 // pred_fallthru
        _
      %p512 = scmp.le.s32.totalorder 2, %s19
      // Predicated region
      $region57: #{trans_layer_forward.7} parent=5 // pred_check
        %p513 = pneg %p512
      $region58: #{trans_layer_forward.7} parent=5 // pred_check_branch
        %515 = sbr.rel (%p513) target = $region60
      $region59: #{trans_layer_forward.7} parent=5 // pred_region
        %s516 = ssub.s32 %s19, 2
        // Predicated region
        $region61: #{trans_layer_forward.7} parent=59 // pred_check
          %p517 = pneg %p216
        $region62: #{trans_layer_forward.7} parent=59 // pred_check_branch
          %519 = sbr.rel (%p517) target = $region64
        $region63: #{trans_layer_forward.7} parent=59 // pred_region
          %s520 = sand.u32 %s201, 1
          %s521 = scalar_lea.sflag [#allocation4], %s520
          %s522 = sand.u32 %s201, 1
          %s523 = smul.addr %s522, 8
          %s524 = scalar_lea.vmem [#allocation5], %s523
          %526 = dma.done %s521, 128
        $region64: #{trans_layer_forward.7} parent=59 // pred_fallthru
          _
      $region60: #{trans_layer_forward.7} parent=5 // pred_fallthru
        _
    $region6: #{trans_layer_forward.7} parent=1 // loop_footer
      %s23 = sadd.s32 1, %s19
    $region7: #{trans_layer_forward.7} parent=1 // loop_footer_branch
      %18 = sbr.rel target = $region3
    $region8: #{trans_layer_forward.7} parent=1 // loop_exit
      _
    %527 = vsyncpa [#allocation3], 1
    %s528 = scalar_lea.sflag [#allocation3], 1
    %529 = vsyncpa %s528, 1
    %530 = vsyncpa [#allocation4], 1
    %s531 = scalar_lea.sflag [#allocation4], 1
    %532 = vsyncpa %s531, 1

</llo_original>
